<compile_context>
chip_gen: v7x
topology: tpu7x:2x2x1
jax: 0.10.0
libtpu: 0.0.40
codegen_flags: <defaults>
</compile_context>

<pallas_src>
import functools

import jax
import jax.numpy as jnp
from jax.experimental import pallas as pl
from jax.experimental.pallas import tpu as pltpu

EPS = 1e-5


# ---------------------------------------------------------------------------
# Fused Pallas kernel
# ---------------------------------------------------------------------------
def _fused_kernel(x_ref, t3a_ref, t3b_ref, t7a_ref, t7b_ref,
                  tf_ref, bn_ref, bf_ref, o_ref,
                  *, n, h, w, cout):
    """Whole conv_3_1 forward.

    x_ref   : (N*H, W*Cin)           f32  input, lane = col*Cin + ci
    tXX_ref : (KH, W*Cin_l, W*Cout)  bf16 block-Toeplitz conv weights
    tf_ref  : (2*W*Cout, W*Cout)     bf16 stacked block-diag 1x1 weight
    bn_ref  : (4, 3, W*Cout)         f32  [conv bias, gamma, beta] on lanes
    bf_ref  : (1, W*Cout)            f32  final 1x1 bias on lanes
    o_ref   : (N*H, W*Cout)          f32  output, lane = col*Cout + co
    """
    m = n * h
    wc = w * cout
    inv_cnt = 1.0 / float(n * h * w)

    # Row index within its image, full output shape (no broadcast surprises).
    # Computed once, reused by every conv's boundary masks.
    row_in_img = jax.lax.broadcasted_iota(jnp.int32, (m, wc), 0) % h

    def fold_channels(v):
        # Sum the W lane-groups of each channel (lane l <-> channel l % cout)
        # and broadcast back to every lane, via XLU roll-and-add (idle slot),
        # staying in f32.  Requires w to be a power of two.
        s = wc // 2
        while s >= cout:
            v = v + pltpu.roll(v, s, 1)
            s //= 2
        return v

    def conv_bn_relu(act_bf16, t_ref, bnp, ksz, pad):
        # One whole-batch MXU matmul per kernel row kh; the height shift is
        # applied to the *product* with a sublane roll + per-image mask
        # (zero height padding is thus never materialized).
        acc = jnp.zeros((m, wc), jnp.float32)
        for kh in range(ksz):
            s = kh - pad                         # output row r takes P[r + s]
            p = jnp.dot(act_bf16, t_ref[kh],
                        preferred_element_type=jnp.float32)
            if s != 0:
                p = pltpu.roll(p, (-s) % m, 0)   # out[r] = P[(r + s) mod m]
                valid = jnp.logical_and(row_in_img >= -s, row_in_img < h - s)
                p = jnp.where(valid, p, 0.0)
            acc = acc + p

        acc = acc + bnp[0:1, :]                  # conv bias

        # BatchNorm2d (training semantics): per-channel stats over (N, H, W),
        # biased variance, all reductions in f32 (rows: sublane sum,
        # lane-groups: roll-and-add).
        mean_l = fold_channels(jnp.sum(acc, axis=0, keepdims=True)) * inv_cnt
        d = acc - mean_l
        var_l = fold_channels(jnp.sum(d * d, axis=0, keepdims=True)) * inv_cnt
        y = d * (jax.lax.rsqrt(var_l + EPS) * bnp[1:2, :]) + bnp[2:3, :]
        return jnp.maximum(y, 0.0)               # ReLU

    x_bf = x_ref[...].astype(jnp.bfloat16)       # cast the input exactly once

    # conv_block_3
    h3 = conv_bn_relu(x_bf, t3a_ref, bn_ref[0], 3, 1)
    h3 = conv_bn_relu(h3.astype(jnp.bfloat16), t3b_ref, bn_ref[1], 3, 1)
    # conv_block_7
    h7 = conv_bn_relu(x_bf, t7a_ref, bn_ref[2], 7, 3)
    h7 = conv_bn_relu(h7.astype(jnp.bfloat16), t7b_ref, bn_ref[3], 7, 3)

    # channel concat + 1x1 conv == ONE matmul with K = 2*W*Cout (lane concat
    # of two full-width operands is free; weight is [tf3 ; tf7] stacked).
    cat = jnp.concatenate([h3, h7], axis=-1).astype(jnp.bfloat16)
    o_ref[...] = (jnp.dot(cat, tf_ref[...], preferred_element_type=jnp.float32)
                  + bf_ref[...])


# ---------------------------------------------------------------------------
# Wrapper-side weight preprocessing (pure layout plumbing, tiny)
# ---------------------------------------------------------------------------
def make_row_toeplitz(wgt, out_w, pad):
    """(KH, KW, Cin, Cout) -> (KH, out_w*Cin, out_w*Cout) block-Toeplitz.

    T[kh, j*Cin+ci, x*Cout+co] = w[kh, kw, ci, co] if j == x + kw - pad (and
    j in [0, out_w)), else 0.  Width zero-padding is thereby folded in.
    """
    kh_sz, kw_sz, cin, cout = wgt.shape
    j = jnp.arange(out_w)[:, None, None]
    x = jnp.arange(out_w)[None, :, None]
    kw = jnp.arange(kw_sz)[None, None, :]
    sel = (j == (x + kw - pad)).astype(wgt.dtype)           # (W, W, KW)
    t = jnp.einsum('jxk,hkio->hjixo', sel, wgt)             # (KH, W, Cin, W, Cout)
    return t.reshape(kh_sz, out_w * cin, out_w * cout)


# ---------------------------------------------------------------------------
# conv_3_1 module (parameters + forward)
# ---------------------------------------------------------------------------
def init_params(key, ch_in, ch_out):
    ks = jax.random.split(key, 12)

    def conv_w(k, ksz, cin, cout):
        return 0.1 * jax.random.normal(k, (ksz, ksz, cin, cout), jnp.float32)

    def bn(k, c):
        kg, kb = jax.random.split(k)
        gamma = 1.0 + 0.1 * jax.random.normal(kg, (c,), jnp.float32)
        beta = 0.1 * jax.random.normal(kb, (c,), jnp.float32)
        return gamma, beta

    p = {}
    p["c3_w1"] = conv_w(ks[0], 3, ch_in, ch_out)
    p["c3_b1"] = 0.1 * jax.random.normal(ks[1], (ch_out,), jnp.float32)
    p["c3_g1"], p["c3_be1"] = bn(ks[2], ch_out)
    p["c3_w2"] = conv_w(ks[3], 3, ch_out, ch_out)
    p["c3_b2"] = 0.1 * jax.random.normal(ks[4], (ch_out,), jnp.float32)
    p["c3_g2"], p["c3_be2"] = bn(ks[5], ch_out)
    p["c7_w1"] = conv_w(ks[6], 7, ch_in, ch_out)
    p["c7_b1"] = 0.1 * jax.random.normal(ks[7], (ch_out,), jnp.float32)
    p["c7_g1"], p["c7_be1"] = bn(ks[8], ch_out)
    p["c7_w2"] = conv_w(ks[9], 7, ch_out, ch_out)
    p["c7_b2"] = 0.1 * jax.random.normal(ks[10], (ch_out,), jnp.float32)
    p["c7_g2"], p["c7_be2"] = bn(ks[11], ch_out)
    kf1, kf2 = jax.random.split(jax.random.fold_in(key, 99))
    p["f_w"] = 0.1 * jax.random.normal(kf1, (2 * ch_out, ch_out), jnp.float32)
    p["f_b"] = 0.1 * jax.random.normal(kf2, (ch_out,), jnp.float32)
    return p


@jax.jit
def conv_3_1_forward(p, x_nchw):
    n, cin, h, w = x_nchw.shape
    cout = p["c3_b1"].shape[0]
    wc = w * cout
    # roll-based BN channel fold needs power-of-two w and cout
    assert (w & (w - 1)) == 0 and (cout & (cout - 1)) == 0

    # NCHW -> lane-dense (N*H, W*Cin)
    x2d = jnp.transpose(x_nchw, (0, 2, 3, 1)).astype(jnp.float32)
    x2d = x2d.reshape(n * h, w * cin)

    bf16 = jnp.bfloat16
    t3a = make_row_toeplitz(p["c3_w1"], w, 1).astype(bf16)
    t3b = make_row_toeplitz(p["c3_w2"], w, 1).astype(bf16)
    t7a = make_row_toeplitz(p["c7_w1"], w, 3).astype(bf16)
    t7b = make_row_toeplitz(p["c7_w2"], w, 3).astype(bf16)
    # 1x1 conv: block-diagonal per branch, stacked along K (h3 on top, h7 below).
    tf3 = make_row_toeplitz(p["f_w"][:cout].reshape(1, 1, cout, cout), w, 0)[0]
    tf7 = make_row_toeplitz(p["f_w"][cout:].reshape(1, 1, cout, cout), w, 0)[0]
    tf = jnp.concatenate([tf3, tf7], axis=0).astype(bf16)    # (2*wc, wc)

    lane = lambda v: jnp.tile(v, w)  # (cout,) -> (wc,), lane l <-> ch l % cout
    bn_all = jnp.stack([
        jnp.stack([lane(p["c3_b1"]), lane(p["c3_g1"]), lane(p["c3_be1"])]),
        jnp.stack([lane(p["c3_b2"]), lane(p["c3_g2"]), lane(p["c3_be2"])]),
        jnp.stack([lane(p["c7_b1"]), lane(p["c7_g1"]), lane(p["c7_be1"])]),
        jnp.stack([lane(p["c7_b2"]), lane(p["c7_g2"]), lane(p["c7_be2"])]),
    ]).astype(jnp.float32)                                   # (4, 3, wc)
    bf_l = lane(p["f_b"]).reshape(1, wc).astype(jnp.float32)

    kernel = functools.partial(_fused_kernel, n=n, h=h, w=w, cout=cout)
    y2d = pl.pallas_call(
        kernel,
        out_shape=jax.ShapeDtypeStruct((n * h, wc), jnp.float32),
    )(x2d, t3a, t3b, t7a, t7b, tf, bn_all, bf_l)

    # (N*H, W*Cout) -> NCHW
    return jnp.transpose(y2d.reshape(n, h, w, cout), (0, 3, 1, 2))


# ---------------------------------------------------------------------------
# Pure-JAX reference (PyTorch training-mode semantics) for a sanity check
# ---------------------------------------------------------------------------
def _reference_forward(p, x):
    def conv(a, wgt, b, pad):
        y = jax.lax.conv_general_dilated(
            a, jnp.transpose(wgt, (3, 2, 0, 1)),
            window_strides=(1, 1), padding=[(pad, pad), (pad, pad)],
            dimension_numbers=('NCHW', 'OIHW', 'NCHW'))
        return y + b[None, :, None, None]

    def bn(a, g, be):
        mean = jnp.mean(a, axis=(0, 2, 3), keepdims=True)
        var = jnp.mean((a - mean) ** 2, axis=(0, 2, 3), keepdims=True)
        return ((a - mean) * jax.lax.rsqrt(var + EPS)
                * g[None, :, None, None] + be[None, :, None, None])

    relu = lambda v: jnp.maximum(v, 0.0)
    h3 = relu(bn(conv(x, p["c3_w1"], p["c3_b1"], 1), p["c3_g1"], p["c3_be1"]))
    h3 = relu(bn(conv(h3, p["c3_w2"], p["c3_b2"], 1), p["c3_g2"], p["c3_be2"]))
    h7 = relu(bn(conv(x, p["c7_w1"], p["c7_b1"], 3), p["c7_g1"], p["c7_be1"]))
    h7 = relu(bn(conv(h7, p["c7_w2"], p["c7_b2"], 3), p["c7_g2"], p["c7_be2"]))
    cat = jnp.concatenate([h3, h7], axis=1)
    return (jnp.einsum('nihw,io->nohw', cat, p["f_w"])
            + p["f_b"][None, :, None, None])


if __name__ == "__main__":
    key = jax.random.PRNGKey(0)
    k_x, k_p = jax.random.split(key)

    N, CH_IN, CH_OUT, H, W = 2, 4, 8, 16, 16
    x = jax.random.normal(k_x, (N, CH_IN, H, W), jnp.float32)  # NCHW like PyTorch
    params = init_params(k_p, CH_IN, CH_OUT)

    out = conv_3_1_forward(params, x)
    out = jax.block_until_ready(out)

    assert out.shape == (N, CH_OUT, H, W), out.shape
    assert bool(jnp.all(jnp.isfinite(out)))

    # Correctness check against f32 XLA reference (bf16 MXU tolerance).
    ref = jax.block_until_ready(_reference_forward(params, x))
    max_err = float(jnp.max(jnp.abs(out - ref)))
    assert max_err < 0.12, max_err

    print("KERNEL_OK")
</pallas_src>

<mosaic_0001>
module attributes {stable_mosaic.version = 11 : i64} {
  func.func @_fused_kernel(%arg0: memref<32x64xf32, #tpu.memory_space<vmem>>, %arg1: memref<3x64x128xbf16, #tpu.memory_space<vmem>>, %arg2: memref<3x128x128xbf16, #tpu.memory_space<vmem>>, %arg3: memref<7x64x128xbf16, #tpu.memory_space<vmem>>, %arg4: memref<7x128x128xbf16, #tpu.memory_space<vmem>>, %arg5: memref<256x128xbf16, #tpu.memory_space<vmem>>, %arg6: memref<4x3x128xf32, #tpu.memory_space<vmem>>, %arg7: memref<1x128xf32, #tpu.memory_space<vmem>>, %arg8: memref<32x128xf32, #tpu.memory_space<vmem>>) attributes {dimension_semantics = [], scalar_prefetch = 0 : i64, scratch_operands = 0 : i64, tpu.core_type = #tpu.core_type<tc>} {
    %0 = tpu.iota {dimensions = array<i32: 0>} : vector<32x128xi32>
    %c16_i32 = arith.constant 16 : i32
    %c0_i32 = arith.constant 0 : i32
    %1 = arith.cmpi eq, %c16_i32, %c0_i32 : i32
    %c1_i32 = arith.constant 1 : i32
    %2 = arith.select %1, %c1_i32, %c16_i32 : i32
    %3 = vector.broadcast %2 : i32 to vector<32x128xi32>
    %4 = arith.remsi %0, %3 : vector<32x128xi32>
    %c0_i32_0 = arith.constant 0 : i32
    %5 = vector.broadcast %c0_i32_0 : i32 to vector<32x128xi32>
    %6 = arith.cmpi ne, %4, %5 : vector<32x128xi32>
    %c0_i32_1 = arith.constant 0 : i32
    %7 = vector.broadcast %c0_i32_1 : i32 to vector<32x128xi32>
    %8 = arith.cmpi slt, %4, %7 : vector<32x128xi32>
    %c0_i32_2 = arith.constant 0 : i32
    %9 = arith.cmpi slt, %2, %c0_i32_2 : i32
    %10 = vector.broadcast %9 : i1 to vector<32x128xi1>
    %11 = vector.broadcast %10 : vector<32x128xi1> to vector<32x128xi1>
    %12 = arith.xori %8, %11 : vector<32x128xi1>
    %13 = arith.andi %12, %6 : vector<32x128xi1>
    %14 = vector.broadcast %2 : i32 to vector<32x128xi32>
    %15 = arith.addi %4, %14 : vector<32x128xi32>
    %16 = arith.select %13, %15, %4 : vector<32x128xi1>, vector<32x128xi32>
    %c0 = arith.constant 0 : index
    %c0_3 = arith.constant 0 : index
    %17 = vector.load %arg0[%c0, %c0_3] : memref<32x64xf32, #tpu.memory_space<vmem>>, vector<32x64xf32>
    %18 = arith.truncf %17 : vector<32x64xf32> to vector<32x64xbf16>
    %c0_4 = arith.constant 0 : index
    %c0_5 = arith.constant 0 : index
    %c0_6 = arith.constant 0 : index
    %19 = vector.load %arg6[%c0_4, %c0_5, %c0_6] : memref<4x3x128xf32, #tpu.memory_space<vmem>>, vector<1x3x128xf32>
    %20 = vector.shape_cast %19 : vector<1x3x128xf32> to vector<3x128xf32>
    %cst = arith.constant 0.000000e+00 : f32
    %21 = vector.broadcast %cst : f32 to vector<32x128xf32>
    %c0_7 = arith.constant 0 : index
    %c0_8 = arith.constant 0 : index
    %c0_9 = arith.constant 0 : index
    %22 = vector.load %arg1[%c0_7, %c0_8, %c0_9] : memref<3x64x128xbf16, #tpu.memory_space<vmem>>, vector<1x64x128xbf16>
    %23 = vector.shape_cast %22 : vector<1x64x128xbf16> to vector<64x128xbf16>
    %cst_10 = arith.constant dense<0.000000e+00> : vector<32x128xf32>
    %24 = tpu.matmul %18, %23, %cst_10 {dimension_numbers = #tpu.dot_dimension_numbers<[1], [0], [0], [1], [0, 0, 1, 1], [], []>} : vector<32x64xbf16>, vector<64x128xbf16>, vector<32x128xf32> -> vector<32x128xf32>
    %c1_i32_11 = arith.constant 1 : i32
    %25 = tpu.dynamic_rotate %24 by %c1_i32_11 dim 0 : vector<32x128xf32>, i32 -> vector<32x128xf32>
    %c1_i32_12 = arith.constant 1 : i32
    %26 = vector.broadcast %c1_i32_12 : i32 to vector<32x128xi32>
    %27 = arith.cmpi sge, %16, %26 : vector<32x128xi32>
    %c17_i32 = arith.constant 17 : i32
    %28 = vector.broadcast %c17_i32 : i32 to vector<32x128xi32>
    %29 = arith.cmpi slt, %16, %28 : vector<32x128xi32>
    %30 = arith.andi %27, %29 : vector<32x128xi1>
    %cst_13 = arith.constant 0.000000e+00 : f32
    %31 = vector.broadcast %cst_13 : f32 to vector<32x128xf32>
    %32 = arith.select %30, %25, %31 : vector<32x128xi1>, vector<32x128xf32>
    %33 = arith.addf %21, %32 : vector<32x128xf32>
    %c1 = arith.constant 1 : index
    %c0_14 = arith.constant 0 : index
    %c0_15 = arith.constant 0 : index
    %34 = vector.load %arg1[%c1, %c0_14, %c0_15] : memref<3x64x128xbf16, #tpu.memory_space<vmem>>, vector<1x64x128xbf16>
    %35 = vector.shape_cast %34 : vector<1x64x128xbf16> to vector<64x128xbf16>
    %cst_16 = arith.constant dense<0.000000e+00> : vector<32x128xf32>
    %36 = tpu.matmul %18, %35, %cst_16 {dimension_numbers = #tpu.dot_dimension_numbers<[1], [0], [0], [1], [0, 0, 1, 1], [], []>} : vector<32x64xbf16>, vector<64x128xbf16>, vector<32x128xf32> -> vector<32x128xf32>
    %37 = arith.addf %33, %36 : vector<32x128xf32>
    %c2 = arith.constant 2 : index
    %c0_17 = arith.constant 0 : index
    %c0_18 = arith.constant 0 : index
    %38 = vector.load %arg1[%c2, %c0_17, %c0_18] : memref<3x64x128xbf16, #tpu.memory_space<vmem>>, vector<1x64x128xbf16>
    %39 = vector.shape_cast %38 : vector<1x64x128xbf16> to vector<64x128xbf16>
    %cst_19 = arith.constant dense<0.000000e+00> : vector<32x128xf32>
    %40 = tpu.matmul %18, %39, %cst_19 {dimension_numbers = #tpu.dot_dimension_numbers<[1], [0], [0], [1], [0, 0, 1, 1], [], []>} : vector<32x64xbf16>, vector<64x128xbf16>, vector<32x128xf32> -> vector<32x128xf32>
    %c31_i32 = arith.constant 31 : i32
    %41 = tpu.dynamic_rotate %40 by %c31_i32 dim 0 : vector<32x128xf32>, i32 -> vector<32x128xf32>
    %c-1_i32 = arith.constant -1 : i32
    %42 = vector.broadcast %c-1_i32 : i32 to vector<32x128xi32>
    %43 = arith.cmpi sge, %16, %42 : vector<32x128xi32>
    %c15_i32 = arith.constant 15 : i32
    %44 = vector.broadcast %c15_i32 : i32 to vector<32x128xi32>
    %45 = arith.cmpi slt, %16, %44 : vector<32x128xi32>
    %46 = arith.andi %43, %45 : vector<32x128xi1>
    %cst_20 = arith.constant 0.000000e+00 : f32
    %47 = vector.broadcast %cst_20 : f32 to vector<32x128xf32>
    %48 = arith.select %46, %41, %47 : vector<32x128xi1>, vector<32x128xf32>
    %49 = arith.addf %37, %48 : vector<32x128xf32>
    %50 = vector.extract_strided_slice %20 {offsets = [0, 0], sizes = [1, 128], strides = [1, 1]} : vector<3x128xf32> to vector<1x128xf32>
    %51 = vector.broadcast %50 : vector<1x128xf32> to vector<32x128xf32>
    %52 = arith.addf %49, %51 : vector<32x128xf32>
    %cst_21 = arith.constant dense<0.000000e+00> : vector<128xf32>
    %53 = vector.multi_reduction <add>, %52, %cst_21 [0] : vector<32x128xf32> to vector<128xf32>
    %54 = vector.shape_cast %53 : vector<128xf32> to vector<1x128xf32>
    %c64_i32 = arith.constant 64 : i32
    %55 = tpu.dynamic_rotate %54 by %c64_i32 dim 1 : vector<1x128xf32>, i32 -> vector<1x128xf32>
    %56 = arith.addf %54, %55 : vector<1x128xf32>
    %c32_i32 = arith.constant 32 : i32
    %57 = tpu.dynamic_rotate %56 by %c32_i32 dim 1 : vector<1x128xf32>, i32 -> vector<1x128xf32>
    %58 = arith.addf %56, %57 : vector<1x128xf32>
    %c16_i32_22 = arith.constant 16 : i32
    %59 = tpu.dynamic_rotate %58 by %c16_i32_22 dim 1 : vector<1x128xf32>, i32 -> vector<1x128xf32>
    %60 = arith.addf %58, %59 : vector<1x128xf32>
    %c8_i32 = arith.constant 8 : i32
    %61 = tpu.dynamic_rotate %60 by %c8_i32 dim 1 : vector<1x128xf32>, i32 -> vector<1x128xf32>
    %62 = arith.addf %60, %61 : vector<1x128xf32>
    %cst_23 = arith.constant 0.001953125 : f32
    %63 = vector.broadcast %cst_23 : f32 to vector<1x128xf32>
    %64 = arith.mulf %62, %63 : vector<1x128xf32>
    %65 = vector.broadcast %64 : vector<1x128xf32> to vector<32x128xf32>
    %66 = arith.subf %52, %65 : vector<32x128xf32>
    %67 = arith.mulf %66, %66 : vector<32x128xf32>
    %cst_24 = arith.constant dense<0.000000e+00> : vector<128xf32>
    %68 = vector.multi_reduction <add>, %67, %cst_24 [0] : vector<32x128xf32> to vector<128xf32>
    %69 = vector.shape_cast %68 : vector<128xf32> to vector<1x128xf32>
    %c64_i32_25 = arith.constant 64 : i32
    %70 = tpu.dynamic_rotate %69 by %c64_i32_25 dim 1 : vector<1x128xf32>, i32 -> vector<1x128xf32>
    %71 = arith.addf %69, %70 : vector<1x128xf32>
    %c32_i32_26 = arith.constant 32 : i32
    %72 = tpu.dynamic_rotate %71 by %c32_i32_26 dim 1 : vector<1x128xf32>, i32 -> vector<1x128xf32>
    %73 = arith.addf %71, %72 : vector<1x128xf32>
    %c16_i32_27 = arith.constant 16 : i32
    %74 = tpu.dynamic_rotate %73 by %c16_i32_27 dim 1 : vector<1x128xf32>, i32 -> vector<1x128xf32>
    %75 = arith.addf %73, %74 : vector<1x128xf32>
    %c8_i32_28 = arith.constant 8 : i32
    %76 = tpu.dynamic_rotate %75 by %c8_i32_28 dim 1 : vector<1x128xf32>, i32 -> vector<1x128xf32>
    %77 = arith.addf %75, %76 : vector<1x128xf32>
    %cst_29 = arith.constant 0.001953125 : f32
    %78 = vector.broadcast %cst_29 : f32 to vector<1x128xf32>
    %79 = arith.mulf %77, %78 : vector<1x128xf32>
    %cst_30 = arith.constant 9.99999974E-6 : f32
    %80 = vector.broadcast %cst_30 : f32 to vector<1x128xf32>
    %81 = arith.addf %79, %80 : vector<1x128xf32>
    %82 = math.rsqrt %81 : vector<1x128xf32>
    %83 = vector.extract_strided_slice %20 {offsets = [1, 0], sizes = [1, 128], strides = [1, 1]} : vector<3x128xf32> to vector<1x128xf32>
    %84 = arith.mulf %82, %83 : vector<1x128xf32>
    %85 = vector.broadcast %84 : vector<1x128xf32> to vector<32x128xf32>
    %86 = arith.mulf %66, %85 : vector<32x128xf32>
    %87 = vector.extract_strided_slice %20 {offsets = [2, 0], sizes = [1, 128], strides = [1, 1]} : vector<3x128xf32> to vector<1x128xf32>
    %88 = vector.broadcast %87 : vector<1x128xf32> to vector<32x128xf32>
    %89 = arith.addf %86, %88 : vector<32x128xf32>
    %cst_31 = arith.constant 0.000000e+00 : f32
    %90 = vector.broadcast %cst_31 : f32 to vector<32x128xf32>
    %91 = arith.maximumf %89, %90 : vector<32x128xf32>
    %92 = arith.truncf %91 : vector<32x128xf32> to vector<32x128xbf16>
    %c1_32 = arith.constant 1 : index
    %c0_33 = arith.constant 0 : index
    %c0_34 = arith.constant 0 : index
    %93 = vector.load %arg6[%c1_32, %c0_33, %c0_34] : memref<4x3x128xf32, #tpu.memory_space<vmem>>, vector<1x3x128xf32>
    %94 = vector.shape_cast %93 : vector<1x3x128xf32> to vector<3x128xf32>
    %cst_35 = arith.constant 0.000000e+00 : f32
    %95 = vector.broadcast %cst_35 : f32 to vector<32x128xf32>
    %c0_36 = arith.constant 0 : index
    %c0_37 = arith.constant 0 : index
    %c0_38 = arith.constant 0 : index
    %96 = vector.load %arg2[%c0_36, %c0_37, %c0_38] : memref<3x128x128xbf16, #tpu.memory_space<vmem>>, vector<1x128x128xbf16>
    %97 = vector.shape_cast %96 : vector<1x128x128xbf16> to vector<128x128xbf16>
    %cst_39 = arith.constant dense<0.000000e+00> : vector<32x128xf32>
    %98 = tpu.matmul %92, %97, %cst_39 {dimension_numbers = #tpu.dot_dimension_numbers<[1], [0], [0], [1], [0, 0, 1, 1], [], []>} : vector<32x128xbf16>, vector<128x128xbf16>, vector<32x128xf32> -> vector<32x128xf32>
    %c1_i32_40 = arith.constant 1 : i32
    %99 = tpu.dynamic_rotate %98 by %c1_i32_40 dim 0 : vector<32x128xf32>, i32 -> vector<32x128xf32>
    %c1_i32_41 = arith.constant 1 : i32
    %100 = vector.broadcast %c1_i32_41 : i32 to vector<32x128xi32>
    %101 = arith.cmpi sge, %16, %100 : vector<32x128xi32>
    %c17_i32_42 = arith.constant 17 : i32
    %102 = vector.broadcast %c17_i32_42 : i32 to vector<32x128xi32>
    %103 = arith.cmpi slt, %16, %102 : vector<32x128xi32>
    %104 = arith.andi %101, %103 : vector<32x128xi1>
    %cst_43 = arith.constant 0.000000e+00 : f32
    %105 = vector.broadcast %cst_43 : f32 to vector<32x128xf32>
    %106 = arith.select %104, %99, %105 : vector<32x128xi1>, vector<32x128xf32>
    %107 = arith.addf %95, %106 : vector<32x128xf32>
    %c1_44 = arith.constant 1 : index
    %c0_45 = arith.constant 0 : index
    %c0_46 = arith.constant 0 : index
    %108 = vector.load %arg2[%c1_44, %c0_45, %c0_46] : memref<3x128x128xbf16, #tpu.memory_space<vmem>>, vector<1x128x128xbf16>
    %109 = vector.shape_cast %108 : vector<1x128x128xbf16> to vector<128x128xbf16>
    %cst_47 = arith.constant dense<0.000000e+00> : vector<32x128xf32>
    %110 = tpu.matmul %92, %109, %cst_47 {dimension_numbers = #tpu.dot_dimension_numbers<[1], [0], [0], [1], [0, 0, 1, 1], [], []>} : vector<32x128xbf16>, vector<128x128xbf16>, vector<32x128xf32> -> vector<32x128xf32>
    %111 = arith.addf %107, %110 : vector<32x128xf32>
    %c2_48 = arith.constant 2 : index
    %c0_49 = arith.constant 0 : index
    %c0_50 = arith.constant 0 : index
    %112 = vector.load %arg2[%c2_48, %c0_49, %c0_50] : memref<3x128x128xbf16, #tpu.memory_space<vmem>>, vector<1x128x128xbf16>
    %113 = vector.shape_cast %112 : vector<1x128x128xbf16> to vector<128x128xbf16>
    %cst_51 = arith.constant dense<0.000000e+00> : vector<32x128xf32>
    %114 = tpu.matmul %92, %113, %cst_51 {dimension_numbers = #tpu.dot_dimension_numbers<[1], [0], [0], [1], [0, 0, 1, 1], [], []>} : vector<32x128xbf16>, vector<128x128xbf16>, vector<32x128xf32> -> vector<32x128xf32>
    %c31_i32_52 = arith.constant 31 : i32
    %115 = tpu.dynamic_rotate %114 by %c31_i32_52 dim 0 : vector<32x128xf32>, i32 -> vector<32x128xf32>
    %c-1_i32_53 = arith.constant -1 : i32
    %116 = vector.broadcast %c-1_i32_53 : i32 to vector<32x128xi32>
    %117 = arith.cmpi sge, %16, %116 : vector<32x128xi32>
    %c15_i32_54 = arith.constant 15 : i32
    %118 = vector.broadcast %c15_i32_54 : i32 to vector<32x128xi32>
    %119 = arith.cmpi slt, %16, %118 : vector<32x128xi32>
    %120 = arith.andi %117, %119 : vector<32x128xi1>
    %cst_55 = arith.constant 0.000000e+00 : f32
    %121 = vector.broadcast %cst_55 : f32 to vector<32x128xf32>
    %122 = arith.select %120, %115, %121 : vector<32x128xi1>, vector<32x128xf32>
    %123 = arith.addf %111, %122 : vector<32x128xf32>
    %124 = vector.extract_strided_slice %94 {offsets = [0, 0], sizes = [1, 128], strides = [1, 1]} : vector<3x128xf32> to vector<1x128xf32>
    %125 = vector.broadcast %124 : vector<1x128xf32> to vector<32x128xf32>
    %126 = arith.addf %123, %125 : vector<32x128xf32>
    %cst_56 = arith.constant dense<0.000000e+00> : vector<128xf32>
    %127 = vector.multi_reduction <add>, %126, %cst_56 [0] : vector<32x128xf32> to vector<128xf32>
    %128 = vector.shape_cast %127 : vector<128xf32> to vector<1x128xf32>
    %c64_i32_57 = arith.constant 64 : i32
    %129 = tpu.dynamic_rotate %128 by %c64_i32_57 dim 1 : vector<1x128xf32>, i32 -> vector<1x128xf32>
    %130 = arith.addf %128, %129 : vector<1x128xf32>
    %c32_i32_58 = arith.constant 32 : i32
    %131 = tpu.dynamic_rotate %130 by %c32_i32_58 dim 1 : vector<1x128xf32>, i32 -> vector<1x128xf32>
    %132 = arith.addf %130, %131 : vector<1x128xf32>
    %c16_i32_59 = arith.constant 16 : i32
    %133 = tpu.dynamic_rotate %132 by %c16_i32_59 dim 1 : vector<1x128xf32>, i32 -> vector<1x128xf32>
    %134 = arith.addf %132, %133 : vector<1x128xf32>
    %c8_i32_60 = arith.constant 8 : i32
    %135 = tpu.dynamic_rotate %134 by %c8_i32_60 dim 1 : vector<1x128xf32>, i32 -> vector<1x128xf32>
    %136 = arith.addf %134, %135 : vector<1x128xf32>
    %cst_61 = arith.constant 0.001953125 : f32
    %137 = vector.broadcast %cst_61 : f32 to vector<1x128xf32>
    %138 = arith.mulf %136, %137 : vector<1x128xf32>
    %139 = vector.broadcast %138 : vector<1x128xf32> to vector<32x128xf32>
    %140 = arith.subf %126, %139 : vector<32x128xf32>
    %141 = arith.mulf %140, %140 : vector<32x128xf32>
    %cst_62 = arith.constant dense<0.000000e+00> : vector<128xf32>
    %142 = vector.multi_reduction <add>, %141, %cst_62 [0] : vector<32x128xf32> to vector<128xf32>
    %143 = vector.shape_cast %142 : vector<128xf32> to vector<1x128xf32>
    %c64_i32_63 = arith.constant 64 : i32
    %144 = tpu.dynamic_rotate %143 by %c64_i32_63 dim 1 : vector<1x128xf32>, i32 -> vector<1x128xf32>
    %145 = arith.addf %143, %144 : vector<1x128xf32>
    %c32_i32_64 = arith.constant 32 : i32
    %146 = tpu.dynamic_rotate %145 by %c32_i32_64 dim 1 : vector<1x128xf32>, i32 -> vector<1x128xf32>
    %147 = arith.addf %145, %146 : vector<1x128xf32>
    %c16_i32_65 = arith.constant 16 : i32
    %148 = tpu.dynamic_rotate %147 by %c16_i32_65 dim 1 : vector<1x128xf32>, i32 -> vector<1x128xf32>
    %149 = arith.addf %147, %148 : vector<1x128xf32>
    %c8_i32_66 = arith.constant 8 : i32
    %150 = tpu.dynamic_rotate %149 by %c8_i32_66 dim 1 : vector<1x128xf32>, i32 -> vector<1x128xf32>
    %151 = arith.addf %149, %150 : vector<1x128xf32>
    %cst_67 = arith.constant 0.001953125 : f32
    %152 = vector.broadcast %cst_67 : f32 to vector<1x128xf32>
    %153 = arith.mulf %151, %152 : vector<1x128xf32>
    %cst_68 = arith.constant 9.99999974E-6 : f32
    %154 = vector.broadcast %cst_68 : f32 to vector<1x128xf32>
    %155 = arith.addf %153, %154 : vector<1x128xf32>
    %156 = math.rsqrt %155 : vector<1x128xf32>
    %157 = vector.extract_strided_slice %94 {offsets = [1, 0], sizes = [1, 128], strides = [1, 1]} : vector<3x128xf32> to vector<1x128xf32>
    %158 = arith.mulf %156, %157 : vector<1x128xf32>
    %159 = vector.broadcast %158 : vector<1x128xf32> to vector<32x128xf32>
    %160 = arith.mulf %140, %159 : vector<32x128xf32>
    %161 = vector.extract_strided_slice %94 {offsets = [2, 0], sizes = [1, 128], strides = [1, 1]} : vector<3x128xf32> to vector<1x128xf32>
    %162 = vector.broadcast %161 : vector<1x128xf32> to vector<32x128xf32>
    %163 = arith.addf %160, %162 : vector<32x128xf32>
    %cst_69 = arith.constant 0.000000e+00 : f32
    %164 = vector.broadcast %cst_69 : f32 to vector<32x128xf32>
    %165 = arith.maximumf %163, %164 : vector<32x128xf32>
    %c2_70 = arith.constant 2 : index
    %c0_71 = arith.constant 0 : index
    %c0_72 = arith.constant 0 : index
    %166 = vector.load %arg6[%c2_70, %c0_71, %c0_72] : memref<4x3x128xf32, #tpu.memory_space<vmem>>, vector<1x3x128xf32>
    %167 = vector.shape_cast %166 : vector<1x3x128xf32> to vector<3x128xf32>
    %cst_73 = arith.constant 0.000000e+00 : f32
    %168 = vector.broadcast %cst_73 : f32 to vector<32x128xf32>
    %c0_74 = arith.constant 0 : index
    %c0_75 = arith.constant 0 : index
    %c0_76 = arith.constant 0 : index
    %169 = vector.load %arg3[%c0_74, %c0_75, %c0_76] : memref<7x64x128xbf16, #tpu.memory_space<vmem>>, vector<1x64x128xbf16>
    %170 = vector.shape_cast %169 : vector<1x64x128xbf16> to vector<64x128xbf16>
    %cst_77 = arith.constant dense<0.000000e+00> : vector<32x128xf32>
    %171 = tpu.matmul %18, %170, %cst_77 {dimension_numbers = #tpu.dot_dimension_numbers<[1], [0], [0], [1], [0, 0, 1, 1], [], []>} : vector<32x64xbf16>, vector<64x128xbf16>, vector<32x128xf32> -> vector<32x128xf32>
    %c3_i32 = arith.constant 3 : i32
    %172 = tpu.dynamic_rotate %171 by %c3_i32 dim 0 : vector<32x128xf32>, i32 -> vector<32x128xf32>
    %c3_i32_78 = arith.constant 3 : i32
    %173 = vector.broadcast %c3_i32_78 : i32 to vector<32x128xi32>
    %174 = arith.cmpi sge, %16, %173 : vector<32x128xi32>
    %c19_i32 = arith.constant 19 : i32
    %175 = vector.broadcast %c19_i32 : i32 to vector<32x128xi32>
    %176 = arith.cmpi slt, %16, %175 : vector<32x128xi32>
    %177 = arith.andi %174, %176 : vector<32x128xi1>
    %cst_79 = arith.constant 0.000000e+00 : f32
    %178 = vector.broadcast %cst_79 : f32 to vector<32x128xf32>
    %179 = arith.select %177, %172, %178 : vector<32x128xi1>, vector<32x128xf32>
    %180 = arith.addf %168, %179 : vector<32x128xf32>
    %c1_80 = arith.constant 1 : index
    %c0_81 = arith.constant 0 : index
    %c0_82 = arith.constant 0 : index
    %181 = vector.load %arg3[%c1_80, %c0_81, %c0_82] : memref<7x64x128xbf16, #tpu.memory_space<vmem>>, vector<1x64x128xbf16>
    %182 = vector.shape_cast %181 : vector<1x64x128xbf16> to vector<64x128xbf16>
    %cst_83 = arith.constant dense<0.000000e+00> : vector<32x128xf32>
    %183 = tpu.matmul %18, %182, %cst_83 {dimension_numbers = #tpu.dot_dimension_numbers<[1], [0], [0], [1], [0, 0, 1, 1], [], []>} : vector<32x64xbf16>, vector<64x128xbf16>, vector<32x128xf32> -> vector<32x128xf32>
    %c2_i32 = arith.constant 2 : i32
    %184 = tpu.dynamic_rotate %183 by %c2_i32 dim 0 : vector<32x128xf32>, i32 -> vector<32x128xf32>
    %c2_i32_84 = arith.constant 2 : i32
    %185 = vector.broadcast %c2_i32_84 : i32 to vector<32x128xi32>
    %186 = arith.cmpi sge, %16, %185 : vector<32x128xi32>
    %c18_i32 = arith.constant 18 : i32
    %187 = vector.broadcast %c18_i32 : i32 to vector<32x128xi32>
    %188 = arith.cmpi slt, %16, %187 : vector<32x128xi32>
    %189 = arith.andi %186, %188 : vector<32x128xi1>
    %cst_85 = arith.constant 0.000000e+00 : f32
    %190 = vector.broadcast %cst_85 : f32 to vector<32x128xf32>
    %191 = arith.select %189, %184, %190 : vector<32x128xi1>, vector<32x128xf32>
    %192 = arith.addf %180, %191 : vector<32x128xf32>
    %c2_86 = arith.constant 2 : index
    %c0_87 = arith.constant 0 : index
    %c0_88 = arith.constant 0 : index
    %193 = vector.load %arg3[%c2_86, %c0_87, %c0_88] : memref<7x64x128xbf16, #tpu.memory_space<vmem>>, vector<1x64x128xbf16>
    %194 = vector.shape_cast %193 : vector<1x64x128xbf16> to vector<64x128xbf16>
    %cst_89 = arith.constant dense<0.000000e+00> : vector<32x128xf32>
    %195 = tpu.matmul %18, %194, %cst_89 {dimension_numbers = #tpu.dot_dimension_numbers<[1], [0], [0], [1], [0, 0, 1, 1], [], []>} : vector<32x64xbf16>, vector<64x128xbf16>, vector<32x128xf32> -> vector<32x128xf32>
    %c1_i32_90 = arith.constant 1 : i32
    %196 = tpu.dynamic_rotate %195 by %c1_i32_90 dim 0 : vector<32x128xf32>, i32 -> vector<32x128xf32>
    %c1_i32_91 = arith.constant 1 : i32
    %197 = vector.broadcast %c1_i32_91 : i32 to vector<32x128xi32>
    %198 = arith.cmpi sge, %16, %197 : vector<32x128xi32>
    %c17_i32_92 = arith.constant 17 : i32
    %199 = vector.broadcast %c17_i32_92 : i32 to vector<32x128xi32>
    %200 = arith.cmpi slt, %16, %199 : vector<32x128xi32>
    %201 = arith.andi %198, %200 : vector<32x128xi1>
    %cst_93 = arith.constant 0.000000e+00 : f32
    %202 = vector.broadcast %cst_93 : f32 to vector<32x128xf32>
    %203 = arith.select %201, %196, %202 : vector<32x128xi1>, vector<32x128xf32>
    %204 = arith.addf %192, %203 : vector<32x128xf32>
    %c3 = arith.constant 3 : index
    %c0_94 = arith.constant 0 : index
    %c0_95 = arith.constant 0 : index
    %205 = vector.load %arg3[%c3, %c0_94, %c0_95] : memref<7x64x128xbf16, #tpu.memory_space<vmem>>, vector<1x64x128xbf16>
    %206 = vector.shape_cast %205 : vector<1x64x128xbf16> to vector<64x128xbf16>
    %cst_96 = arith.constant dense<0.000000e+00> : vector<32x128xf32>
    %207 = tpu.matmul %18, %206, %cst_96 {dimension_numbers = #tpu.dot_dimension_numbers<[1], [0], [0], [1], [0, 0, 1, 1], [], []>} : vector<32x64xbf16>, vector<64x128xbf16>, vector<32x128xf32> -> vector<32x128xf32>
    %208 = arith.addf %204, %207 : vector<32x128xf32>
    %c4 = arith.constant 4 : index
    %c0_97 = arith.constant 0 : index
    %c0_98 = arith.constant 0 : index
    %209 = vector.load %arg3[%c4, %c0_97, %c0_98] : memref<7x64x128xbf16, #tpu.memory_space<vmem>>, vector<1x64x128xbf16>
    %210 = vector.shape_cast %209 : vector<1x64x128xbf16> to vector<64x128xbf16>
    %cst_99 = arith.constant dense<0.000000e+00> : vector<32x128xf32>
    %211 = tpu.matmul %18, %210, %cst_99 {dimension_numbers = #tpu.dot_dimension_numbers<[1], [0], [0], [1], [0, 0, 1, 1], [], []>} : vector<32x64xbf16>, vector<64x128xbf16>, vector<32x128xf32> -> vector<32x128xf32>
    %c31_i32_100 = arith.constant 31 : i32
    %212 = tpu.dynamic_rotate %211 by %c31_i32_100 dim 0 : vector<32x128xf32>, i32 -> vector<32x128xf32>
    %c-1_i32_101 = arith.constant -1 : i32
    %213 = vector.broadcast %c-1_i32_101 : i32 to vector<32x128xi32>
    %214 = arith.cmpi sge, %16, %213 : vector<32x128xi32>
    %c15_i32_102 = arith.constant 15 : i32
    %215 = vector.broadcast %c15_i32_102 : i32 to vector<32x128xi32>
    %216 = arith.cmpi slt, %16, %215 : vector<32x128xi32>
    %217 = arith.andi %214, %216 : vector<32x128xi1>
    %cst_103 = arith.constant 0.000000e+00 : f32
    %218 = vector.broadcast %cst_103 : f32 to vector<32x128xf32>
    %219 = arith.select %217, %212, %218 : vector<32x128xi1>, vector<32x128xf32>
    %220 = arith.addf %208, %219 : vector<32x128xf32>
    %c5 = arith.constant 5 : index
    %c0_104 = arith.constant 0 : index
    %c0_105 = arith.constant 0 : index
    %221 = vector.load %arg3[%c5, %c0_104, %c0_105] : memref<7x64x128xbf16, #tpu.memory_space<vmem>>, vector<1x64x128xbf16>
    %222 = vector.shape_cast %221 : vector<1x64x128xbf16> to vector<64x128xbf16>
    %cst_106 = arith.constant dense<0.000000e+00> : vector<32x128xf32>
    %223 = tpu.matmul %18, %222, %cst_106 {dimension_numbers = #tpu.dot_dimension_numbers<[1], [0], [0], [1], [0, 0, 1, 1], [], []>} : vector<32x64xbf16>, vector<64x128xbf16>, vector<32x128xf32> -> vector<32x128xf32>
    %c30_i32 = arith.constant 30 : i32
    %224 = tpu.dynamic_rotate %223 by %c30_i32 dim 0 : vector<32x128xf32>, i32 -> vector<32x128xf32>
    %c-2_i32 = arith.constant -2 : i32
    %225 = vector.broadcast %c-2_i32 : i32 to vector<32x128xi32>
    %226 = arith.cmpi sge, %16, %225 : vector<32x128xi32>
    %c14_i32 = arith.constant 14 : i32
    %227 = vector.broadcast %c14_i32 : i32 to vector<32x128xi32>
    %228 = arith.cmpi slt, %16, %227 : vector<32x128xi32>
    %229 = arith.andi %226, %228 : vector<32x128xi1>
    %cst_107 = arith.constant 0.000000e+00 : f32
    %230 = vector.broadcast %cst_107 : f32 to vector<32x128xf32>
    %231 = arith.select %229, %224, %230 : vector<32x128xi1>, vector<32x128xf32>
    %232 = arith.addf %220, %231 : vector<32x128xf32>
    %c6 = arith.constant 6 : index
    %c0_108 = arith.constant 0 : index
    %c0_109 = arith.constant 0 : index
    %233 = vector.load %arg3[%c6, %c0_108, %c0_109] : memref<7x64x128xbf16, #tpu.memory_space<vmem>>, vector<1x64x128xbf16>
    %234 = vector.shape_cast %233 : vector<1x64x128xbf16> to vector<64x128xbf16>
    %cst_110 = arith.constant dense<0.000000e+00> : vector<32x128xf32>
    %235 = tpu.matmul %18, %234, %cst_110 {dimension_numbers = #tpu.dot_dimension_numbers<[1], [0], [0], [1], [0, 0, 1, 1], [], []>} : vector<32x64xbf16>, vector<64x128xbf16>, vector<32x128xf32> -> vector<32x128xf32>
    %c29_i32 = arith.constant 29 : i32
    %236 = tpu.dynamic_rotate %235 by %c29_i32 dim 0 : vector<32x128xf32>, i32 -> vector<32x128xf32>
    %c-3_i32 = arith.constant -3 : i32
    %237 = vector.broadcast %c-3_i32 : i32 to vector<32x128xi32>
    %238 = arith.cmpi sge, %16, %237 : vector<32x128xi32>
    %c13_i32 = arith.constant 13 : i32
    %239 = vector.broadcast %c13_i32 : i32 to vector<32x128xi32>
    %240 = arith.cmpi slt, %16, %239 : vector<32x128xi32>
    %241 = arith.andi %238, %240 : vector<32x128xi1>
    %cst_111 = arith.constant 0.000000e+00 : f32
    %242 = vector.broadcast %cst_111 : f32 to vector<32x128xf32>
    %243 = arith.select %241, %236, %242 : vector<32x128xi1>, vector<32x128xf32>
    %244 = arith.addf %232, %243 : vector<32x128xf32>
    %245 = vector.extract_strided_slice %167 {offsets = [0, 0], sizes = [1, 128], strides = [1, 1]} : vector<3x128xf32> to vector<1x128xf32>
    %246 = vector.broadcast %245 : vector<1x128xf32> to vector<32x128xf32>
    %247 = arith.addf %244, %246 : vector<32x128xf32>
    %cst_112 = arith.constant dense<0.000000e+00> : vector<128xf32>
    %248 = vector.multi_reduction <add>, %247, %cst_112 [0] : vector<32x128xf32> to vector<128xf32>
    %249 = vector.shape_cast %248 : vector<128xf32> to vector<1x128xf32>
    %c64_i32_113 = arith.constant 64 : i32
    %250 = tpu.dynamic_rotate %249 by %c64_i32_113 dim 1 : vector<1x128xf32>, i32 -> vector<1x128xf32>
    %251 = arith.addf %249, %250 : vector<1x128xf32>
    %c32_i32_114 = arith.constant 32 : i32
    %252 = tpu.dynamic_rotate %251 by %c32_i32_114 dim 1 : vector<1x128xf32>, i32 -> vector<1x128xf32>
    %253 = arith.addf %251, %252 : vector<1x128xf32>
    %c16_i32_115 = arith.constant 16 : i32
    %254 = tpu.dynamic_rotate %253 by %c16_i32_115 dim 1 : vector<1x128xf32>, i32 -> vector<1x128xf32>
    %255 = arith.addf %253, %254 : vector<1x128xf32>
    %c8_i32_116 = arith.constant 8 : i32
    %256 = tpu.dynamic_rotate %255 by %c8_i32_116 dim 1 : vector<1x128xf32>, i32 -> vector<1x128xf32>
    %257 = arith.addf %255, %256 : vector<1x128xf32>
    %cst_117 = arith.constant 0.001953125 : f32
    %258 = vector.broadcast %cst_117 : f32 to vector<1x128xf32>
    %259 = arith.mulf %257, %258 : vector<1x128xf32>
    %260 = vector.broadcast %259 : vector<1x128xf32> to vector<32x128xf32>
    %261 = arith.subf %247, %260 : vector<32x128xf32>
    %262 = arith.mulf %261, %261 : vector<32x128xf32>
    %cst_118 = arith.constant dense<0.000000e+00> : vector<128xf32>
    %263 = vector.multi_reduction <add>, %262, %cst_118 [0] : vector<32x128xf32> to vector<128xf32>
    %264 = vector.shape_cast %263 : vector<128xf32> to vector<1x128xf32>
    %c64_i32_119 = arith.constant 64 : i32
    %265 = tpu.dynamic_rotate %264 by %c64_i32_119 dim 1 : vector<1x128xf32>, i32 -> vector<1x128xf32>
    %266 = arith.addf %264, %265 : vector<1x128xf32>
    %c32_i32_120 = arith.constant 32 : i32
    %267 = tpu.dynamic_rotate %266 by %c32_i32_120 dim 1 : vector<1x128xf32>, i32 -> vector<1x128xf32>
    %268 = arith.addf %266, %267 : vector<1x128xf32>
    %c16_i32_121 = arith.constant 16 : i32
    %269 = tpu.dynamic_rotate %268 by %c16_i32_121 dim 1 : vector<1x128xf32>, i32 -> vector<1x128xf32>
    %270 = arith.addf %268, %269 : vector<1x128xf32>
    %c8_i32_122 = arith.constant 8 : i32
    %271 = tpu.dynamic_rotate %270 by %c8_i32_122 dim 1 : vector<1x128xf32>, i32 -> vector<1x128xf32>
    %272 = arith.addf %270, %271 : vector<1x128xf32>
    %cst_123 = arith.constant 0.001953125 : f32
    %273 = vector.broadcast %cst_123 : f32 to vector<1x128xf32>
    %274 = arith.mulf %272, %273 : vector<1x128xf32>
    %cst_124 = arith.constant 9.99999974E-6 : f32
    %275 = vector.broadcast %cst_124 : f32 to vector<1x128xf32>
    %276 = arith.addf %274, %275 : vector<1x128xf32>
    %277 = math.rsqrt %276 : vector<1x128xf32>
    %278 = vector.extract_strided_slice %167 {offsets = [1, 0], sizes = [1, 128], strides = [1, 1]} : vector<3x128xf32> to vector<1x128xf32>
    %279 = arith.mulf %277, %278 : vector<1x128xf32>
    %280 = vector.broadcast %279 : vector<1x128xf32> to vector<32x128xf32>
    %281 = arith.mulf %261, %280 : vector<32x128xf32>
    %282 = vector.extract_strided_slice %167 {offsets = [2, 0], sizes = [1, 128], strides = [1, 1]} : vector<3x128xf32> to vector<1x128xf32>
    %283 = vector.broadcast %282 : vector<1x128xf32> to vector<32x128xf32>
    %284 = arith.addf %281, %283 : vector<32x128xf32>
    %cst_125 = arith.constant 0.000000e+00 : f32
    %285 = vector.broadcast %cst_125 : f32 to vector<32x128xf32>
    %286 = arith.maximumf %284, %285 : vector<32x128xf32>
    %287 = arith.truncf %286 : vector<32x128xf32> to vector<32x128xbf16>
    %c3_126 = arith.constant 3 : index
    %c0_127 = arith.constant 0 : index
    %c0_128 = arith.constant 0 : index
    %288 = vector.load %arg6[%c3_126, %c0_127, %c0_128] : memref<4x3x128xf32, #tpu.memory_space<vmem>>, vector<1x3x128xf32>
    %289 = vector.shape_cast %288 : vector<1x3x128xf32> to vector<3x128xf32>
    %cst_129 = arith.constant 0.000000e+00 : f32
    %290 = vector.broadcast %cst_129 : f32 to vector<32x128xf32>
    %c0_130 = arith.constant 0 : index
    %c0_131 = arith.constant 0 : index
    %c0_132 = arith.constant 0 : index
    %291 = vector.load %arg4[%c0_130, %c0_131, %c0_132] : memref<7x128x128xbf16, #tpu.memory_space<vmem>>, vector<1x128x128xbf16>
    %292 = vector.shape_cast %291 : vector<1x128x128xbf16> to vector<128x128xbf16>
    %cst_133 = arith.constant dense<0.000000e+00> : vector<32x128xf32>
    %293 = tpu.matmul %287, %292, %cst_133 {dimension_numbers = #tpu.dot_dimension_numbers<[1], [0], [0], [1], [0, 0, 1, 1], [], []>} : vector<32x128xbf16>, vector<128x128xbf16>, vector<32x128xf32> -> vector<32x128xf32>
    %c3_i32_134 = arith.constant 3 : i32
    %294 = tpu.dynamic_rotate %293 by %c3_i32_134 dim 0 : vector<32x128xf32>, i32 -> vector<32x128xf32>
    %c3_i32_135 = arith.constant 3 : i32
    %295 = vector.broadcast %c3_i32_135 : i32 to vector<32x128xi32>
    %296 = arith.cmpi sge, %16, %295 : vector<32x128xi32>
    %c19_i32_136 = arith.constant 19 : i32
    %297 = vector.broadcast %c19_i32_136 : i32 to vector<32x128xi32>
    %298 = arith.cmpi slt, %16, %297 : vector<32x128xi32>
    %299 = arith.andi %296, %298 : vector<32x128xi1>
    %cst_137 = arith.constant 0.000000e+00 : f32
    %300 = vector.broadcast %cst_137 : f32 to vector<32x128xf32>
    %301 = arith.select %299, %294, %300 : vector<32x128xi1>, vector<32x128xf32>
    %302 = arith.addf %290, %301 : vector<32x128xf32>
    %c1_138 = arith.constant 1 : index
    %c0_139 = arith.constant 0 : index
    %c0_140 = arith.constant 0 : index
    %303 = vector.load %arg4[%c1_138, %c0_139, %c0_140] : memref<7x128x128xbf16, #tpu.memory_space<vmem>>, vector<1x128x128xbf16>
    %304 = vector.shape_cast %303 : vector<1x128x128xbf16> to vector<128x128xbf16>
    %cst_141 = arith.constant dense<0.000000e+00> : vector<32x128xf32>
    %305 = tpu.matmul %287, %304, %cst_141 {dimension_numbers = #tpu.dot_dimension_numbers<[1], [0], [0], [1], [0, 0, 1, 1], [], []>} : vector<32x128xbf16>, vector<128x128xbf16>, vector<32x128xf32> -> vector<32x128xf32>
    %c2_i32_142 = arith.constant 2 : i32
    %306 = tpu.dynamic_rotate %305 by %c2_i32_142 dim 0 : vector<32x128xf32>, i32 -> vector<32x128xf32>
    %c2_i32_143 = arith.constant 2 : i32
    %307 = vector.broadcast %c2_i32_143 : i32 to vector<32x128xi32>
    %308 = arith.cmpi sge, %16, %307 : vector<32x128xi32>
    %c18_i32_144 = arith.constant 18 : i32
    %309 = vector.broadcast %c18_i32_144 : i32 to vector<32x128xi32>
    %310 = arith.cmpi slt, %16, %309 : vector<32x128xi32>
    %311 = arith.andi %308, %310 : vector<32x128xi1>
    %cst_145 = arith.constant 0.000000e+00 : f32
    %312 = vector.broadcast %cst_145 : f32 to vector<32x128xf32>
    %313 = arith.select %311, %306, %312 : vector<32x128xi1>, vector<32x128xf32>
    %314 = arith.addf %302, %313 : vector<32x128xf32>
    %c2_146 = arith.constant 2 : index
    %c0_147 = arith.constant 0 : index
    %c0_148 = arith.constant 0 : index
    %315 = vector.load %arg4[%c2_146, %c0_147, %c0_148] : memref<7x128x128xbf16, #tpu.memory_space<vmem>>, vector<1x128x128xbf16>
    %316 = vector.shape_cast %315 : vector<1x128x128xbf16> to vector<128x128xbf16>
    %cst_149 = arith.constant dense<0.000000e+00> : vector<32x128xf32>
    %317 = tpu.matmul %287, %316, %cst_149 {dimension_numbers = #tpu.dot_dimension_numbers<[1], [0], [0], [1], [0, 0, 1, 1], [], []>} : vector<32x128xbf16>, vector<128x128xbf16>, vector<32x128xf32> -> vector<32x128xf32>
    %c1_i32_150 = arith.constant 1 : i32
    %318 = tpu.dynamic_rotate %317 by %c1_i32_150 dim 0 : vector<32x128xf32>, i32 -> vector<32x128xf32>
    %c1_i32_151 = arith.constant 1 : i32
    %319 = vector.broadcast %c1_i32_151 : i32 to vector<32x128xi32>
    %320 = arith.cmpi sge, %16, %319 : vector<32x128xi32>
    %c17_i32_152 = arith.constant 17 : i32
    %321 = vector.broadcast %c17_i32_152 : i32 to vector<32x128xi32>
    %322 = arith.cmpi slt, %16, %321 : vector<32x128xi32>
    %323 = arith.andi %320, %322 : vector<32x128xi1>
    %cst_153 = arith.constant 0.000000e+00 : f32
    %324 = vector.broadcast %cst_153 : f32 to vector<32x128xf32>
    %325 = arith.select %323, %318, %324 : vector<32x128xi1>, vector<32x128xf32>
    %326 = arith.addf %314, %325 : vector<32x128xf32>
    %c3_154 = arith.constant 3 : index
    %c0_155 = arith.constant 0 : index
    %c0_156 = arith.constant 0 : index
    %327 = vector.load %arg4[%c3_154, %c0_155, %c0_156] : memref<7x128x128xbf16, #tpu.memory_space<vmem>>, vector<1x128x128xbf16>
    %328 = vector.shape_cast %327 : vector<1x128x128xbf16> to vector<128x128xbf16>
    %cst_157 = arith.constant dense<0.000000e+00> : vector<32x128xf32>
    %329 = tpu.matmul %287, %328, %cst_157 {dimension_numbers = #tpu.dot_dimension_numbers<[1], [0], [0], [1], [0, 0, 1, 1], [], []>} : vector<32x128xbf16>, vector<128x128xbf16>, vector<32x128xf32> -> vector<32x128xf32>
    %330 = arith.addf %326, %329 : vector<32x128xf32>
    %c4_158 = arith.constant 4 : index
    %c0_159 = arith.constant 0 : index
    %c0_160 = arith.constant 0 : index
    %331 = vector.load %arg4[%c4_158, %c0_159, %c0_160] : memref<7x128x128xbf16, #tpu.memory_space<vmem>>, vector<1x128x128xbf16>
    %332 = vector.shape_cast %331 : vector<1x128x128xbf16> to vector<128x128xbf16>
    %cst_161 = arith.constant dense<0.000000e+00> : vector<32x128xf32>
    %333 = tpu.matmul %287, %332, %cst_161 {dimension_numbers = #tpu.dot_dimension_numbers<[1], [0], [0], [1], [0, 0, 1, 1], [], []>} : vector<32x128xbf16>, vector<128x128xbf16>, vector<32x128xf32> -> vector<32x128xf32>
    %c31_i32_162 = arith.constant 31 : i32
    %334 = tpu.dynamic_rotate %333 by %c31_i32_162 dim 0 : vector<32x128xf32>, i32 -> vector<32x128xf32>
    %c-1_i32_163 = arith.constant -1 : i32
    %335 = vector.broadcast %c-1_i32_163 : i32 to vector<32x128xi32>
    %336 = arith.cmpi sge, %16, %335 : vector<32x128xi32>
    %c15_i32_164 = arith.constant 15 : i32
    %337 = vector.broadcast %c15_i32_164 : i32 to vector<32x128xi32>
    %338 = arith.cmpi slt, %16, %337 : vector<32x128xi32>
    %339 = arith.andi %336, %338 : vector<32x128xi1>
    %cst_165 = arith.constant 0.000000e+00 : f32
    %340 = vector.broadcast %cst_165 : f32 to vector<32x128xf32>
    %341 = arith.select %339, %334, %340 : vector<32x128xi1>, vector<32x128xf32>
    %342 = arith.addf %330, %341 : vector<32x128xf32>
    %c5_166 = arith.constant 5 : index
    %c0_167 = arith.constant 0 : index
    %c0_168 = arith.constant 0 : index
    %343 = vector.load %arg4[%c5_166, %c0_167, %c0_168] : memref<7x128x128xbf16, #tpu.memory_space<vmem>>, vector<1x128x128xbf16>
    %344 = vector.shape_cast %343 : vector<1x128x128xbf16> to vector<128x128xbf16>
    %cst_169 = arith.constant dense<0.000000e+00> : vector<32x128xf32>
    %345 = tpu.matmul %287, %344, %cst_169 {dimension_numbers = #tpu.dot_dimension_numbers<[1], [0], [0], [1], [0, 0, 1, 1], [], []>} : vector<32x128xbf16>, vector<128x128xbf16>, vector<32x128xf32> -> vector<32x128xf32>
    %c30_i32_170 = arith.constant 30 : i32
    %346 = tpu.dynamic_rotate %345 by %c30_i32_170 dim 0 : vector<32x128xf32>, i32 -> vector<32x128xf32>
    %c-2_i32_171 = arith.constant -2 : i32
    %347 = vector.broadcast %c-2_i32_171 : i32 to vector<32x128xi32>
    %348 = arith.cmpi sge, %16, %347 : vector<32x128xi32>
    %c14_i32_172 = arith.constant 14 : i32
    %349 = vector.broadcast %c14_i32_172 : i32 to vector<32x128xi32>
    %350 = arith.cmpi slt, %16, %349 : vector<32x128xi32>
    %351 = arith.andi %348, %350 : vector<32x128xi1>
    %cst_173 = arith.constant 0.000000e+00 : f32
    %352 = vector.broadcast %cst_173 : f32 to vector<32x128xf32>
    %353 = arith.select %351, %346, %352 : vector<32x128xi1>, vector<32x128xf32>
    %354 = arith.addf %342, %353 : vector<32x128xf32>
    %c6_174 = arith.constant 6 : index
    %c0_175 = arith.constant 0 : index
    %c0_176 = arith.constant 0 : index
    %355 = vector.load %arg4[%c6_174, %c0_175, %c0_176] : memref<7x128x128xbf16, #tpu.memory_space<vmem>>, vector<1x128x128xbf16>
    %356 = vector.shape_cast %355 : vector<1x128x128xbf16> to vector<128x128xbf16>
    %cst_177 = arith.constant dense<0.000000e+00> : vector<32x128xf32>
    %357 = tpu.matmul %287, %356, %cst_177 {dimension_numbers = #tpu.dot_dimension_numbers<[1], [0], [0], [1], [0, 0, 1, 1], [], []>} : vector<32x128xbf16>, vector<128x128xbf16>, vector<32x128xf32> -> vector<32x128xf32>
    %c29_i32_178 = arith.constant 29 : i32
    %358 = tpu.dynamic_rotate %357 by %c29_i32_178 dim 0 : vector<32x128xf32>, i32 -> vector<32x128xf32>
    %c-3_i32_179 = arith.constant -3 : i32
    %359 = vector.broadcast %c-3_i32_179 : i32 to vector<32x128xi32>
    %360 = arith.cmpi sge, %16, %359 : vector<32x128xi32>
    %c13_i32_180 = arith.constant 13 : i32
    %361 = vector.broadcast %c13_i32_180 : i32 to vector<32x128xi32>
    %362 = arith.cmpi slt, %16, %361 : vector<32x128xi32>
    %363 = arith.andi %360, %362 : vector<32x128xi1>
    %cst_181 = arith.constant 0.000000e+00 : f32
    %364 = vector.broadcast %cst_181 : f32 to vector<32x128xf32>
    %365 = arith.select %363, %358, %364 : vector<32x128xi1>, vector<32x128xf32>
    %366 = arith.addf %354, %365 : vector<32x128xf32>
    %367 = vector.extract_strided_slice %289 {offsets = [0, 0], sizes = [1, 128], strides = [1, 1]} : vector<3x128xf32> to vector<1x128xf32>
    %368 = vector.broadcast %367 : vector<1x128xf32> to vector<32x128xf32>
    %369 = arith.addf %366, %368 : vector<32x128xf32>
    %cst_182 = arith.constant dense<0.000000e+00> : vector<128xf32>
    %370 = vector.multi_reduction <add>, %369, %cst_182 [0] : vector<32x128xf32> to vector<128xf32>
    %371 = vector.shape_cast %370 : vector<128xf32> to vector<1x128xf32>
    %c64_i32_183 = arith.constant 64 : i32
    %372 = tpu.dynamic_rotate %371 by %c64_i32_183 dim 1 : vector<1x128xf32>, i32 -> vector<1x128xf32>
    %373 = arith.addf %371, %372 : vector<1x128xf32>
    %c32_i32_184 = arith.constant 32 : i32
    %374 = tpu.dynamic_rotate %373 by %c32_i32_184 dim 1 : vector<1x128xf32>, i32 -> vector<1x128xf32>
    %375 = arith.addf %373, %374 : vector<1x128xf32>
    %c16_i32_185 = arith.constant 16 : i32
    %376 = tpu.dynamic_rotate %375 by %c16_i32_185 dim 1 : vector<1x128xf32>, i32 -> vector<1x128xf32>
    %377 = arith.addf %375, %376 : vector<1x128xf32>
    %c8_i32_186 = arith.constant 8 : i32
    %378 = tpu.dynamic_rotate %377 by %c8_i32_186 dim 1 : vector<1x128xf32>, i32 -> vector<1x128xf32>
    %379 = arith.addf %377, %378 : vector<1x128xf32>
    %cst_187 = arith.constant 0.001953125 : f32
    %380 = vector.broadcast %cst_187 : f32 to vector<1x128xf32>
    %381 = arith.mulf %379, %380 : vector<1x128xf32>
    %382 = vector.broadcast %381 : vector<1x128xf32> to vector<32x128xf32>
    %383 = arith.subf %369, %382 : vector<32x128xf32>
    %384 = arith.mulf %383, %383 : vector<32x128xf32>
    %cst_188 = arith.constant dense<0.000000e+00> : vector<128xf32>
    %385 = vector.multi_reduction <add>, %384, %cst_188 [0] : vector<32x128xf32> to vector<128xf32>
    %386 = vector.shape_cast %385 : vector<128xf32> to vector<1x128xf32>
    %c64_i32_189 = arith.constant 64 : i32
    %387 = tpu.dynamic_rotate %386 by %c64_i32_189 dim 1 : vector<1x128xf32>, i32 -> vector<1x128xf32>
    %388 = arith.addf %386, %387 : vector<1x128xf32>
    %c32_i32_190 = arith.constant 32 : i32
    %389 = tpu.dynamic_rotate %388 by %c32_i32_190 dim 1 : vector<1x128xf32>, i32 -> vector<1x128xf32>
    %390 = arith.addf %388, %389 : vector<1x128xf32>
    %c16_i32_191 = arith.constant 16 : i32
    %391 = tpu.dynamic_rotate %390 by %c16_i32_191 dim 1 : vector<1x128xf32>, i32 -> vector<1x128xf32>
    %392 = arith.addf %390, %391 : vector<1x128xf32>
    %c8_i32_192 = arith.constant 8 : i32
    %393 = tpu.dynamic_rotate %392 by %c8_i32_192 dim 1 : vector<1x128xf32>, i32 -> vector<1x128xf32>
    %394 = arith.addf %392, %393 : vector<1x128xf32>
    %cst_193 = arith.constant 0.001953125 : f32
    %395 = vector.broadcast %cst_193 : f32 to vector<1x128xf32>
    %396 = arith.mulf %394, %395 : vector<1x128xf32>
    %cst_194 = arith.constant 9.99999974E-6 : f32
    %397 = vector.broadcast %cst_194 : f32 to vector<1x128xf32>
    %398 = arith.addf %396, %397 : vector<1x128xf32>
    %399 = math.rsqrt %398 : vector<1x128xf32>
    %400 = vector.extract_strided_slice %289 {offsets = [1, 0], sizes = [1, 128], strides = [1, 1]} : vector<3x128xf32> to vector<1x128xf32>
    %401 = arith.mulf %399, %400 : vector<1x128xf32>
    %402 = vector.broadcast %401 : vector<1x128xf32> to vector<32x128xf32>
    %403 = arith.mulf %383, %402 : vector<32x128xf32>
    %404 = vector.extract_strided_slice %289 {offsets = [2, 0], sizes = [1, 128], strides = [1, 1]} : vector<3x128xf32> to vector<1x128xf32>
    %405 = vector.broadcast %404 : vector<1x128xf32> to vector<32x128xf32>
    %406 = arith.addf %403, %405 : vector<32x128xf32>
    %cst_195 = arith.constant 0.000000e+00 : f32
    %407 = vector.broadcast %cst_195 : f32 to vector<32x128xf32>
    %408 = arith.maximumf %406, %407 : vector<32x128xf32>
    %409 = tpu.concatenate %165, %408 in 1 : vector<32x128xf32>, vector<32x128xf32> -> vector<32x256xf32>
    %410 = arith.truncf %409 : vector<32x256xf32> to vector<32x256xbf16>
    %c0_196 = arith.constant 0 : index
    %c0_197 = arith.constant 0 : index
    %411 = vector.load %arg5[%c0_196, %c0_197] : memref<256x128xbf16, #tpu.memory_space<vmem>>, vector<256x128xbf16>
    %cst_198 = arith.constant dense<0.000000e+00> : vector<32x128xf32>
    %412 = tpu.matmul %410, %411, %cst_198 {dimension_numbers = #tpu.dot_dimension_numbers<[1], [0], [0], [1], [0, 0, 1, 1], [], []>} : vector<32x256xbf16>, vector<256x128xbf16>, vector<32x128xf32> -> vector<32x128xf32>
    %c0_199 = arith.constant 0 : index
    %c0_200 = arith.constant 0 : index
    %413 = vector.load %arg7[%c0_199, %c0_200] : memref<1x128xf32, #tpu.memory_space<vmem>>, vector<1x128xf32>
    %414 = vector.broadcast %413 : vector<1x128xf32> to vector<32x128xf32>
    %415 = arith.addf %412, %414 : vector<32x128xf32>
    %c0_201 = arith.constant 0 : index
    %c0_202 = arith.constant 0 : index
    %416 = vector.load %arg8[%c0_201, %c0_202] : memref<32x128xf32, #tpu.memory_space<vmem>>, vector<32x128xf32>
    tpu.vector_store %arg8[%c0_201, %c0_202], %415 {strides = array<i32>} : memref<32x128xf32, #tpu.memory_space<vmem>>, vector<32x128xf32>,
    return
  }
}

</mosaic_0001>

<llo_original>
// kernel: tile.68
$region0: #{tile.68}
  #allocation0 [shape = 's32[1]{0}', space=sflag, size = 0x4, scoped, tag = 'scoped memory for tile.68']
  %s0 = inlined_call_operand.vmem [shape: f32[8], index: 0, kind: input, shape index: {}]
  %s1 = inlined_call_operand.vmem [shape: f32[16,8], index: 1, kind: output, shape index: {}]
  // Predicated region
  $region2: #{tile.68} parent=0 // pred_check
    _
  $region3: #{tile.68} parent=0 // pred_check_branch
    %3 = sbr.rel (0) target = $region5
  $region4: #{tile.68} parent=0 // pred_region
    _
  $region5: #{tile.68} parent=0 // pred_fallthru
    _
  %v4 = vld [vmem:[%s0] ss:$0 sm:$0xff]
  %5 = vst [vmem:[%s1] sm:$0xff] %v4
  %s6 = scalar_lea.vmem %s1, 8
  %7 = vst [vmem:[%s6] sm:$0xff] %v4

// kernel: tile.77
$region0: #{tile.77}
  %s0 = inlined_call_operand.vmem [shape: f32[16,8], index: 0, kind: input, shape index: {}]
  %s1 = inlined_call_operand.vmem [shape: f32[1,128], index: 1, kind: output, shape index: {}]
  $region1: #{tile.77} parent=0
    #allocation0 [shape = 'u8[4096]{0}', space=vmem, size = 0x1000, scoped, tag = 'scoped mem for output reshape']
    %v2 = vld [vmem:[%s0] sm:$0x1]
    %vm3 = vcmask 64512
    %4 = vst.msk [vmem:[#allocation0] sm:$0x1] %vm3, %v2
    %s5 = scalar_lea.vmem %s0, 15
    %v6 = vld [vmem:[%s5] sm:$0x1]
    %7 = vrot.lane.b32.xlu0 %v6, 120
    %v8 = vpop.permute.xlu0 %7
    %vm9 = vcmask 1048512
    %10 = vst.msk [vmem:[#allocation0] sm:$0x1] %vm9, %v8
    %s11 = scalar_lea.vmem %s0, 14
    %v12 = vld [vmem:[%s11] sm:$0x1]
    %13 = vrot.lane.b32.xlu0 %v12, 112
    %v14 = vpop.permute.xlu0 %13
    %vm15 = vcmask 982912
    %16 = vst.msk [vmem:[#allocation0] sm:$0x1] %vm15, %v14
    %s17 = scalar_lea.vmem %s0, 13
    %v18 = vld [vmem:[%s17] sm:$0x1]
    %19 = vrot.lane.b32.xlu0 %v18, 104
    %v20 = vpop.permute.xlu0 %19
    %vm21 = vcmask 917312
    %22 = vst.msk [vmem:[#allocation0] sm:$0x1] %vm21, %v20
    %s23 = scalar_lea.vmem %s0, 12
    %v24 = vld [vmem:[%s23] sm:$0x1]
    %25 = vrot.lane.b32.xlu0 %v24, 96
    %v26 = vpop.permute.xlu0 %25
    %vm27 = vcmask 851712
    %28 = vst.msk [vmem:[#allocation0] sm:$0x1] %vm27, %v26
    %s29 = scalar_lea.vmem %s0, 11
    %v30 = vld [vmem:[%s29] sm:$0x1]
    %31 = vrot.lane.b32.xlu0 %v30, 88
    %v32 = vpop.permute.xlu0 %31
    %vm33 = vcmask 786112
    %34 = vst.msk [vmem:[#allocation0] sm:$0x1] %vm33, %v32
    %s35 = scalar_lea.vmem %s0, 10
    %v36 = vld [vmem:[%s35] sm:$0x1]
    %37 = vrot.lane.b32.xlu0 %v36, 80
    %v38 = vpop.permute.xlu0 %37
    %vm39 = vcmask 720512
    %40 = vst.msk [vmem:[#allocation0] sm:$0x1] %vm39, %v38
    %s41 = scalar_lea.vmem %s0, 9
    %v42 = vld [vmem:[%s41] sm:$0x1]
    %43 = vrot.lane.b32.xlu0 %v42, 72
    %v44 = vpop.permute.xlu0 %43
    %vm45 = vcmask 654912
    %46 = vst.msk [vmem:[#allocation0] sm:$0x1] %vm45, %v44
    %s47 = scalar_lea.vmem %s0, 8
    %v48 = vld [vmem:[%s47] sm:$0x1]
    %49 = vrot.lane.b32.xlu0 %v48, 64
    %v50 = vpop.permute.xlu0 %49
    %vm51 = vcmask 589312
    %52 = vst.msk [vmem:[#allocation0] sm:$0x1] %vm51, %v50
    %s53 = scalar_lea.vmem %s0, 7
    %v54 = vld [vmem:[%s53] sm:$0x1]
    %55 = vrot.lane.b32.xlu0 %v54, 56
    %v56 = vpop.permute.xlu0 %55
    %vm57 = vcmask 523712
    %58 = vst.msk [vmem:[#allocation0] sm:$0x1] %vm57, %v56
    %s59 = scalar_lea.vmem %s0, 6
    %v60 = vld [vmem:[%s59] sm:$0x1]
    %61 = vrot.lane.b32.xlu0 %v60, 48
    %v62 = vpop.permute.xlu0 %61
    %vm63 = vcmask 458112
    %64 = vst.msk [vmem:[#allocation0] sm:$0x1] %vm63, %v62
    %s65 = scalar_lea.vmem %s0, 5
    %v66 = vld [vmem:[%s65] sm:$0x1]
    %67 = vrot.lane.b32.xlu0 %v66, 40
    %v68 = vpop.permute.xlu0 %67
    %vm69 = vcmask 392512
    %70 = vst.msk [vmem:[#allocation0] sm:$0x1] %vm69, %v68
    %s71 = scalar_lea.vmem %s0, 4
    %v72 = vld [vmem:[%s71] sm:$0x1]
    %73 = vrot.lane.b32.xlu0 %v72, 32
    %v74 = vpop.permute.xlu0 %73
    %vm75 = vcmask 326912
    %76 = vst.msk [vmem:[#allocation0] sm:$0x1] %vm75, %v74
    %s77 = scalar_lea.vmem %s0, 3
    %v78 = vld [vmem:[%s77] sm:$0x1]
    %79 = vrot.lane.b32.xlu0 %v78, 24
    %v80 = vpop.permute.xlu0 %79
    %vm81 = vcmask 261312
    %82 = vst.msk [vmem:[#allocation0] sm:$0x1] %vm81, %v80
    %s83 = scalar_lea.vmem %s0, 2
    %v84 = vld [vmem:[%s83] sm:$0x1]
    %85 = vrot.lane.b32.xlu0 %v84, 16
    %v86 = vpop.permute.xlu0 %85
    %vm87 = vcmask 195712
    %88 = vst.msk [vmem:[#allocation0] sm:$0x1] %vm87, %v86
    %s89 = scalar_lea.vmem %s0, 1
    %v90 = vld [vmem:[%s89] sm:$0x1]
    %91 = vrot.lane.b32.xlu0 %v90, 8
    %v92 = vpop.permute.xlu0 %91
    %vm93 = vcmask 130112
    %94 = vst.msk [vmem:[#allocation0] sm:$0x1] %vm93, %v92
    %s96 = sshllo.u32 0, 1
    %v98 = vld [vmem:[#allocation0] sm:%s96]
    %s99 = sshllo.u32 0, 1
    %100 = vst [vmem:[%s1] sm:%s99] %v98

// kernel: conv_3_1_forward.1
$region0: #{conv_3_1_forward.1}
  #allocation0 [shape = 'u32[]', space=smem, size = 0x4, offset = 0x4, fixed_abs, tag = 'smem constant byte address 0x4 - core index']
  #allocation1 [shape = 'u32[144,128]{1,0:T(1,128)}', space=vmem, size = 0x12000, scoped, tag = 'internal scratch']
  %s0 = inlined_call_operand.vmem [shape: f32[32,64], index: 0, kind: input, shape index: {}]
  %s1 = inlined_call_operand.vmem [shape: bf16[3,64,128], index: 1, kind: input, shape index: {}]
  %s2 = inlined_call_operand.vmem [shape: bf16[3,128,128], index: 2, kind: input, shape index: {}]
  %s3 = inlined_call_operand.vmem [shape: bf16[7,64,128], index: 3, kind: input, shape index: {}]
  %s4 = inlined_call_operand.vmem [shape: bf16[7,128,128], index: 4, kind: input, shape index: {}]
  %s5 = inlined_call_operand.vmem [shape: bf16[256,128], index: 5, kind: input, shape index: {}]
  %s6 = inlined_call_operand.vmem [shape: f32[4,3,128], index: 6, kind: input, shape index: {}]
  %s7 = inlined_call_operand.vmem [shape: f32[1,128], index: 7, kind: input, shape index: {}]
  %s8 = inlined_call_operand.vmem [shape: f32[32,128], index: 8, kind: output, shape index: {}]
  %s9 = sld [smem:[#allocation0]]
  $region42: #{conv_3_1_forward.1} parent=0
    _
  %s11 = ssub.s32 1, %s9
  %s12 = scalar_select 0, %s11, %s9
  // Predicated region
  $region2: #{conv_3_1_forward.1} parent=0 // pred_check
    _
  $region3: #{conv_3_1_forward.1} parent=0 // pred_check_branch
    %14 = sbr.rel (0) target = $region5
  $region4: #{conv_3_1_forward.1} parent=0 // pred_region
    _
  $region5: #{conv_3_1_forward.1} parent=0 // pred_fallthru
    _
  // Predicated region
  $region6: #{conv_3_1_forward.1} parent=0 // pred_check
    _
  $region7: #{conv_3_1_forward.1} parent=0 // pred_check_branch
    %16 = sbr.rel (0) target = $region9
  $region8: #{conv_3_1_forward.1} parent=0 // pred_region
    _
  $region9: #{conv_3_1_forward.1} parent=0 // pred_fallthru
    _
  // Predicated region
  $region10: #{conv_3_1_forward.1} parent=0 // pred_check
    _
  $region11: #{conv_3_1_forward.1} parent=0 // pred_check_branch
    %18 = sbr.rel (0) target = $region13
  $region12: #{conv_3_1_forward.1} parent=0 // pred_region
    _
  $region13: #{conv_3_1_forward.1} parent=0 // pred_fallthru
    _
  // Predicated region
  $region14: #{conv_3_1_forward.1} parent=0 // pred_check
    _
  $region15: #{conv_3_1_forward.1} parent=0 // pred_check_branch
    %20 = sbr.rel (0) target = $region17
  $region16: #{conv_3_1_forward.1} parent=0 // pred_region
    _
  $region17: #{conv_3_1_forward.1} parent=0 // pred_fallthru
    _
  // Predicated region
  $region18: #{conv_3_1_forward.1} parent=0 // pred_check
    _
  $region19: #{conv_3_1_forward.1} parent=0 // pred_check_branch
    %22 = sbr.rel (0) target = $region21
  $region20: #{conv_3_1_forward.1} parent=0 // pred_region
    _
  $region21: #{conv_3_1_forward.1} parent=0 // pred_fallthru
    _
  // Predicated region
  $region22: #{conv_3_1_forward.1} parent=0 // pred_check
    _
  $region23: #{conv_3_1_forward.1} parent=0 // pred_check_branch
    %24 = sbr.rel (0) target = $region25
  $region24: #{conv_3_1_forward.1} parent=0 // pred_region
    _
  $region25: #{conv_3_1_forward.1} parent=0 // pred_fallthru
    _
  // Predicated region
  $region26: #{conv_3_1_forward.1} parent=0 // pred_check
    _
  $region27: #{conv_3_1_forward.1} parent=0 // pred_check_branch
    %26 = sbr.rel (0) target = $region29
  $region28: #{conv_3_1_forward.1} parent=0 // pred_region
    _
  $region29: #{conv_3_1_forward.1} parent=0 // pred_fallthru
    _
  // Predicated region
  $region30: #{conv_3_1_forward.1} parent=0 // pred_check
    _
  $region31: #{conv_3_1_forward.1} parent=0 // pred_check_branch
    %28 = sbr.rel (0) target = $region33
  $region32: #{conv_3_1_forward.1} parent=0 // pred_region
    _
  $region33: #{conv_3_1_forward.1} parent=0 // pred_fallthru
    _
  %v30 = vlaneseq
  %v31 = vshrl.u32 %v30, 7
  %v32 = vadd.s32 %v31, 8
  %v33 = vadd.s32 %v31, 16
  %v34 = vadd.s32 %v31, 24
  %vm35 = vcmp.lt.s32.totalorder %v31, 0
  %v36 = vsub.s32 0, %v31
  %v37 = vsel %vm35, %v36, %v31
  %v38 = vshrl.u32 %v37, 4
  %v39 = vand.u32 %v37, 15
  %v40 = vsub.s32 0, %v39
  %v41 = vsel %vm35, %v40, %v39
  %vm42 = vcmp.lt.s32.totalorder %v32, 0
  %v43 = vsub.s32 0, %v32
  %v44 = vsel %vm42, %v43, %v32
  %v45 = vshrl.u32 %v44, 4
  %v46 = vand.u32 %v44, 15
  %v47 = vsub.s32 0, %v46
  %v48 = vsel %vm42, %v47, %v46
  %vm49 = vcmp.lt.s32.totalorder %v33, 0
  %v50 = vsub.s32 0, %v33
  %v51 = vsel %vm49, %v50, %v33
  %v52 = vshrl.u32 %v51, 4
  %v53 = vand.u32 %v51, 15
  %v54 = vsub.s32 0, %v53
  %v55 = vsel %vm49, %v54, %v53
  %vm56 = vcmp.lt.s32.totalorder %v34, 0
  %v57 = vsub.s32 0, %v34
  %v58 = vsel %vm56, %v57, %v34
  %v59 = vshrl.u32 %v58, 4
  %v60 = vand.u32 %v58, 15
  %v61 = vsub.s32 0, %v60
  %v62 = vsel %vm56, %v61, %v60
  %vm63 = vcmp.ne.s32.totalorder %v41, 0
  %vm64 = vcmp.ne.s32.totalorder %v48, 0
  %vm65 = vcmp.ne.s32.totalorder %v55, 0
  %vm66 = vcmp.ne.s32.totalorder %v62, 0
  %vm67 = vcmp.lt.s32.totalorder %v41, 0
  %vm68 = vcmp.lt.s32.totalorder %v48, 0
  %vm69 = vcmp.lt.s32.totalorder %v55, 0
  %vm70 = vcmp.lt.s32.totalorder %v62, 0
  %vm71 = vmand %vm67, %vm63
  %vm72 = vmand %vm68, %vm64
  %vm73 = vmand %vm69, %vm65
  %vm74 = vmand %vm70, %vm66
  %v75 = vadd.s32 %v41, 16
  %v76 = vadd.s32 %v48, 16
  %v77 = vadd.s32 %v55, 16
  %v78 = vadd.s32 %v62, 16
  %v79 = vsel %vm71, %v75, %v41
  %v80 = vsel %vm72, %v76, %v48
  %v81 = vsel %vm73, %v77, %v55
  %v82 = vsel %vm74, %v78, %v62
  %v83 = vld [vmem:[%s0] sm:$0xff]
  %v84 = vld [vmem:[%s0 + $0x8] sm:$0xff]
  %v85 = vld [vmem:[%s0 + $0x10] sm:$0xff]
  %v86 = vld [vmem:[%s0 + $0x18] sm:$0xff]
  %v87 = vpack.c.bf16 %v84, %v83
  %v88 = vpack.c.bf16 %v86, %v85
  %v89 = vld [vmem:[%s6] sm:$0x7]
  %v90 = vld [vmem:[%s1] sm:$0xf]
  %v91 = vld [vmem:[%s1 + $0x4] sm:$0xf]
  %v92 = vld [vmem:[%s1 + $0x8] sm:$0xf]
  %v93 = vld [vmem:[%s1 + $0xc] sm:$0xf]
  %v94 = vld [vmem:[%s1 + $0x10] sm:$0xf]
  %v95 = vld [vmem:[%s1 + $0x14] sm:$0xf]
  %v96 = vld [vmem:[%s1 + $0x18] sm:$0xf]
  %v97 = vld [vmem:[%s1 + $0x1c] sm:$0xf]
  %v106 = vunpack.c.l.b16 %v90
  %v107 = vunpack.c.l.b16 %v91
  %v108 = vunpack.c.l.b16 %v92
  %v109 = vunpack.c.l.b16 %v93
  %v110 = vunpack.c.l.b16 %v94
  %v111 = vunpack.c.l.b16 %v95
  %v112 = vunpack.c.l.b16 %v96
  %v113 = vunpack.c.l.b16 %v97
  %v114 = vpack.c.b16 %v107, %v106
  %v115 = vpack.c.b16 %v109, %v108
  %v116 = vpack.c.b16 %v111, %v110
  %v117 = vpack.c.b16 %v113, %v112
  %vm122 = vcmask 523264
  %v124 = vsel %vm122, %v87, 0
  %v127 = vsel %vm122, %v88, 0
  %129 = vmatprep.subr.bf16.mxu0 0
  %130 = vmatpush1.bf16.msra.mxu0 %v114
  %131 = vmatprep.subr.bf16.mxu0 0
  %132 = vmatpush1.bf16.msra.mxu0 %v115
  %133 = vmatprep.subr.bf16.mxu0 0
  %134 = vmatpush1.bf16.msra.mxu0 %v116
  %135 = vmatprep.subr.bf16.mxu0 0
  %136 = vmatpush1.bf16.msra.mxu0 %v117
  %137 = vmatprep.subr.bf16.mxu0 0
  %138 = vmatpush1.bf16.msra.mxu0 0
  %139 = vmatprep.subr.bf16.mxu0 0
  %140 = vmatpush1.bf16.msra.mxu0 0
  %141 = vmatprep.subr.bf16.mxu0 0
  %142 = vmatpush1.bf16.msra.mxu0 0
  %143 = vmatprep.subr.bf16.mxu0 0
  %144 = vmatpush1.bf16.msra.mxu0 0
  %145 = vmatprep.subr.bf16.mxu0 0
  %146 = vmatpush1.bf16.msra.mxu0 0
  %147 = vmatprep.subr.bf16.mxu0 0
  %148 = vmatpush1.bf16.msra.mxu0 0
  %149 = vmatprep.subr.bf16.mxu0 0
  %150 = vmatpush1.bf16.msra.mxu0 0
  %151 = vmatprep.subr.bf16.mxu0 0
  %152 = vmatpush1.bf16.msra.mxu0 0
  %153 = vmatprep.subr.bf16.mxu0 0
  %154 = vmatpush1.bf16.msra.mxu0 0
  %155 = vmatprep.subr.bf16.mxu0 0
  %156 = vmatpush1.bf16.msra.mxu0 0
  %157 = vmatprep.subr.bf16.mxu0 0
  %158 = vmatpush1.bf16.msra.mxu0 0
  %159 = vmatprep.subr.bf16.mxu0 0
  %160 = vmatpush1.bf16.msra.mxu0 0
  %161 = vmatprep.mubr.bf16.mxu0 0
  %162 = vmatmul.mubr.bf16.gmra.mrb[0].mxu0 %v124
  %v163 = vpop.f32.mrb[0].mxu0
  %v164 = vadd.f32 0.0, %v163
  %v165 = vpop.f32.mrb[0].mxu0
  %v166 = vpop.f32.mrb[0].mxu0
  %v167 = vadd.f32 0.0, %v166
  %v168 = vpop.f32.mrb[0].mxu0
  %169 = vmatprep.mubr.bf16.mxu0 0
  %170 = vmatmul.mubr.bf16.gmra.mrb[0].mxu0 %v127
  %v171 = vpop.f32.mrb[0].mxu0
  %v172 = vadd.f32 0.0, %v171
  %v173 = vpop.f32.mrb[0].mxu0
  %v174 = vpop.f32.mrb[0].mxu0
  %v175 = vadd.f32 0.0, %v174
  %v176 = vpop.f32.mrb[0].mxu0
  %177 = vdwg.mxu0
  %v178 = vrot.slane %v164, 7
  %v179 = vrot.slane %v167, 7
  %v180 = vrot.slane %v172, 7
  %v181 = vrot.slane %v175, 7
  %vm182 = vcmp.lt.s32.totalorder %v31, 1
  %v183 = vsel %vm182, %v180, %v181
  %v184 = vsel %vm182, %v179, %v180
  %v185 = vsel %vm182, %v178, %v179
  %v186 = vsel %vm182, %v181, %v178
  %vm187 = vcmp.ge.s32.totalorder %v79, 1
  %vm188 = vcmp.ge.s32.totalorder %v80, 1
  %vm189 = vcmp.ge.s32.totalorder %v81, 1
  %vm190 = vcmp.ge.s32.totalorder %v82, 1
  %vm191 = vcmp.lt.s32.totalorder %v79, 17
  %vm192 = vcmp.lt.s32.totalorder %v80, 17
  %vm193 = vcmp.lt.s32.totalorder %v81, 17
  %vm194 = vcmp.lt.s32.totalorder %v82, 17
  %vm195 = vmand %vm187, %vm191
  %vm196 = vmand %vm188, %vm192
  %vm197 = vmand %vm189, %vm193
  %vm198 = vmand %vm190, %vm194
  %v199 = vsel %vm195, %v186, 0.0
  %v200 = vsel %vm196, %v185, 0.0
  %v201 = vsel %vm197, %v184, 0.0
  %v202 = vsel %vm198, %v183, 0.0
  %v203 = vadd.f32 %v199, 0.0
  %v204 = vadd.f32 %v200, 0.0
  %v205 = vadd.f32 %v201, 0.0
  %v206 = vadd.f32 %v202, 0.0
  %s207 = scalar_lea.vmem %s1, 32
  %v208 = vld [vmem:[%s207] sm:$0xf]
  %v209 = vld [vmem:[%s207 + $0x4] sm:$0xf]
  %v210 = vld [vmem:[%s207 + $0x8] sm:$0xf]
  %v211 = vld [vmem:[%s207 + $0xc] sm:$0xf]
  %v212 = vld [vmem:[%s207 + $0x10] sm:$0xf]
  %v213 = vld [vmem:[%s207 + $0x14] sm:$0xf]
  %v214 = vld [vmem:[%s207 + $0x18] sm:$0xf]
  %v215 = vld [vmem:[%s207 + $0x1c] sm:$0xf]
  %v224 = vunpack.c.l.b16 %v208
  %v225 = vunpack.c.l.b16 %v209
  %v226 = vunpack.c.l.b16 %v210
  %v227 = vunpack.c.l.b16 %v211
  %v228 = vunpack.c.l.b16 %v212
  %v229 = vunpack.c.l.b16 %v213
  %v230 = vunpack.c.l.b16 %v214
  %v231 = vunpack.c.l.b16 %v215
  %v232 = vpack.c.b16 %v225, %v224
  %v233 = vpack.c.b16 %v227, %v226
  %v234 = vpack.c.b16 %v229, %v228
  %v235 = vpack.c.b16 %v231, %v230
  %240 = vmatprep.subr.bf16.mxu0 0
  %241 = vmatpush1.bf16.msra.mxu0 %v232
  %242 = vmatprep.subr.bf16.mxu0 0
  %243 = vmatpush1.bf16.msra.mxu0 %v233
  %244 = vmatprep.subr.bf16.mxu0 0
  %245 = vmatpush1.bf16.msra.mxu0 %v234
  %246 = vmatprep.subr.bf16.mxu0 0
  %247 = vmatpush1.bf16.msra.mxu0 %v235
  %248 = vmatprep.subr.bf16.mxu0 0
  %249 = vmatpush1.bf16.msra.mxu0 0
  %250 = vmatprep.subr.bf16.mxu0 0
  %251 = vmatpush1.bf16.msra.mxu0 0
  %252 = vmatprep.subr.bf16.mxu0 0
  %253 = vmatpush1.bf16.msra.mxu0 0
  %254 = vmatprep.subr.bf16.mxu0 0
  %255 = vmatpush1.bf16.msra.mxu0 0
  %256 = vmatprep.subr.bf16.mxu0 0
  %257 = vmatpush1.bf16.msra.mxu0 0
  %258 = vmatprep.subr.bf16.mxu0 0
  %259 = vmatpush1.bf16.msra.mxu0 0
  %260 = vmatprep.subr.bf16.mxu0 0
  %261 = vmatpush1.bf16.msra.mxu0 0
  %262 = vmatprep.subr.bf16.mxu0 0
  %263 = vmatpush1.bf16.msra.mxu0 0
  %264 = vmatprep.subr.bf16.mxu0 0
  %265 = vmatpush1.bf16.msra.mxu0 0
  %266 = vmatprep.subr.bf16.mxu0 0
  %267 = vmatpush1.bf16.msra.mxu0 0
  %268 = vmatprep.subr.bf16.mxu0 0
  %269 = vmatpush1.bf16.msra.mxu0 0
  %270 = vmatprep.subr.bf16.mxu0 0
  %271 = vmatpush1.bf16.msra.mxu0 0
  %272 = vmatprep.mubr.bf16.mxu0 0
  %273 = vmatmul.mubr.bf16.gmra.mrb[0].mxu0 %v124
  %v274 = vpop.f32.mrb[0].mxu0
  %v275 = vadd.f32 0.0, %v274
  %v276 = vpop.f32.mrb[0].mxu0
  %v277 = vpop.f32.mrb[0].mxu0
  %v278 = vadd.f32 0.0, %v277
  %v279 = vpop.f32.mrb[0].mxu0
  %280 = vmatprep.mubr.bf16.mxu0 0
  %281 = vmatmul.mubr.bf16.gmra.mrb[0].mxu0 %v127
  %v282 = vpop.f32.mrb[0].mxu0
  %v283 = vadd.f32 0.0, %v282
  %v284 = vpop.f32.mrb[0].mxu0
  %v285 = vpop.f32.mrb[0].mxu0
  %v286 = vadd.f32 0.0, %v285
  %v287 = vpop.f32.mrb[0].mxu0
  %288 = vdwg.mxu0
  %v289 = vadd.f32 %v203, %v275
  %v290 = vadd.f32 %v204, %v278
  %v291 = vadd.f32 %v205, %v283
  %v292 = vadd.f32 %v206, %v286
  %s293 = scalar_lea.vmem %s1, 64
  %v294 = vld [vmem:[%s293] sm:$0xf]
  %v295 = vld [vmem:[%s293 + $0x4] sm:$0xf]
  %v296 = vld [vmem:[%s293 + $0x8] sm:$0xf]
  %v297 = vld [vmem:[%s293 + $0xc] sm:$0xf]
  %v298 = vld [vmem:[%s293 + $0x10] sm:$0xf]
  %v299 = vld [vmem:[%s293 + $0x14] sm:$0xf]
  %v300 = vld [vmem:[%s293 + $0x18] sm:$0xf]
  %v301 = vld [vmem:[%s293 + $0x1c] sm:$0xf]
  %v310 = vunpack.c.l.b16 %v294
  %v311 = vunpack.c.l.b16 %v295
  %v312 = vunpack.c.l.b16 %v296
  %v313 = vunpack.c.l.b16 %v297
  %v314 = vunpack.c.l.b16 %v298
  %v315 = vunpack.c.l.b16 %v299
  %v316 = vunpack.c.l.b16 %v300
  %v317 = vunpack.c.l.b16 %v301
  %v318 = vpack.c.b16 %v311, %v310
  %v319 = vpack.c.b16 %v313, %v312
  %v320 = vpack.c.b16 %v315, %v314
  %v321 = vpack.c.b16 %v317, %v316
  %326 = vmatprep.subr.bf16.mxu0 0
  %327 = vmatpush1.bf16.msra.mxu0 %v318
  %328 = vmatprep.subr.bf16.mxu0 0
  %329 = vmatpush1.bf16.msra.mxu0 %v319
  %330 = vmatprep.subr.bf16.mxu0 0
  %331 = vmatpush1.bf16.msra.mxu0 %v320
  %332 = vmatprep.subr.bf16.mxu0 0
  %333 = vmatpush1.bf16.msra.mxu0 %v321
  %334 = vmatprep.subr.bf16.mxu0 0
  %335 = vmatpush1.bf16.msra.mxu0 0
  %336 = vmatprep.subr.bf16.mxu0 0
  %337 = vmatpush1.bf16.msra.mxu0 0
  %338 = vmatprep.subr.bf16.mxu0 0
  %339 = vmatpush1.bf16.msra.mxu0 0
  %340 = vmatprep.subr.bf16.mxu0 0
  %341 = vmatpush1.bf16.msra.mxu0 0
  %342 = vmatprep.subr.bf16.mxu0 0
  %343 = vmatpush1.bf16.msra.mxu0 0
  %344 = vmatprep.subr.bf16.mxu0 0
  %345 = vmatpush1.bf16.msra.mxu0 0
  %346 = vmatprep.subr.bf16.mxu0 0
  %347 = vmatpush1.bf16.msra.mxu0 0
  %348 = vmatprep.subr.bf16.mxu0 0
  %349 = vmatpush1.bf16.msra.mxu0 0
  %350 = vmatprep.subr.bf16.mxu0 0
  %351 = vmatpush1.bf16.msra.mxu0 0
  %352 = vmatprep.subr.bf16.mxu0 0
  %353 = vmatpush1.bf16.msra.mxu0 0
  %354 = vmatprep.subr.bf16.mxu0 0
  %355 = vmatpush1.bf16.msra.mxu0 0
  %356 = vmatprep.subr.bf16.mxu0 0
  %357 = vmatpush1.bf16.msra.mxu0 0
  %358 = vmatprep.mubr.bf16.mxu0 0
  %359 = vmatmul.mubr.bf16.gmra.mrb[0].mxu0 %v124
  %v360 = vpop.f32.mrb[0].mxu0
  %v361 = vadd.f32 0.0, %v360
  %v362 = vpop.f32.mrb[0].mxu0
  %v363 = vpop.f32.mrb[0].mxu0
  %v364 = vadd.f32 0.0, %v363
  %v365 = vpop.f32.mrb[0].mxu0
  %366 = vmatprep.mubr.bf16.mxu0 0
  %367 = vmatmul.mubr.bf16.gmra.mrb[0].mxu0 %v127
  %v368 = vpop.f32.mrb[0].mxu0
  %v369 = vadd.f32 0.0, %v368
  %v370 = vpop.f32.mrb[0].mxu0
  %v371 = vpop.f32.mrb[0].mxu0
  %v372 = vadd.f32 0.0, %v371
  %v373 = vpop.f32.mrb[0].mxu0
  %374 = vdwg.mxu0
  %v375 = vrot.slane %v361, 1
  %v376 = vrot.slane %v364, 1
  %v377 = vrot.slane %v369, 1
  %v378 = vrot.slane %v372, 1
  %vm379 = vcmp.lt.s32.totalorder %v31, 7
  %v380 = vsel %vm379, %v377, %v378
  %v381 = vsel %vm379, %v376, %v377
  %v382 = vsel %vm379, %v375, %v376
  %v383 = vsel %vm379, %v378, %v375
  %vm384 = vcmp.ge.s32.totalorder %v79, 4294967295
  %vm385 = vcmp.ge.s32.totalorder %v80, 4294967295
  %vm386 = vcmp.ge.s32.totalorder %v81, 4294967295
  %vm387 = vcmp.ge.s32.totalorder %v82, 4294967295
  %vm388 = vcmp.lt.s32.totalorder %v79, 15
  %vm389 = vcmp.lt.s32.totalorder %v80, 15
  %vm390 = vcmp.lt.s32.totalorder %v81, 15
  %vm391 = vcmp.lt.s32.totalorder %v82, 15
  %vm392 = vmand %vm384, %vm388
  %vm393 = vmand %vm385, %vm389
  %vm394 = vmand %vm386, %vm390
  %vm395 = vmand %vm387, %vm391
  %v396 = vsel %vm392, %v382, 0.0
  %v397 = vsel %vm393, %v381, 0.0
  %v398 = vsel %vm394, %v380, 0.0
  %v399 = vsel %vm395, %v383, 0.0
  %v400 = vadd.f32 %v289, %v396
  %v401 = vadd.f32 %v290, %v397
  %v402 = vadd.f32 %v291, %v398
  %v403 = vadd.f32 %v292, %v399
  %v404 = vlaneseq
  %v405 = vshrl.u32 %v404, 7
  %v406 = vsub.s32 0, %v405
  %v407 = vrot.slane %v89, %v406
  %v408 = vadd.f32 %v400, %v407
  %v409 = vadd.f32 %v401, %v407
  %v410 = vadd.f32 %v402, %v407
  %v411 = vadd.f32 %v403, %v407
  %v412 = vadd.f32 %v408, %v409
  %v413 = vadd.f32 %v412, %v410
  %v414 = vadd.f32 %v413, %v411
  %v415 = vrot.slane %v414, 4
  %v416 = vadd.f32 %v414, %v415
  %v417 = vrot.slane %v416, 2
  %v418 = vadd.f32 %v416, %v417
  %v419 = vrot.slane %v418, 1
  %v420 = vadd.f32 %v418, %v419
  %421 = vrot.lane.b32.xlu0 %v420, 64
  %v422 = vpop.permute.xlu0 %421
  %v423 = vadd.f32 %v420, %v422
  %424 = vrot.lane.b32.xlu0 %v423, 32
  %v425 = vpop.permute.xlu0 %424
  %v426 = vadd.f32 %v423, %v425
  %427 = vrot.lane.b32.xlu0 %v426, 16
  %v428 = vpop.permute.xlu0 %427
  %v429 = vadd.f32 %v426, %v428
  %430 = vrot.lane.b32.xlu0 %v429, 8
  %v431 = vpop.permute.xlu0 %430
  %v432 = vadd.f32 %v429, %v431
  %v433 = vmul.f32 %v432, 0.001953125
  %v434 = vlaneseq
  %v435 = vshrl.u32 %v434, 7
  %v436 = vsub.s32 0, %v435
  %v437 = vrot.slane %v433, %v436
  %v438 = vsub.f32 %v408, %v437
  %v439 = vsub.f32 %v409, %v437
  %v440 = vsub.f32 %v410, %v437
  %v441 = vsub.f32 %v411, %v437
  %v442 = vmul.f32 %v438, %v438
  %v443 = vmul.f32 %v439, %v439
  %v444 = vmul.f32 %v440, %v440
  %v445 = vmul.f32 %v441, %v441
  %v446 = vadd.f32 %v442, %v443
  %v447 = vadd.f32 %v446, %v444
  %v448 = vadd.f32 %v447, %v445
  %v449 = vrot.slane %v448, 4
  %v450 = vadd.f32 %v448, %v449
  %v451 = vrot.slane %v450, 2
  %v452 = vadd.f32 %v450, %v451
  %v453 = vrot.slane %v452, 1
  %v454 = vadd.f32 %v452, %v453
  %455 = vrot.lane.b32.xlu0 %v454, 64
  %v456 = vpop.permute.xlu0 %455
  %v457 = vadd.f32 %v454, %v456
  %458 = vrot.lane.b32.xlu0 %v457, 32
  %v459 = vpop.permute.xlu0 %458
  %v460 = vadd.f32 %v457, %v459
  %461 = vrot.lane.b32.xlu0 %v460, 16
  %v462 = vpop.permute.xlu0 %461
  %v463 = vadd.f32 %v460, %v462
  %464 = vrot.lane.b32.xlu0 %v463, 8
  %v465 = vpop.permute.xlu0 %464
  %v466 = vadd.f32 %v463, %v465
  %v467 = vmul.f32 %v466, 0.001953125
  %v468 = vadd.f32 %v467, 1e-05
  %v469 = vrsqrt.pop %v468
  %v471 = vrot.slane %v89, 1
  %v473 = vmul.f32 %v469, %v471
  %v474 = vlaneseq
  %v475 = vshrl.u32 %v474, 7
  %v476 = vsub.s32 0, %v475
  %v477 = vrot.slane %v473, %v476
  %v478 = vmul.f32 %v438, %v477
  %v479 = vmul.f32 %v439, %v477
  %v480 = vmul.f32 %v440, %v477
  %v481 = vmul.f32 %v441, %v477
  %v482 = vlaneseq
  %v483 = vshrl.u32 %v482, 7
  %v484 = vsub.s32 2, %v483
  %v485 = vrot.slane %v89, %v484
  %v486 = vadd.f32 %v478, %v485
  %v487 = vadd.f32 %v479, %v485
  %v488 = vadd.f32 %v480, %v485
  %v489 = vadd.f32 %v481, %v485
  %v490 = vmax.f32 %v486, 0.0
  %v491 = vmax.f32 %v487, 0.0
  %v492 = vmax.f32 %v488, 0.0
  %v493 = vmax.f32 %v489, 0.0
  %v494 = vpack.c.bf16 %v491, %v490
  %v495 = vpack.c.bf16 %v493, %v492
  %s496 = scalar_lea.vmem %s6, 4
  %v497 = vld [vmem:[%s496] sm:$0x7]
  %v498 = vld [vmem:[%s2] sm:$0xf]
  %v499 = vld [vmem:[%s2 + $0x4] sm:$0xf]
  %v500 = vld [vmem:[%s2 + $0x8] sm:$0xf]
  %v501 = vld [vmem:[%s2 + $0xc] sm:$0xf]
  %v502 = vld [vmem:[%s2 + $0x10] sm:$0xf]
  %v503 = vld [vmem:[%s2 + $0x14] sm:$0xf]
  %v504 = vld [vmem:[%s2 + $0x18] sm:$0xf]
  %v505 = vld [vmem:[%s2 + $0x1c] sm:$0xf]
  %v506 = vld [vmem:[%s2 + $0x20] sm:$0xf]
  %v507 = vld [vmem:[%s2 + $0x24] sm:$0xf]
  %v508 = vld [vmem:[%s2 + $0x28] sm:$0xf]
  %v509 = vld [vmem:[%s2 + $0x2c] sm:$0xf]
  %v510 = vld [vmem:[%s2 + $0x30] sm:$0xf]
  %v511 = vld [vmem:[%s2 + $0x34] sm:$0xf]
  %v512 = vld [vmem:[%s2 + $0x38] sm:$0xf]
  %v513 = vld [vmem:[%s2 + $0x3c] sm:$0xf]
  %v530 = vunpack.c.l.b16 %v498
  %v531 = vunpack.c.l.b16 %v499
  %v532 = vunpack.c.l.b16 %v500
  %v533 = vunpack.c.l.b16 %v501
  %v534 = vunpack.c.l.b16 %v502
  %v535 = vunpack.c.l.b16 %v503
  %v536 = vunpack.c.l.b16 %v504
  %v537 = vunpack.c.l.b16 %v505
  %v538 = vunpack.c.l.b16 %v506
  %v539 = vunpack.c.l.b16 %v507
  %v540 = vunpack.c.l.b16 %v508
  %v541 = vunpack.c.l.b16 %v509
  %v542 = vunpack.c.l.b16 %v510
  %v543 = vunpack.c.l.b16 %v511
  %v544 = vunpack.c.l.b16 %v512
  %v545 = vunpack.c.l.b16 %v513
  %v546 = vpack.c.b16 %v531, %v530
  %v547 = vpack.c.b16 %v533, %v532
  %v548 = vpack.c.b16 %v535, %v534
  %v549 = vpack.c.b16 %v537, %v536
  %v550 = vpack.c.b16 %v539, %v538
  %v551 = vpack.c.b16 %v541, %v540
  %v552 = vpack.c.b16 %v543, %v542
  %v553 = vpack.c.b16 %v545, %v544
  %562 = vmatprep.subr.bf16.mxu0 0
  %563 = vmatpush1.bf16.msra.mxu0 %v546
  %564 = vmatprep.subr.bf16.mxu0 0
  %565 = vmatpush1.bf16.msra.mxu0 %v547
  %566 = vmatprep.subr.bf16.mxu0 0
  %567 = vmatpush1.bf16.msra.mxu0 %v548
  %568 = vmatprep.subr.bf16.mxu0 0
  %569 = vmatpush1.bf16.msra.mxu0 %v549
  %570 = vmatprep.subr.bf16.mxu0 0
  %571 = vmatpush1.bf16.msra.mxu0 %v550
  %572 = vmatprep.subr.bf16.mxu0 0
  %573 = vmatpush1.bf16.msra.mxu0 %v551
  %574 = vmatprep.subr.bf16.mxu0 0
  %575 = vmatpush1.bf16.msra.mxu0 %v552
  %576 = vmatprep.subr.bf16.mxu0 0
  %577 = vmatpush1.bf16.msra.mxu0 %v553
  %578 = vmatprep.subr.bf16.mxu0 0
  %579 = vmatpush1.bf16.msra.mxu0 0
  %580 = vmatprep.subr.bf16.mxu0 0
  %581 = vmatpush1.bf16.msra.mxu0 0
  %582 = vmatprep.subr.bf16.mxu0 0
  %583 = vmatpush1.bf16.msra.mxu0 0
  %584 = vmatprep.subr.bf16.mxu0 0
  %585 = vmatpush1.bf16.msra.mxu0 0
  %586 = vmatprep.subr.bf16.mxu0 0
  %587 = vmatpush1.bf16.msra.mxu0 0
  %588 = vmatprep.subr.bf16.mxu0 0
  %589 = vmatpush1.bf16.msra.mxu0 0
  %590 = vmatprep.subr.bf16.mxu0 0
  %591 = vmatpush1.bf16.msra.mxu0 0
  %592 = vmatprep.subr.bf16.mxu0 0
  %593 = vmatpush1.bf16.msra.mxu0 0
  %594 = vmatprep.mubr.bf16.mxu0 0
  %595 = vmatmul.mubr.bf16.gmra.mrb[0].mxu0 %v494
  %v596 = vpop.f32.mrb[0].mxu0
  %v597 = vadd.f32 0.0, %v596
  %v598 = vpop.f32.mrb[0].mxu0
  %v599 = vpop.f32.mrb[0].mxu0
  %v600 = vadd.f32 0.0, %v599
  %v601 = vpop.f32.mrb[0].mxu0
  %602 = vmatprep.mubr.bf16.mxu0 0
  %603 = vmatmul.mubr.bf16.gmra.mrb[0].mxu0 %v495
  %v604 = vpop.f32.mrb[0].mxu0
  %v605 = vadd.f32 0.0, %v604
  %v606 = vpop.f32.mrb[0].mxu0
  %v607 = vpop.f32.mrb[0].mxu0
  %v608 = vadd.f32 0.0, %v607
  %v609 = vpop.f32.mrb[0].mxu0
  %610 = vdwg.mxu0
  %v611 = vrot.slane %v597, 7
  %v612 = vrot.slane %v600, 7
  %v613 = vrot.slane %v605, 7
  %v614 = vrot.slane %v608, 7
  %v615 = vsel %vm182, %v613, %v614
  %v616 = vsel %vm182, %v612, %v613
  %v617 = vsel %vm182, %v611, %v612
  %v618 = vsel %vm182, %v614, %v611
  %v619 = vsel %vm195, %v618, 0.0
  %v620 = vsel %vm196, %v617, 0.0
  %v621 = vsel %vm197, %v616, 0.0
  %v622 = vsel %vm198, %v615, 0.0
  %v623 = vadd.f32 %v619, 0.0
  %v624 = vadd.f32 %v620, 0.0
  %v625 = vadd.f32 %v621, 0.0
  %v626 = vadd.f32 %v622, 0.0
  %s627 = scalar_lea.vmem %s2, 64
  %v628 = vld [vmem:[%s627] sm:$0xf]
  %v629 = vld [vmem:[%s627 + $0x4] sm:$0xf]
  %v630 = vld [vmem:[%s627 + $0x8] sm:$0xf]
  %v631 = vld [vmem:[%s627 + $0xc] sm:$0xf]
  %v632 = vld [vmem:[%s627 + $0x10] sm:$0xf]
  %v633 = vld [vmem:[%s627 + $0x14] sm:$0xf]
  %v634 = vld [vmem:[%s627 + $0x18] sm:$0xf]
  %v635 = vld [vmem:[%s627 + $0x1c] sm:$0xf]
  %v636 = vld [vmem:[%s627 + $0x20] sm:$0xf]
  %v637 = vld [vmem:[%s627 + $0x24] sm:$0xf]
  %v638 = vld [vmem:[%s627 + $0x28] sm:$0xf]
  %v639 = vld [vmem:[%s627 + $0x2c] sm:$0xf]
  %v640 = vld [vmem:[%s627 + $0x30] sm:$0xf]
  %v641 = vld [vmem:[%s627 + $0x34] sm:$0xf]
  %v642 = vld [vmem:[%s627 + $0x38] sm:$0xf]
  %v643 = vld [vmem:[%s627 + $0x3c] sm:$0xf]
  %v660 = vunpack.c.l.b16 %v628
  %v661 = vunpack.c.l.b16 %v629
  %v662 = vunpack.c.l.b16 %v630
  %v663 = vunpack.c.l.b16 %v631
  %v664 = vunpack.c.l.b16 %v632
  %v665 = vunpack.c.l.b16 %v633
  %v666 = vunpack.c.l.b16 %v634
  %v667 = vunpack.c.l.b16 %v635
  %v668 = vunpack.c.l.b16 %v636
  %v669 = vunpack.c.l.b16 %v637
  %v670 = vunpack.c.l.b16 %v638
  %v671 = vunpack.c.l.b16 %v639
  %v672 = vunpack.c.l.b16 %v640
  %v673 = vunpack.c.l.b16 %v641
  %v674 = vunpack.c.l.b16 %v642
  %v675 = vunpack.c.l.b16 %v643
  %v676 = vpack.c.b16 %v661, %v660
  %v677 = vpack.c.b16 %v663, %v662
  %v678 = vpack.c.b16 %v665, %v664
  %v679 = vpack.c.b16 %v667, %v666
  %v680 = vpack.c.b16 %v669, %v668
  %v681 = vpack.c.b16 %v671, %v670
  %v682 = vpack.c.b16 %v673, %v672
  %v683 = vpack.c.b16 %v675, %v674
  %692 = vmatprep.subr.bf16.mxu0 0
  %693 = vmatpush1.bf16.msra.mxu0 %v676
  %694 = vmatprep.subr.bf16.mxu0 0
  %695 = vmatpush1.bf16.msra.mxu0 %v677
  %696 = vmatprep.subr.bf16.mxu0 0
  %697 = vmatpush1.bf16.msra.mxu0 %v678
  %698 = vmatprep.subr.bf16.mxu0 0
  %699 = vmatpush1.bf16.msra.mxu0 %v679
  %700 = vmatprep.subr.bf16.mxu0 0
  %701 = vmatpush1.bf16.msra.mxu0 %v680
  %702 = vmatprep.subr.bf16.mxu0 0
  %703 = vmatpush1.bf16.msra.mxu0 %v681
  %704 = vmatprep.subr.bf16.mxu0 0
  %705 = vmatpush1.bf16.msra.mxu0 %v682
  %706 = vmatprep.subr.bf16.mxu0 0
  %707 = vmatpush1.bf16.msra.mxu0 %v683
  %708 = vmatprep.subr.bf16.mxu0 0
  %709 = vmatpush1.bf16.msra.mxu0 0
  %710 = vmatprep.subr.bf16.mxu0 0
  %711 = vmatpush1.bf16.msra.mxu0 0
  %712 = vmatprep.subr.bf16.mxu0 0
  %713 = vmatpush1.bf16.msra.mxu0 0
  %714 = vmatprep.subr.bf16.mxu0 0
  %715 = vmatpush1.bf16.msra.mxu0 0
  %716 = vmatprep.subr.bf16.mxu0 0
  %717 = vmatpush1.bf16.msra.mxu0 0
  %718 = vmatprep.subr.bf16.mxu0 0
  %719 = vmatpush1.bf16.msra.mxu0 0
  %720 = vmatprep.subr.bf16.mxu0 0
  %721 = vmatpush1.bf16.msra.mxu0 0
  %722 = vmatprep.subr.bf16.mxu0 0
  %723 = vmatpush1.bf16.msra.mxu0 0
  %724 = vmatprep.mubr.bf16.mxu0 0
  %725 = vmatmul.mubr.bf16.gmra.mrb[0].mxu0 %v494
  %v726 = vpop.f32.mrb[0].mxu0
  %v727 = vadd.f32 0.0, %v726
  %v728 = vpop.f32.mrb[0].mxu0
  %v729 = vpop.f32.mrb[0].mxu0
  %v730 = vadd.f32 0.0, %v729
  %v731 = vpop.f32.mrb[0].mxu0
  %732 = vmatprep.mubr.bf16.mxu0 0
  %733 = vmatmul.mubr.bf16.gmra.mrb[0].mxu0 %v495
  %v734 = vpop.f32.mrb[0].mxu0
  %v735 = vadd.f32 0.0, %v734
  %v736 = vpop.f32.mrb[0].mxu0
  %v737 = vpop.f32.mrb[0].mxu0
  %v738 = vadd.f32 0.0, %v737
  %v739 = vpop.f32.mrb[0].mxu0
  %740 = vdwg.mxu0
  %v741 = vadd.f32 %v623, %v727
  %v742 = vadd.f32 %v624, %v730
  %v743 = vadd.f32 %v625, %v735
  %v744 = vadd.f32 %v626, %v738
  %s745 = scalar_lea.vmem %s2, 128
  %v746 = vld [vmem:[%s745] sm:$0xf]
  %v747 = vld [vmem:[%s745 + $0x4] sm:$0xf]
  %v748 = vld [vmem:[%s745 + $0x8] sm:$0xf]
  %v749 = vld [vmem:[%s745 + $0xc] sm:$0xf]
  %v750 = vld [vmem:[%s745 + $0x10] sm:$0xf]
  %v751 = vld [vmem:[%s745 + $0x14] sm:$0xf]
  %v752 = vld [vmem:[%s745 + $0x18] sm:$0xf]
  %v753 = vld [vmem:[%s745 + $0x1c] sm:$0xf]
  %v754 = vld [vmem:[%s745 + $0x20] sm:$0xf]
  %v755 = vld [vmem:[%s745 + $0x24] sm:$0xf]
  %v756 = vld [vmem:[%s745 + $0x28] sm:$0xf]
  %v757 = vld [vmem:[%s745 + $0x2c] sm:$0xf]
  %v758 = vld [vmem:[%s745 + $0x30] sm:$0xf]
  %v759 = vld [vmem:[%s745 + $0x34] sm:$0xf]
  %v760 = vld [vmem:[%s745 + $0x38] sm:$0xf]
  %v761 = vld [vmem:[%s745 + $0x3c] sm:$0xf]
  %v778 = vunpack.c.l.b16 %v746
  %v779 = vunpack.c.l.b16 %v747
  %v780 = vunpack.c.l.b16 %v748
  %v781 = vunpack.c.l.b16 %v749
  %v782 = vunpack.c.l.b16 %v750
  %v783 = vunpack.c.l.b16 %v751
  %v784 = vunpack.c.l.b16 %v752
  %v785 = vunpack.c.l.b16 %v753
  %v786 = vunpack.c.l.b16 %v754
  %v787 = vunpack.c.l.b16 %v755
  %v788 = vunpack.c.l.b16 %v756
  %v789 = vunpack.c.l.b16 %v757
  %v790 = vunpack.c.l.b16 %v758
  %v791 = vunpack.c.l.b16 %v759
  %v792 = vunpack.c.l.b16 %v760
  %v793 = vunpack.c.l.b16 %v761
  %v794 = vpack.c.b16 %v779, %v778
  %v795 = vpack.c.b16 %v781, %v780
  %v796 = vpack.c.b16 %v783, %v782
  %v797 = vpack.c.b16 %v785, %v784
  %v798 = vpack.c.b16 %v787, %v786
  %v799 = vpack.c.b16 %v789, %v788
  %v800 = vpack.c.b16 %v791, %v790
  %v801 = vpack.c.b16 %v793, %v792
  %810 = vmatprep.subr.bf16.mxu0 0
  %811 = vmatpush1.bf16.msra.mxu0 %v794
  %812 = vmatprep.subr.bf16.mxu0 0
  %813 = vmatpush1.bf16.msra.mxu0 %v795
  %814 = vmatprep.subr.bf16.mxu0 0
  %815 = vmatpush1.bf16.msra.mxu0 %v796
  %816 = vmatprep.subr.bf16.mxu0 0
  %817 = vmatpush1.bf16.msra.mxu0 %v797
  %818 = vmatprep.subr.bf16.mxu0 0
  %819 = vmatpush1.bf16.msra.mxu0 %v798
  %820 = vmatprep.subr.bf16.mxu0 0
  %821 = vmatpush1.bf16.msra.mxu0 %v799
  %822 = vmatprep.subr.bf16.mxu0 0
  %823 = vmatpush1.bf16.msra.mxu0 %v800
  %824 = vmatprep.subr.bf16.mxu0 0
  %825 = vmatpush1.bf16.msra.mxu0 %v801
  %826 = vmatprep.subr.bf16.mxu0 0
  %827 = vmatpush1.bf16.msra.mxu0 0
  %828 = vmatprep.subr.bf16.mxu0 0
  %829 = vmatpush1.bf16.msra.mxu0 0
  %830 = vmatprep.subr.bf16.mxu0 0
  %831 = vmatpush1.bf16.msra.mxu0 0
  %832 = vmatprep.subr.bf16.mxu0 0
  %833 = vmatpush1.bf16.msra.mxu0 0
  %834 = vmatprep.subr.bf16.mxu0 0
  %835 = vmatpush1.bf16.msra.mxu0 0
  %836 = vmatprep.subr.bf16.mxu0 0
  %837 = vmatpush1.bf16.msra.mxu0 0
  %838 = vmatprep.subr.bf16.mxu0 0
  %839 = vmatpush1.bf16.msra.mxu0 0
  %840 = vmatprep.subr.bf16.mxu0 0
  %841 = vmatpush1.bf16.msra.mxu0 0
  %842 = vmatprep.mubr.bf16.mxu0 0
  %843 = vmatmul.mubr.bf16.gmra.mrb[0].mxu0 %v494
  %v844 = vpop.f32.mrb[0].mxu0
  %v845 = vadd.f32 0.0, %v844
  %v846 = vpop.f32.mrb[0].mxu0
  %v847 = vpop.f32.mrb[0].mxu0
  %v848 = vadd.f32 0.0, %v847
  %v849 = vpop.f32.mrb[0].mxu0
  %850 = vmatprep.mubr.bf16.mxu0 0
  %851 = vmatmul.mubr.bf16.gmra.mrb[0].mxu0 %v495
  %v852 = vpop.f32.mrb[0].mxu0
  %v853 = vadd.f32 0.0, %v852
  %v854 = vpop.f32.mrb[0].mxu0
  %v855 = vpop.f32.mrb[0].mxu0
  %v856 = vadd.f32 0.0, %v855
  %v857 = vpop.f32.mrb[0].mxu0
  %858 = vdwg.mxu0
  %v859 = vrot.slane %v845, 1
  %v860 = vrot.slane %v848, 1
  %v861 = vrot.slane %v853, 1
  %v862 = vrot.slane %v856, 1
  %v863 = vsel %vm379, %v861, %v862
  %v864 = vsel %vm379, %v860, %v861
  %v865 = vsel %vm379, %v859, %v860
  %v866 = vsel %vm379, %v862, %v859
  %v867 = vsel %vm392, %v865, 0.0
  %v868 = vsel %vm393, %v864, 0.0
  %v869 = vsel %vm394, %v863, 0.0
  %v870 = vsel %vm395, %v866, 0.0
  %v871 = vadd.f32 %v741, %v867
  %v872 = vadd.f32 %v742, %v868
  %v873 = vadd.f32 %v743, %v869
  %v874 = vadd.f32 %v744, %v870
  %v875 = vlaneseq
  %v876 = vshrl.u32 %v875, 7
  %v877 = vsub.s32 0, %v876
  %v878 = vrot.slane %v497, %v877
  %v879 = vadd.f32 %v871, %v878
  %v880 = vadd.f32 %v872, %v878
  %v881 = vadd.f32 %v873, %v878
  %v882 = vadd.f32 %v874, %v878
  %v883 = vadd.f32 %v879, %v880
  %v884 = vadd.f32 %v883, %v881
  %v885 = vadd.f32 %v884, %v882
  %v886 = vrot.slane %v885, 4
  %v887 = vadd.f32 %v885, %v886
  %v888 = vrot.slane %v887, 2
  %v889 = vadd.f32 %v887, %v888
  %v890 = vrot.slane %v889, 1
  %v891 = vadd.f32 %v889, %v890
  %892 = vrot.lane.b32.xlu0 %v891, 64
  %v893 = vpop.permute.xlu0 %892
  %v894 = vadd.f32 %v891, %v893
  %895 = vrot.lane.b32.xlu0 %v894, 32
  %v896 = vpop.permute.xlu0 %895
  %v897 = vadd.f32 %v894, %v896
  %898 = vrot.lane.b32.xlu0 %v897, 16
  %v899 = vpop.permute.xlu0 %898
  %v900 = vadd.f32 %v897, %v899
  %901 = vrot.lane.b32.xlu0 %v900, 8
  %v902 = vpop.permute.xlu0 %901
  %v903 = vadd.f32 %v900, %v902
  %v904 = vmul.f32 %v903, 0.001953125
  %v905 = vlaneseq
  %v906 = vshrl.u32 %v905, 7
  %v907 = vsub.s32 0, %v906
  %v908 = vrot.slane %v904, %v907
  %v909 = vsub.f32 %v879, %v908
  %v910 = vsub.f32 %v880, %v908
  %v911 = vsub.f32 %v881, %v908
  %v912 = vsub.f32 %v882, %v908
  %v913 = vmul.f32 %v909, %v909
  %v914 = vmul.f32 %v910, %v910
  %v915 = vmul.f32 %v911, %v911
  %v916 = vmul.f32 %v912, %v912
  %v917 = vadd.f32 %v913, %v914
  %v918 = vadd.f32 %v917, %v915
  %v919 = vadd.f32 %v918, %v916
  %v920 = vrot.slane %v919, 4
  %v921 = vadd.f32 %v919, %v920
  %v922 = vrot.slane %v921, 2
  %v923 = vadd.f32 %v921, %v922
  %v924 = vrot.slane %v923, 1
  %v925 = vadd.f32 %v923, %v924
  %926 = vrot.lane.b32.xlu0 %v925, 64
  %v927 = vpop.permute.xlu0 %926
  %v928 = vadd.f32 %v925, %v927
  %929 = vrot.lane.b32.xlu0 %v928, 32
  %v930 = vpop.permute.xlu0 %929
  %v931 = vadd.f32 %v928, %v930
  %932 = vrot.lane.b32.xlu0 %v931, 16
  %v933 = vpop.permute.xlu0 %932
  %v934 = vadd.f32 %v931, %v933
  %935 = vrot.lane.b32.xlu0 %v934, 8
  %v936 = vpop.permute.xlu0 %935
  %v937 = vadd.f32 %v934, %v936
  %v938 = vmul.f32 %v937, 0.001953125
  %v939 = vadd.f32 %v938, 1e-05
  %v940 = vrsqrt.pop %v939
  %v942 = vrot.slane %v497, 1
  %v944 = vmul.f32 %v940, %v942
  %v945 = vlaneseq
  %v946 = vshrl.u32 %v945, 7
  %v947 = vsub.s32 0, %v946
  %v948 = vrot.slane %v944, %v947
  %v949 = vmul.f32 %v909, %v948
  %v950 = vmul.f32 %v910, %v948
  %v951 = vmul.f32 %v911, %v948
  %v952 = vmul.f32 %v912, %v948
  %v953 = vlaneseq
  %v954 = vshrl.u32 %v953, 7
  %v955 = vsub.s32 2, %v954
  %v956 = vrot.slane %v497, %v955
  %v957 = vadd.f32 %v949, %v956
  %v958 = vadd.f32 %v950, %v956
  %v959 = vadd.f32 %v951, %v956
  %v960 = vadd.f32 %v952, %v956
  %v961 = vmax.f32 %v957, 0.0
  %v962 = vmax.f32 %v958, 0.0
  %v963 = vmax.f32 %v959, 0.0
  %v964 = vmax.f32 %v960, 0.0
  %s965 = scalar_lea.vmem %s6, 8
  %v966 = vld [vmem:[%s965] sm:$0x7]
  %v967 = vld [vmem:[%s3] sm:$0xf]
  %v968 = vld [vmem:[%s3 + $0x4] sm:$0xf]
  %v969 = vld [vmem:[%s3 + $0x8] sm:$0xf]
  %v970 = vld [vmem:[%s3 + $0xc] sm:$0xf]
  %v971 = vld [vmem:[%s3 + $0x10] sm:$0xf]
  %v972 = vld [vmem:[%s3 + $0x14] sm:$0xf]
  %v973 = vld [vmem:[%s3 + $0x18] sm:$0xf]
  %v974 = vld [vmem:[%s3 + $0x1c] sm:$0xf]
  %v983 = vunpack.c.l.b16 %v967
  %v984 = vunpack.c.l.b16 %v968
  %v985 = vunpack.c.l.b16 %v969
  %v986 = vunpack.c.l.b16 %v970
  %v987 = vunpack.c.l.b16 %v971
  %v988 = vunpack.c.l.b16 %v972
  %v989 = vunpack.c.l.b16 %v973
  %v990 = vunpack.c.l.b16 %v974
  %v991 = vpack.c.b16 %v984, %v983
  %v992 = vpack.c.b16 %v986, %v985
  %v993 = vpack.c.b16 %v988, %v987
  %v994 = vpack.c.b16 %v990, %v989
  %999 = vmatprep.subr.bf16.mxu0 0
  %1000 = vmatpush1.bf16.msra.mxu0 %v991
  %1001 = vmatprep.subr.bf16.mxu0 0
  %1002 = vmatpush1.bf16.msra.mxu0 %v992
  %1003 = vmatprep.subr.bf16.mxu0 0
  %1004 = vmatpush1.bf16.msra.mxu0 %v993
  %1005 = vmatprep.subr.bf16.mxu0 0
  %1006 = vmatpush1.bf16.msra.mxu0 %v994
  %1007 = vmatprep.subr.bf16.mxu0 0
  %1008 = vmatpush1.bf16.msra.mxu0 0
  %1009 = vmatprep.subr.bf16.mxu0 0
  %1010 = vmatpush1.bf16.msra.mxu0 0
  %1011 = vmatprep.subr.bf16.mxu0 0
  %1012 = vmatpush1.bf16.msra.mxu0 0
  %1013 = vmatprep.subr.bf16.mxu0 0
  %1014 = vmatpush1.bf16.msra.mxu0 0
  %1015 = vmatprep.subr.bf16.mxu0 0
  %1016 = vmatpush1.bf16.msra.mxu0 0
  %1017 = vmatprep.subr.bf16.mxu0 0
  %1018 = vmatpush1.bf16.msra.mxu0 0
  %1019 = vmatprep.subr.bf16.mxu0 0
  %1020 = vmatpush1.bf16.msra.mxu0 0
  %1021 = vmatprep.subr.bf16.mxu0 0
  %1022 = vmatpush1.bf16.msra.mxu0 0
  %1023 = vmatprep.subr.bf16.mxu0 0
  %1024 = vmatpush1.bf16.msra.mxu0 0
  %1025 = vmatprep.subr.bf16.mxu0 0
  %1026 = vmatpush1.bf16.msra.mxu0 0
  %1027 = vmatprep.subr.bf16.mxu0 0
  %1028 = vmatpush1.bf16.msra.mxu0 0
  %1029 = vmatprep.subr.bf16.mxu0 0
  %1030 = vmatpush1.bf16.msra.mxu0 0
  %1031 = vmatprep.mubr.bf16.mxu0 0
  %1032 = vmatmul.mubr.bf16.gmra.mrb[0].mxu0 %v124
  %v1033 = vpop.f32.mrb[0].mxu0
  %v1034 = vadd.f32 0.0, %v1033
  %v1035 = vpop.f32.mrb[0].mxu0
  %v1036 = vpop.f32.mrb[0].mxu0
  %v1037 = vadd.f32 0.0, %v1036
  %v1038 = vpop.f32.mrb[0].mxu0
  %1039 = vmatprep.mubr.bf16.mxu0 0
  %1040 = vmatmul.mubr.bf16.gmra.mrb[0].mxu0 %v127
  %v1041 = vpop.f32.mrb[0].mxu0
  %v1042 = vadd.f32 0.0, %v1041
  %v1043 = vpop.f32.mrb[0].mxu0
  %v1044 = vpop.f32.mrb[0].mxu0
  %v1045 = vadd.f32 0.0, %v1044
  %v1046 = vpop.f32.mrb[0].mxu0
  %1047 = vdwg.mxu0
  %v1048 = vrot.slane %v1034, 5
  %v1049 = vrot.slane %v1037, 5
  %v1050 = vrot.slane %v1042, 5
  %v1051 = vrot.slane %v1045, 5
  %vm1052 = vcmp.lt.s32.totalorder %v31, 3
  %v1053 = vsel %vm1052, %v1050, %v1051
  %v1054 = vsel %vm1052, %v1049, %v1050
  %v1055 = vsel %vm1052, %v1048, %v1049
  %v1056 = vsel %vm1052, %v1051, %v1048
  %vm1057 = vcmp.ge.s32.totalorder %v79, 3
  %vm1058 = vcmp.ge.s32.totalorder %v80, 3
  %vm1059 = vcmp.ge.s32.totalorder %v81, 3
  %vm1060 = vcmp.ge.s32.totalorder %v82, 3
  %vm1061 = vcmp.lt.s32.totalorder %v79, 19
  %vm1062 = vcmp.lt.s32.totalorder %v80, 19
  %vm1063 = vcmp.lt.s32.totalorder %v81, 19
  %vm1064 = vcmp.lt.s32.totalorder %v82, 19
  %vm1065 = vmand %vm1057, %vm1061
  %vm1066 = vmand %vm1058, %vm1062
  %vm1067 = vmand %vm1059, %vm1063
  %vm1068 = vmand %vm1060, %vm1064
  %v1069 = vsel %vm1065, %v1056, 0.0
  %v1070 = vsel %vm1066, %v1055, 0.0
  %v1071 = vsel %vm1067, %v1054, 0.0
  %v1072 = vsel %vm1068, %v1053, 0.0
  %v1073 = vadd.f32 %v1069, 0.0
  %v1074 = vadd.f32 %v1070, 0.0
  %v1075 = vadd.f32 %v1071, 0.0
  %v1076 = vadd.f32 %v1072, 0.0
  %s1077 = scalar_lea.vmem %s3, 32
  %v1078 = vld [vmem:[%s1077] sm:$0xf]
  %v1079 = vld [vmem:[%s1077 + $0x4] sm:$0xf]
  %v1080 = vld [vmem:[%s1077 + $0x8] sm:$0xf]
  %v1081 = vld [vmem:[%s1077 + $0xc] sm:$0xf]
  %v1082 = vld [vmem:[%s1077 + $0x10] sm:$0xf]
  %v1083 = vld [vmem:[%s1077 + $0x14] sm:$0xf]
  %v1084 = vld [vmem:[%s1077 + $0x18] sm:$0xf]
  %v1085 = vld [vmem:[%s1077 + $0x1c] sm:$0xf]
  %v1094 = vunpack.c.l.b16 %v1078
  %v1095 = vunpack.c.l.b16 %v1079
  %v1096 = vunpack.c.l.b16 %v1080
  %v1097 = vunpack.c.l.b16 %v1081
  %v1098 = vunpack.c.l.b16 %v1082
  %v1099 = vunpack.c.l.b16 %v1083
  %v1100 = vunpack.c.l.b16 %v1084
  %v1101 = vunpack.c.l.b16 %v1085
  %v1102 = vpack.c.b16 %v1095, %v1094
  %v1103 = vpack.c.b16 %v1097, %v1096
  %v1104 = vpack.c.b16 %v1099, %v1098
  %v1105 = vpack.c.b16 %v1101, %v1100
  %1110 = vmatprep.subr.bf16.mxu0 0
  %1111 = vmatpush1.bf16.msra.mxu0 %v1102
  %1112 = vmatprep.subr.bf16.mxu0 0
  %1113 = vmatpush1.bf16.msra.mxu0 %v1103
  %1114 = vmatprep.subr.bf16.mxu0 0
  %1115 = vmatpush1.bf16.msra.mxu0 %v1104
  %1116 = vmatprep.subr.bf16.mxu0 0
  %1117 = vmatpush1.bf16.msra.mxu0 %v1105
  %1118 = vmatprep.subr.bf16.mxu0 0
  %1119 = vmatpush1.bf16.msra.mxu0 0
  %1120 = vmatprep.subr.bf16.mxu0 0
  %1121 = vmatpush1.bf16.msra.mxu0 0
  %1122 = vmatprep.subr.bf16.mxu0 0
  %1123 = vmatpush1.bf16.msra.mxu0 0
  %1124 = vmatprep.subr.bf16.mxu0 0
  %1125 = vmatpush1.bf16.msra.mxu0 0
  %1126 = vmatprep.subr.bf16.mxu0 0
  %1127 = vmatpush1.bf16.msra.mxu0 0
  %1128 = vmatprep.subr.bf16.mxu0 0
  %1129 = vmatpush1.bf16.msra.mxu0 0
  %1130 = vmatprep.subr.bf16.mxu0 0
  %1131 = vmatpush1.bf16.msra.mxu0 0
  %1132 = vmatprep.subr.bf16.mxu0 0
  %1133 = vmatpush1.bf16.msra.mxu0 0
  %1134 = vmatprep.subr.bf16.mxu0 0
  %1135 = vmatpush1.bf16.msra.mxu0 0
  %1136 = vmatprep.subr.bf16.mxu0 0
  %1137 = vmatpush1.bf16.msra.mxu0 0
  %1138 = vmatprep.subr.bf16.mxu0 0
  %1139 = vmatpush1.bf16.msra.mxu0 0
  %1140 = vmatprep.subr.bf16.mxu0 0
  %1141 = vmatpush1.bf16.msra.mxu0 0
  %1142 = vmatprep.mubr.bf16.mxu0 0
  %1143 = vmatmul.mubr.bf16.gmra.mrb[0].mxu0 %v124
  %v1144 = vpop.f32.mrb[0].mxu0
  %v1145 = vadd.f32 0.0, %v1144
  %v1146 = vpop.f32.mrb[0].mxu0
  %v1147 = vpop.f32.mrb[0].mxu0
  %v1148 = vadd.f32 0.0, %v1147
  %v1149 = vpop.f32.mrb[0].mxu0
  %1150 = vmatprep.mubr.bf16.mxu0 0
  %1151 = vmatmul.mubr.bf16.gmra.mrb[0].mxu0 %v127
  %v1152 = vpop.f32.mrb[0].mxu0
  %v1153 = vadd.f32 0.0, %v1152
  %v1154 = vpop.f32.mrb[0].mxu0
  %v1155 = vpop.f32.mrb[0].mxu0
  %v1156 = vadd.f32 0.0, %v1155
  %v1157 = vpop.f32.mrb[0].mxu0
  %1158 = vdwg.mxu0
  %v1159 = vrot.slane %v1145, 6
  %v1160 = vrot.slane %v1148, 6
  %v1161 = vrot.slane %v1153, 6
  %v1162 = vrot.slane %v1156, 6
  %vm1163 = vcmp.lt.s32.totalorder %v31, 2
  %v1164 = vsel %vm1163, %v1161, %v1162
  %v1165 = vsel %vm1163, %v1160, %v1161
  %v1166 = vsel %vm1163, %v1159, %v1160
  %v1167 = vsel %vm1163, %v1162, %v1159
  %vm1168 = vcmp.ge.s32.totalorder %v79, 2
  %vm1169 = vcmp.ge.s32.totalorder %v80, 2
  %vm1170 = vcmp.ge.s32.totalorder %v81, 2
  %vm1171 = vcmp.ge.s32.totalorder %v82, 2
  %vm1172 = vcmp.lt.s32.totalorder %v79, 18
  %vm1173 = vcmp.lt.s32.totalorder %v80, 18
  %vm1174 = vcmp.lt.s32.totalorder %v81, 18
  %vm1175 = vcmp.lt.s32.totalorder %v82, 18
  %vm1176 = vmand %vm1168, %vm1172
  %vm1177 = vmand %vm1169, %vm1173
  %vm1178 = vmand %vm1170, %vm1174
  %vm1179 = vmand %vm1171, %vm1175
  %v1180 = vsel %vm1176, %v1167, 0.0
  %v1181 = vsel %vm1177, %v1166, 0.0
  %v1182 = vsel %vm1178, %v1165, 0.0
  %v1183 = vsel %vm1179, %v1164, 0.0
  %v1184 = vadd.f32 %v1073, %v1180
  %v1185 = vadd.f32 %v1074, %v1181
  %v1186 = vadd.f32 %v1075, %v1182
  %v1187 = vadd.f32 %v1076, %v1183
  %s1188 = scalar_lea.vmem %s3, 64
  %v1189 = vld [vmem:[%s1188] sm:$0xf]
  %v1190 = vld [vmem:[%s1188 + $0x4] sm:$0xf]
  %v1191 = vld [vmem:[%s1188 + $0x8] sm:$0xf]
  %v1192 = vld [vmem:[%s1188 + $0xc] sm:$0xf]
  %v1193 = vld [vmem:[%s1188 + $0x10] sm:$0xf]
  %v1194 = vld [vmem:[%s1188 + $0x14] sm:$0xf]
  %v1195 = vld [vmem:[%s1188 + $0x18] sm:$0xf]
  %v1196 = vld [vmem:[%s1188 + $0x1c] sm:$0xf]
  %v1205 = vunpack.c.l.b16 %v1189
  %v1206 = vunpack.c.l.b16 %v1190
  %v1207 = vunpack.c.l.b16 %v1191
  %v1208 = vunpack.c.l.b16 %v1192
  %v1209 = vunpack.c.l.b16 %v1193
  %v1210 = vunpack.c.l.b16 %v1194
  %v1211 = vunpack.c.l.b16 %v1195
  %v1212 = vunpack.c.l.b16 %v1196
  %v1213 = vpack.c.b16 %v1206, %v1205
  %v1214 = vpack.c.b16 %v1208, %v1207
  %v1215 = vpack.c.b16 %v1210, %v1209
  %v1216 = vpack.c.b16 %v1212, %v1211
  %1221 = vmatprep.subr.bf16.mxu0 0
  %1222 = vmatpush1.bf16.msra.mxu0 %v1213
  %1223 = vmatprep.subr.bf16.mxu0 0
  %1224 = vmatpush1.bf16.msra.mxu0 %v1214
  %1225 = vmatprep.subr.bf16.mxu0 0
  %1226 = vmatpush1.bf16.msra.mxu0 %v1215
  %1227 = vmatprep.subr.bf16.mxu0 0
  %1228 = vmatpush1.bf16.msra.mxu0 %v1216
  %1229 = vmatprep.subr.bf16.mxu0 0
  %1230 = vmatpush1.bf16.msra.mxu0 0
  %1231 = vmatprep.subr.bf16.mxu0 0
  %1232 = vmatpush1.bf16.msra.mxu0 0
  %1233 = vmatprep.subr.bf16.mxu0 0
  %1234 = vmatpush1.bf16.msra.mxu0 0
  %1235 = vmatprep.subr.bf16.mxu0 0
  %1236 = vmatpush1.bf16.msra.mxu0 0
  %1237 = vmatprep.subr.bf16.mxu0 0
  %1238 = vmatpush1.bf16.msra.mxu0 0
  %1239 = vmatprep.subr.bf16.mxu0 0
  %1240 = vmatpush1.bf16.msra.mxu0 0
  %1241 = vmatprep.subr.bf16.mxu0 0
  %1242 = vmatpush1.bf16.msra.mxu0 0
  %1243 = vmatprep.subr.bf16.mxu0 0
  %1244 = vmatpush1.bf16.msra.mxu0 0
  %1245 = vmatprep.subr.bf16.mxu0 0
  %1246 = vmatpush1.bf16.msra.mxu0 0
  %1247 = vmatprep.subr.bf16.mxu0 0
  %1248 = vmatpush1.bf16.msra.mxu0 0
  %1249 = vmatprep.subr.bf16.mxu0 0
  %1250 = vmatpush1.bf16.msra.mxu0 0
  %1251 = vmatprep.subr.bf16.mxu0 0
  %1252 = vmatpush1.bf16.msra.mxu0 0
  %1253 = vmatprep.mubr.bf16.mxu0 0
  %1254 = vmatmul.mubr.bf16.gmra.mrb[0].mxu0 %v124
  %v1255 = vpop.f32.mrb[0].mxu0
  %v1256 = vadd.f32 0.0, %v1255
  %v1257 = vpop.f32.mrb[0].mxu0
  %v1258 = vpop.f32.mrb[0].mxu0
  %v1259 = vadd.f32 0.0, %v1258
  %v1260 = vpop.f32.mrb[0].mxu0
  %1261 = vmatprep.mubr.bf16.mxu0 0
  %1262 = vmatmul.mubr.bf16.gmra.mrb[0].mxu0 %v127
  %v1263 = vpop.f32.mrb[0].mxu0
  %v1264 = vadd.f32 0.0, %v1263
  %v1265 = vpop.f32.mrb[0].mxu0
  %v1266 = vpop.f32.mrb[0].mxu0
  %v1267 = vadd.f32 0.0, %v1266
  %v1268 = vpop.f32.mrb[0].mxu0
  %1269 = vdwg.mxu0
  %v1270 = vrot.slane %v1256, 7
  %v1271 = vrot.slane %v1259, 7
  %v1272 = vrot.slane %v1264, 7
  %v1273 = vrot.slane %v1267, 7
  %v1274 = vsel %vm182, %v1272, %v1273
  %v1275 = vsel %vm182, %v1271, %v1272
  %v1276 = vsel %vm182, %v1270, %v1271
  %v1277 = vsel %vm182, %v1273, %v1270
  %v1278 = vsel %vm195, %v1277, 0.0
  %v1279 = vsel %vm196, %v1276, 0.0
  %v1280 = vsel %vm197, %v1275, 0.0
  %v1281 = vsel %vm198, %v1274, 0.0
  %v1282 = vadd.f32 %v1184, %v1278
  %v1283 = vadd.f32 %v1185, %v1279
  %v1284 = vadd.f32 %v1186, %v1280
  %v1285 = vadd.f32 %v1187, %v1281
  %s1286 = scalar_lea.vmem %s3, 96
  %v1287 = vld [vmem:[%s1286] sm:$0xf]
  %v1288 = vld [vmem:[%s1286 + $0x4] sm:$0xf]
  %v1289 = vld [vmem:[%s1286 + $0x8] sm:$0xf]
  %v1290 = vld [vmem:[%s1286 + $0xc] sm:$0xf]
  %v1291 = vld [vmem:[%s1286 + $0x10] sm:$0xf]
  %v1292 = vld [vmem:[%s1286 + $0x14] sm:$0xf]
  %v1293 = vld [vmem:[%s1286 + $0x18] sm:$0xf]
  %v1294 = vld [vmem:[%s1286 + $0x1c] sm:$0xf]
  %v1303 = vunpack.c.l.b16 %v1287
  %v1304 = vunpack.c.l.b16 %v1288
  %v1305 = vunpack.c.l.b16 %v1289
  %v1306 = vunpack.c.l.b16 %v1290
  %v1307 = vunpack.c.l.b16 %v1291
  %v1308 = vunpack.c.l.b16 %v1292
  %v1309 = vunpack.c.l.b16 %v1293
  %v1310 = vunpack.c.l.b16 %v1294
  %v1311 = vpack.c.b16 %v1304, %v1303
  %v1312 = vpack.c.b16 %v1306, %v1305
  %v1313 = vpack.c.b16 %v1308, %v1307
  %v1314 = vpack.c.b16 %v1310, %v1309
  %1319 = vmatprep.subr.bf16.mxu0 0
  %1320 = vmatpush1.bf16.msra.mxu0 %v1311
  %1321 = vmatprep.subr.bf16.mxu0 0
  %1322 = vmatpush1.bf16.msra.mxu0 %v1312
  %1323 = vmatprep.subr.bf16.mxu0 0
  %1324 = vmatpush1.bf16.msra.mxu0 %v1313
  %1325 = vmatprep.subr.bf16.mxu0 0
  %1326 = vmatpush1.bf16.msra.mxu0 %v1314
  %1327 = vmatprep.subr.bf16.mxu0 0
  %1328 = vmatpush1.bf16.msra.mxu0 0
  %1329 = vmatprep.subr.bf16.mxu0 0
  %1330 = vmatpush1.bf16.msra.mxu0 0
  %1331 = vmatprep.subr.bf16.mxu0 0
  %1332 = vmatpush1.bf16.msra.mxu0 0
  %1333 = vmatprep.subr.bf16.mxu0 0
  %1334 = vmatpush1.bf16.msra.mxu0 0
  %1335 = vmatprep.subr.bf16.mxu0 0
  %1336 = vmatpush1.bf16.msra.mxu0 0
  %1337 = vmatprep.subr.bf16.mxu0 0
  %1338 = vmatpush1.bf16.msra.mxu0 0
  %1339 = vmatprep.subr.bf16.mxu0 0
  %1340 = vmatpush1.bf16.msra.mxu0 0
  %1341 = vmatprep.subr.bf16.mxu0 0
  %1342 = vmatpush1.bf16.msra.mxu0 0
  %1343 = vmatprep.subr.bf16.mxu0 0
  %1344 = vmatpush1.bf16.msra.mxu0 0
  %1345 = vmatprep.subr.bf16.mxu0 0
  %1346 = vmatpush1.bf16.msra.mxu0 0
  %1347 = vmatprep.subr.bf16.mxu0 0
  %1348 = vmatpush1.bf16.msra.mxu0 0
  %1349 = vmatprep.subr.bf16.mxu0 0
  %1350 = vmatpush1.bf16.msra.mxu0 0
  %1351 = vmatprep.mubr.bf16.mxu0 0
  %1352 = vmatmul.mubr.bf16.gmra.mrb[0].mxu0 %v124
  %v1353 = vpop.f32.mrb[0].mxu0
  %v1354 = vadd.f32 0.0, %v1353
  %v1355 = vpop.f32.mrb[0].mxu0
  %v1356 = vpop.f32.mrb[0].mxu0
  %v1357 = vadd.f32 0.0, %v1356
  %v1358 = vpop.f32.mrb[0].mxu0
  %1359 = vmatprep.mubr.bf16.mxu0 0
  %1360 = vmatmul.mubr.bf16.gmra.mrb[0].mxu0 %v127
  %v1361 = vpop.f32.mrb[0].mxu0
  %v1362 = vadd.f32 0.0, %v1361
  %v1363 = vpop.f32.mrb[0].mxu0
  %v1364 = vpop.f32.mrb[0].mxu0
  %v1365 = vadd.f32 0.0, %v1364
  %v1366 = vpop.f32.mrb[0].mxu0
  %1367 = vdwg.mxu0
  %v1368 = vadd.f32 %v1282, %v1354
  %v1369 = vadd.f32 %v1283, %v1357
  %v1370 = vadd.f32 %v1284, %v1362
  %v1371 = vadd.f32 %v1285, %v1365
  %s1372 = scalar_lea.vmem %s3, 128
  %v1373 = vld [vmem:[%s1372] sm:$0xf]
  %v1374 = vld [vmem:[%s1372 + $0x4] sm:$0xf]
  %v1375 = vld [vmem:[%s1372 + $0x8] sm:$0xf]
  %v1376 = vld [vmem:[%s1372 + $0xc] sm:$0xf]
  %v1377 = vld [vmem:[%s1372 + $0x10] sm:$0xf]
  %v1378 = vld [vmem:[%s1372 + $0x14] sm:$0xf]
  %v1379 = vld [vmem:[%s1372 + $0x18] sm:$0xf]
  %v1380 = vld [vmem:[%s1372 + $0x1c] sm:$0xf]
  %v1389 = vunpack.c.l.b16 %v1373
  %v1390 = vunpack.c.l.b16 %v1374
  %v1391 = vunpack.c.l.b16 %v1375
  %v1392 = vunpack.c.l.b16 %v1376
  %v1393 = vunpack.c.l.b16 %v1377
  %v1394 = vunpack.c.l.b16 %v1378
  %v1395 = vunpack.c.l.b16 %v1379
  %v1396 = vunpack.c.l.b16 %v1380
  %v1397 = vpack.c.b16 %v1390, %v1389
  %v1398 = vpack.c.b16 %v1392, %v1391
  %v1399 = vpack.c.b16 %v1394, %v1393
  %v1400 = vpack.c.b16 %v1396, %v1395
  %1405 = vmatprep.subr.bf16.mxu0 0
  %1406 = vmatpush1.bf16.msra.mxu0 %v1397
  %1407 = vmatprep.subr.bf16.mxu0 0
  %1408 = vmatpush1.bf16.msra.mxu0 %v1398
  %1409 = vmatprep.subr.bf16.mxu0 0
  %1410 = vmatpush1.bf16.msra.mxu0 %v1399
  %1411 = vmatprep.subr.bf16.mxu0 0
  %1412 = vmatpush1.bf16.msra.mxu0 %v1400
  %1413 = vmatprep.subr.bf16.mxu0 0
  %1414 = vmatpush1.bf16.msra.mxu0 0
  %1415 = vmatprep.subr.bf16.mxu0 0
  %1416 = vmatpush1.bf16.msra.mxu0 0
  %1417 = vmatprep.subr.bf16.mxu0 0
  %1418 = vmatpush1.bf16.msra.mxu0 0
  %1419 = vmatprep.subr.bf16.mxu0 0
  %1420 = vmatpush1.bf16.msra.mxu0 0
  %1421 = vmatprep.subr.bf16.mxu0 0
  %1422 = vmatpush1.bf16.msra.mxu0 0
  %1423 = vmatprep.subr.bf16.mxu0 0
  %1424 = vmatpush1.bf16.msra.mxu0 0
  %1425 = vmatprep.subr.bf16.mxu0 0
  %1426 = vmatpush1.bf16.msra.mxu0 0
  %1427 = vmatprep.subr.bf16.mxu0 0
  %1428 = vmatpush1.bf16.msra.mxu0 0
  %1429 = vmatprep.subr.bf16.mxu0 0
  %1430 = vmatpush1.bf16.msra.mxu0 0
  %1431 = vmatprep.subr.bf16.mxu0 0
  %1432 = vmatpush1.bf16.msra.mxu0 0
  %1433 = vmatprep.subr.bf16.mxu0 0
  %1434 = vmatpush1.bf16.msra.mxu0 0
  %1435 = vmatprep.subr.bf16.mxu0 0
  %1436 = vmatpush1.bf16.msra.mxu0 0
  %1437 = vmatprep.mubr.bf16.mxu0 0
  %1438 = vmatmul.mubr.bf16.gmra.mrb[0].mxu0 %v124
  %v1439 = vpop.f32.mrb[0].mxu0
  %v1440 = vadd.f32 0.0, %v1439
  %v1441 = vpop.f32.mrb[0].mxu0
  %v1442 = vpop.f32.mrb[0].mxu0
  %v1443 = vadd.f32 0.0, %v1442
  %v1444 = vpop.f32.mrb[0].mxu0
  %1445 = vmatprep.mubr.bf16.mxu0 0
  %1446 = vmatmul.mubr.bf16.gmra.mrb[0].mxu0 %v127
  %v1447 = vpop.f32.mrb[0].mxu0
  %v1448 = vadd.f32 0.0, %v1447
  %v1449 = vpop.f32.mrb[0].mxu0
  %v1450 = vpop.f32.mrb[0].mxu0
  %v1451 = vadd.f32 0.0, %v1450
  %v1452 = vpop.f32.mrb[0].mxu0
  %1453 = vdwg.mxu0
  %v1454 = vrot.slane %v1440, 1
  %v1455 = vrot.slane %v1443, 1
  %v1456 = vrot.slane %v1448, 1
  %v1457 = vrot.slane %v1451, 1
  %v1458 = vsel %vm379, %v1456, %v1457
  %v1459 = vsel %vm379, %v1455, %v1456
  %v1460 = vsel %vm379, %v1454, %v1455
  %v1461 = vsel %vm379, %v1457, %v1454
  %v1462 = vsel %vm392, %v1460, 0.0
  %v1463 = vsel %vm393, %v1459, 0.0
  %v1464 = vsel %vm394, %v1458, 0.0
  %v1465 = vsel %vm395, %v1461, 0.0
  %v1466 = vadd.f32 %v1368, %v1462
  %v1467 = vadd.f32 %v1369, %v1463
  %v1468 = vadd.f32 %v1370, %v1464
  %v1469 = vadd.f32 %v1371, %v1465
  %s1470 = scalar_lea.vmem %s3, 160
  %v1471 = vld [vmem:[%s1470] sm:$0xf]
  %v1472 = vld [vmem:[%s1470 + $0x4] sm:$0xf]
  %v1473 = vld [vmem:[%s1470 + $0x8] sm:$0xf]
  %v1474 = vld [vmem:[%s1470 + $0xc] sm:$0xf]
  %v1475 = vld [vmem:[%s1470 + $0x10] sm:$0xf]
  %v1476 = vld [vmem:[%s1470 + $0x14] sm:$0xf]
  %v1477 = vld [vmem:[%s1470 + $0x18] sm:$0xf]
  %v1478 = vld [vmem:[%s1470 + $0x1c] sm:$0xf]
  %v1487 = vunpack.c.l.b16 %v1471
  %v1488 = vunpack.c.l.b16 %v1472
  %v1489 = vunpack.c.l.b16 %v1473
  %v1490 = vunpack.c.l.b16 %v1474
  %v1491 = vunpack.c.l.b16 %v1475
  %v1492 = vunpack.c.l.b16 %v1476
  %v1493 = vunpack.c.l.b16 %v1477
  %v1494 = vunpack.c.l.b16 %v1478
  %v1495 = vpack.c.b16 %v1488, %v1487
  %v1496 = vpack.c.b16 %v1490, %v1489
  %v1497 = vpack.c.b16 %v1492, %v1491
  %v1498 = vpack.c.b16 %v1494, %v1493
  %1503 = vmatprep.subr.bf16.mxu0 0
  %1504 = vmatpush1.bf16.msra.mxu0 %v1495
  %1505 = vmatprep.subr.bf16.mxu0 0
  %1506 = vmatpush1.bf16.msra.mxu0 %v1496
  %1507 = vmatprep.subr.bf16.mxu0 0
  %1508 = vmatpush1.bf16.msra.mxu0 %v1497
  %1509 = vmatprep.subr.bf16.mxu0 0
  %1510 = vmatpush1.bf16.msra.mxu0 %v1498
  %1511 = vmatprep.subr.bf16.mxu0 0
  %1512 = vmatpush1.bf16.msra.mxu0 0
  %1513 = vmatprep.subr.bf16.mxu0 0
  %1514 = vmatpush1.bf16.msra.mxu0 0
  %1515 = vmatprep.subr.bf16.mxu0 0
  %1516 = vmatpush1.bf16.msra.mxu0 0
  %1517 = vmatprep.subr.bf16.mxu0 0
  %1518 = vmatpush1.bf16.msra.mxu0 0
  %1519 = vmatprep.subr.bf16.mxu0 0
  %1520 = vmatpush1.bf16.msra.mxu0 0
  %1521 = vmatprep.subr.bf16.mxu0 0
  %1522 = vmatpush1.bf16.msra.mxu0 0
  %1523 = vmatprep.subr.bf16.mxu0 0
  %1524 = vmatpush1.bf16.msra.mxu0 0
  %1525 = vmatprep.subr.bf16.mxu0 0
  %1526 = vmatpush1.bf16.msra.mxu0 0
  %1527 = vmatprep.subr.bf16.mxu0 0
  %1528 = vmatpush1.bf16.msra.mxu0 0
  %1529 = vmatprep.subr.bf16.mxu0 0
  %1530 = vmatpush1.bf16.msra.mxu0 0
  %1531 = vmatprep.subr.bf16.mxu0 0
  %1532 = vmatpush1.bf16.msra.mxu0 0
  %1533 = vmatprep.subr.bf16.mxu0 0
  %1534 = vmatpush1.bf16.msra.mxu0 0
  %1535 = vmatprep.mubr.bf16.mxu0 0
  %1536 = vmatmul.mubr.bf16.gmra.mrb[0].mxu0 %v124
  %v1537 = vpop.f32.mrb[0].mxu0
  %v1538 = vadd.f32 0.0, %v1537
  %v1539 = vpop.f32.mrb[0].mxu0
  %v1540 = vpop.f32.mrb[0].mxu0
  %v1541 = vadd.f32 0.0, %v1540
  %v1542 = vpop.f32.mrb[0].mxu0
  %1543 = vmatprep.mubr.bf16.mxu0 0
  %1544 = vmatmul.mubr.bf16.gmra.mrb[0].mxu0 %v127
  %v1545 = vpop.f32.mrb[0].mxu0
  %v1546 = vadd.f32 0.0, %v1545
  %v1547 = vpop.f32.mrb[0].mxu0
  %v1548 = vpop.f32.mrb[0].mxu0
  %v1549 = vadd.f32 0.0, %v1548
  %v1550 = vpop.f32.mrb[0].mxu0
  %1551 = vdwg.mxu0
  %v1552 = vrot.slane %v1538, 2
  %v1553 = vrot.slane %v1541, 2
  %v1554 = vrot.slane %v1546, 2
  %v1555 = vrot.slane %v1549, 2
  %vm1556 = vcmp.lt.s32.totalorder %v31, 6
  %v1557 = vsel %vm1556, %v1554, %v1555
  %v1558 = vsel %vm1556, %v1553, %v1554
  %v1559 = vsel %vm1556, %v1552, %v1553
  %v1560 = vsel %vm1556, %v1555, %v1552
  %vm1561 = vcmp.ge.s32.totalorder %v79, 4294967294
  %vm1562 = vcmp.ge.s32.totalorder %v80, 4294967294
  %vm1563 = vcmp.ge.s32.totalorder %v81, 4294967294
  %vm1564 = vcmp.ge.s32.totalorder %v82, 4294967294
  %vm1565 = vcmp.lt.s32.totalorder %v79, 14
  %vm1566 = vcmp.lt.s32.totalorder %v80, 14
  %vm1567 = vcmp.lt.s32.totalorder %v81, 14
  %vm1568 = vcmp.lt.s32.totalorder %v82, 14
  %vm1569 = vmand %vm1561, %vm1565
  %vm1570 = vmand %vm1562, %vm1566
  %vm1571 = vmand %vm1563, %vm1567
  %vm1572 = vmand %vm1564, %vm1568
  %v1573 = vsel %vm1569, %v1559, 0.0
  %v1574 = vsel %vm1570, %v1558, 0.0
  %v1575 = vsel %vm1571, %v1557, 0.0
  %v1576 = vsel %vm1572, %v1560, 0.0
  %v1577 = vadd.f32 %v1466, %v1573
  %v1578 = vadd.f32 %v1467, %v1574
  %v1579 = vadd.f32 %v1468, %v1575
  %v1580 = vadd.f32 %v1469, %v1576
  %s1581 = scalar_lea.vmem %s3, 192
  %v1582 = vld [vmem:[%s1581] sm:$0xf]
  %v1583 = vld [vmem:[%s1581 + $0x4] sm:$0xf]
  %v1584 = vld [vmem:[%s1581 + $0x8] sm:$0xf]
  %v1585 = vld [vmem:[%s1581 + $0xc] sm:$0xf]
  %v1586 = vld [vmem:[%s1581 + $0x10] sm:$0xf]
  %v1587 = vld [vmem:[%s1581 + $0x14] sm:$0xf]
  %v1588 = vld [vmem:[%s1581 + $0x18] sm:$0xf]
  %v1589 = vld [vmem:[%s1581 + $0x1c] sm:$0xf]
  %v1598 = vunpack.c.l.b16 %v1582
  %v1599 = vunpack.c.l.b16 %v1583
  %v1600 = vunpack.c.l.b16 %v1584
  %v1601 = vunpack.c.l.b16 %v1585
  %v1602 = vunpack.c.l.b16 %v1586
  %v1603 = vunpack.c.l.b16 %v1587
  %v1604 = vunpack.c.l.b16 %v1588
  %v1605 = vunpack.c.l.b16 %v1589
  %v1606 = vpack.c.b16 %v1599, %v1598
  %v1607 = vpack.c.b16 %v1601, %v1600
  %v1608 = vpack.c.b16 %v1603, %v1602
  %v1609 = vpack.c.b16 %v1605, %v1604
  %1614 = vmatprep.subr.bf16.mxu0 0
  %1615 = vmatpush1.bf16.msra.mxu0 %v1606
  %1616 = vmatprep.subr.bf16.mxu0 0
  %1617 = vmatpush1.bf16.msra.mxu0 %v1607
  %1618 = vmatprep.subr.bf16.mxu0 0
  %1619 = vmatpush1.bf16.msra.mxu0 %v1608
  %1620 = vmatprep.subr.bf16.mxu0 0
  %1621 = vmatpush1.bf16.msra.mxu0 %v1609
  %1622 = vmatprep.subr.bf16.mxu0 0
  %1623 = vmatpush1.bf16.msra.mxu0 0
  %1624 = vmatprep.subr.bf16.mxu0 0
  %1625 = vmatpush1.bf16.msra.mxu0 0
  %1626 = vmatprep.subr.bf16.mxu0 0
  %1627 = vmatpush1.bf16.msra.mxu0 0
  %1628 = vmatprep.subr.bf16.mxu0 0
  %1629 = vmatpush1.bf16.msra.mxu0 0
  %1630 = vmatprep.subr.bf16.mxu0 0
  %1631 = vmatpush1.bf16.msra.mxu0 0
  %1632 = vmatprep.subr.bf16.mxu0 0
  %1633 = vmatpush1.bf16.msra.mxu0 0
  %1634 = vmatprep.subr.bf16.mxu0 0
  %1635 = vmatpush1.bf16.msra.mxu0 0
  %1636 = vmatprep.subr.bf16.mxu0 0
  %1637 = vmatpush1.bf16.msra.mxu0 0
  %1638 = vmatprep.subr.bf16.mxu0 0
  %1639 = vmatpush1.bf16.msra.mxu0 0
  %1640 = vmatprep.subr.bf16.mxu0 0
  %1641 = vmatpush1.bf16.msra.mxu0 0
  %1642 = vmatprep.subr.bf16.mxu0 0
  %1643 = vmatpush1.bf16.msra.mxu0 0
  %1644 = vmatprep.subr.bf16.mxu0 0
  %1645 = vmatpush1.bf16.msra.mxu0 0
  %1646 = vmatprep.mubr.bf16.mxu0 0
  %1647 = vmatmul.mubr.bf16.gmra.mrb[0].mxu0 %v124
  %v1648 = vpop.f32.mrb[0].mxu0
  %v1649 = vadd.f32 0.0, %v1648
  %v1650 = vpop.f32.mrb[0].mxu0
  %v1651 = vpop.f32.mrb[0].mxu0
  %v1652 = vadd.f32 0.0, %v1651
  %v1653 = vpop.f32.mrb[0].mxu0
  %1654 = vmatprep.mubr.bf16.mxu0 0
  %1655 = vmatmul.mubr.bf16.gmra.mrb[0].mxu0 %v127
  %v1656 = vpop.f32.mrb[0].mxu0
  %v1657 = vadd.f32 0.0, %v1656
  %v1658 = vpop.f32.mrb[0].mxu0
  %v1659 = vpop.f32.mrb[0].mxu0
  %v1660 = vadd.f32 0.0, %v1659
  %v1661 = vpop.f32.mrb[0].mxu0
  %1662 = vdwg.mxu0
  %v1663 = vrot.slane %v1649, 3
  %v1664 = vrot.slane %v1652, 3
  %v1665 = vrot.slane %v1657, 3
  %v1666 = vrot.slane %v1660, 3
  %vm1667 = vcmp.lt.s32.totalorder %v31, 5
  %v1668 = vsel %vm1667, %v1665, %v1666
  %v1669 = vsel %vm1667, %v1664, %v1665
  %v1670 = vsel %vm1667, %v1663, %v1664
  %v1671 = vsel %vm1667, %v1666, %v1663
  %vm1672 = vcmp.ge.s32.totalorder %v79, 4294967293
  %vm1673 = vcmp.ge.s32.totalorder %v80, 4294967293
  %vm1674 = vcmp.ge.s32.totalorder %v81, 4294967293
  %vm1675 = vcmp.ge.s32.totalorder %v82, 4294967293
  %vm1676 = vcmp.lt.s32.totalorder %v79, 13
  %vm1677 = vcmp.lt.s32.totalorder %v80, 13
  %vm1678 = vcmp.lt.s32.totalorder %v81, 13
  %vm1679 = vcmp.lt.s32.totalorder %v82, 13
  %vm1680 = vmand %vm1672, %vm1676
  %vm1681 = vmand %vm1673, %vm1677
  %vm1682 = vmand %vm1674, %vm1678
  %vm1683 = vmand %vm1675, %vm1679
  %v1684 = vsel %vm1680, %v1670, 0.0
  %v1685 = vsel %vm1681, %v1669, 0.0
  %v1686 = vsel %vm1682, %v1668, 0.0
  %v1687 = vsel %vm1683, %v1671, 0.0
  %v1688 = vadd.f32 %v1577, %v1684
  %v1689 = vadd.f32 %v1578, %v1685
  %v1690 = vadd.f32 %v1579, %v1686
  %v1691 = vadd.f32 %v1580, %v1687
  %v1692 = vlaneseq
  %v1693 = vshrl.u32 %v1692, 7
  %v1694 = vsub.s32 0, %v1693
  %v1695 = vrot.slane %v966, %v1694
  %v1696 = vadd.f32 %v1688, %v1695
  %v1697 = vadd.f32 %v1689, %v1695
  %v1698 = vadd.f32 %v1690, %v1695
  %v1699 = vadd.f32 %v1691, %v1695
  %v1700 = vadd.f32 %v1696, %v1697
  %v1701 = vadd.f32 %v1700, %v1698
  %v1702 = vadd.f32 %v1701, %v1699
  %v1703 = vrot.slane %v1702, 4
  %v1704 = vadd.f32 %v1702, %v1703
  %v1705 = vrot.slane %v1704, 2
  %v1706 = vadd.f32 %v1704, %v1705
  %v1707 = vrot.slane %v1706, 1
  %v1708 = vadd.f32 %v1706, %v1707
  %1709 = vrot.lane.b32.xlu0 %v1708, 64
  %v1710 = vpop.permute.xlu0 %1709
  %v1711 = vadd.f32 %v1708, %v1710
  %1712 = vrot.lane.b32.xlu0 %v1711, 32
  %v1713 = vpop.permute.xlu0 %1712
  %v1714 = vadd.f32 %v1711, %v1713
  %1715 = vrot.lane.b32.xlu0 %v1714, 16
  %v1716 = vpop.permute.xlu0 %1715
  %v1717 = vadd.f32 %v1714, %v1716
  %1718 = vrot.lane.b32.xlu0 %v1717, 8
  %v1719 = vpop.permute.xlu0 %1718
  %v1720 = vadd.f32 %v1717, %v1719
  %v1721 = vmul.f32 %v1720, 0.001953125
  %v1722 = vlaneseq
  %v1723 = vshrl.u32 %v1722, 7
  %v1724 = vsub.s32 0, %v1723
  %v1725 = vrot.slane %v1721, %v1724
  %v1726 = vsub.f32 %v1696, %v1725
  %v1727 = vsub.f32 %v1697, %v1725
  %v1728 = vsub.f32 %v1698, %v1725
  %v1729 = vsub.f32 %v1699, %v1725
  %v1730 = vmul.f32 %v1726, %v1726
  %v1731 = vmul.f32 %v1727, %v1727
  %v1732 = vmul.f32 %v1728, %v1728
  %v1733 = vmul.f32 %v1729, %v1729
  %v1734 = vadd.f32 %v1730, %v1731
  %v1735 = vadd.f32 %v1734, %v1732
  %v1736 = vadd.f32 %v1735, %v1733
  %v1737 = vrot.slane %v1736, 4
  %v1738 = vadd.f32 %v1736, %v1737
  %v1739 = vrot.slane %v1738, 2
  %v1740 = vadd.f32 %v1738, %v1739
  %v1741 = vrot.slane %v1740, 1
  %v1742 = vadd.f32 %v1740, %v1741
  %1743 = vrot.lane.b32.xlu0 %v1742, 64
  %v1744 = vpop.permute.xlu0 %1743
  %v1745 = vadd.f32 %v1742, %v1744
  %1746 = vrot.lane.b32.xlu0 %v1745, 32
  %v1747 = vpop.permute.xlu0 %1746
  %v1748 = vadd.f32 %v1745, %v1747
  %1749 = vrot.lane.b32.xlu0 %v1748, 16
  %v1750 = vpop.permute.xlu0 %1749
  %v1751 = vadd.f32 %v1748, %v1750
  %1752 = vrot.lane.b32.xlu0 %v1751, 8
  %v1753 = vpop.permute.xlu0 %1752
  %v1754 = vadd.f32 %v1751, %v1753
  %v1755 = vmul.f32 %v1754, 0.001953125
  %v1756 = vadd.f32 %v1755, 1e-05
  %v1757 = vrsqrt.pop %v1756
  %v1759 = vrot.slane %v966, 1
  %v1761 = vmul.f32 %v1757, %v1759
  %v1762 = vlaneseq
  %v1763 = vshrl.u32 %v1762, 7
  %v1764 = vsub.s32 0, %v1763
  %v1765 = vrot.slane %v1761, %v1764
  %v1766 = vmul.f32 %v1726, %v1765
  %v1767 = vmul.f32 %v1727, %v1765
  %v1768 = vmul.f32 %v1728, %v1765
  %v1769 = vmul.f32 %v1729, %v1765
  %v1770 = vlaneseq
  %v1771 = vshrl.u32 %v1770, 7
  %v1772 = vsub.s32 2, %v1771
  %v1773 = vrot.slane %v966, %v1772
  %v1774 = vadd.f32 %v1766, %v1773
  %v1775 = vadd.f32 %v1767, %v1773
  %v1776 = vadd.f32 %v1768, %v1773
  %v1777 = vadd.f32 %v1769, %v1773
  %v1778 = vmax.f32 %v1774, 0.0
  %v1779 = vmax.f32 %v1775, 0.0
  %v1780 = vmax.f32 %v1776, 0.0
  %v1781 = vmax.f32 %v1777, 0.0
  %v1782 = vpack.c.bf16 %v1779, %v1778
  %v1783 = vpack.c.bf16 %v1781, %v1780
  %s1784 = scalar_lea.vmem %s6, 12
  %v1785 = vld [vmem:[%s1784] sm:$0x7]
  %v1786 = vld [vmem:[%s4] sm:$0xf]
  %v1787 = vld [vmem:[%s4 + $0x4] sm:$0xf]
  %v1788 = vld [vmem:[%s4 + $0x8] sm:$0xf]
  %v1789 = vld [vmem:[%s4 + $0xc] sm:$0xf]
  %v1790 = vld [vmem:[%s4 + $0x10] sm:$0xf]
  %v1791 = vld [vmem:[%s4 + $0x14] sm:$0xf]
  %v1792 = vld [vmem:[%s4 + $0x18] sm:$0xf]
  %v1793 = vld [vmem:[%s4 + $0x1c] sm:$0xf]
  %v1794 = vld [vmem:[%s4 + $0x20] sm:$0xf]
  %v1795 = vld [vmem:[%s4 + $0x24] sm:$0xf]
  %v1796 = vld [vmem:[%s4 + $0x28] sm:$0xf]
  %v1797 = vld [vmem:[%s4 + $0x2c] sm:$0xf]
  %v1798 = vld [vmem:[%s4 + $0x30] sm:$0xf]
  %v1799 = vld [vmem:[%s4 + $0x34] sm:$0xf]
  %v1800 = vld [vmem:[%s4 + $0x38] sm:$0xf]
  %v1801 = vld [vmem:[%s4 + $0x3c] sm:$0xf]
  %v1818 = vunpack.c.l.b16 %v1786
  %v1819 = vunpack.c.l.b16 %v1787
  %v1820 = vunpack.c.l.b16 %v1788
  %v1821 = vunpack.c.l.b16 %v1789
  %v1822 = vunpack.c.l.b16 %v1790
  %v1823 = vunpack.c.l.b16 %v1791
  %v1824 = vunpack.c.l.b16 %v1792
  %v1825 = vunpack.c.l.b16 %v1793
  %v1826 = vunpack.c.l.b16 %v1794
  %v1827 = vunpack.c.l.b16 %v1795
  %v1828 = vunpack.c.l.b16 %v1796
  %v1829 = vunpack.c.l.b16 %v1797
  %v1830 = vunpack.c.l.b16 %v1798
  %v1831 = vunpack.c.l.b16 %v1799
  %v1832 = vunpack.c.l.b16 %v1800
  %v1833 = vunpack.c.l.b16 %v1801
  %v1834 = vpack.c.b16 %v1819, %v1818
  %v1835 = vpack.c.b16 %v1821, %v1820
  %v1836 = vpack.c.b16 %v1823, %v1822
  %v1837 = vpack.c.b16 %v1825, %v1824
  %v1838 = vpack.c.b16 %v1827, %v1826
  %v1839 = vpack.c.b16 %v1829, %v1828
  %v1840 = vpack.c.b16 %v1831, %v1830
  %v1841 = vpack.c.b16 %v1833, %v1832
  %1850 = vmatprep.subr.bf16.mxu0 0
  %1851 = vmatpush1.bf16.msra.mxu0 %v1834
  %1852 = vmatprep.subr.bf16.mxu0 0
  %1853 = vmatpush1.bf16.msra.mxu0 %v1835
  %1854 = vmatprep.subr.bf16.mxu0 0
  %1855 = vmatpush1.bf16.msra.mxu0 %v1836
  %1856 = vmatprep.subr.bf16.mxu0 0
  %1857 = vmatpush1.bf16.msra.mxu0 %v1837
  %1858 = vmatprep.subr.bf16.mxu0 0
  %1859 = vmatpush1.bf16.msra.mxu0 %v1838
  %1860 = vmatprep.subr.bf16.mxu0 0
  %1861 = vmatpush1.bf16.msra.mxu0 %v1839
  %1862 = vmatprep.subr.bf16.mxu0 0
  %1863 = vmatpush1.bf16.msra.mxu0 %v1840
  %1864 = vmatprep.subr.bf16.mxu0 0
  %1865 = vmatpush1.bf16.msra.mxu0 %v1841
  %1866 = vmatprep.subr.bf16.mxu0 0
  %1867 = vmatpush1.bf16.msra.mxu0 0
  %1868 = vmatprep.subr.bf16.mxu0 0
  %1869 = vmatpush1.bf16.msra.mxu0 0
  %1870 = vmatprep.subr.bf16.mxu0 0
  %1871 = vmatpush1.bf16.msra.mxu0 0
  %1872 = vmatprep.subr.bf16.mxu0 0
  %1873 = vmatpush1.bf16.msra.mxu0 0
  %1874 = vmatprep.subr.bf16.mxu0 0
  %1875 = vmatpush1.bf16.msra.mxu0 0
  %1876 = vmatprep.subr.bf16.mxu0 0
  %1877 = vmatpush1.bf16.msra.mxu0 0
  %1878 = vmatprep.subr.bf16.mxu0 0
  %1879 = vmatpush1.bf16.msra.mxu0 0
  %1880 = vmatprep.subr.bf16.mxu0 0
  %1881 = vmatpush1.bf16.msra.mxu0 0
  %1882 = vmatprep.mubr.bf16.mxu0 0
  %1883 = vmatmul.mubr.bf16.gmra.mrb[0].mxu0 %v1782
  %v1884 = vpop.f32.mrb[0].mxu0
  %v1885 = vadd.f32 0.0, %v1884
  %v1886 = vpop.f32.mrb[0].mxu0
  %v1887 = vpop.f32.mrb[0].mxu0
  %v1888 = vadd.f32 0.0, %v1887
  %v1889 = vpop.f32.mrb[0].mxu0
  %1890 = vmatprep.mubr.bf16.mxu0 0
  %1891 = vmatmul.mubr.bf16.gmra.mrb[0].mxu0 %v1783
  %v1892 = vpop.f32.mrb[0].mxu0
  %v1893 = vadd.f32 0.0, %v1892
  %v1894 = vpop.f32.mrb[0].mxu0
  %v1895 = vpop.f32.mrb[0].mxu0
  %v1896 = vadd.f32 0.0, %v1895
  %v1897 = vpop.f32.mrb[0].mxu0
  %1898 = vdwg.mxu0
  %v1899 = vrot.slane %v1885, 5
  %v1900 = vrot.slane %v1888, 5
  %v1901 = vrot.slane %v1893, 5
  %v1902 = vrot.slane %v1896, 5
  %v1903 = vsel %vm1052, %v1901, %v1902
  %v1904 = vsel %vm1052, %v1900, %v1901
  %v1905 = vsel %vm1052, %v1899, %v1900
  %v1906 = vsel %vm1052, %v1902, %v1899
  %v1907 = vsel %vm1065, %v1906, 0.0
  %v1908 = vsel %vm1066, %v1905, 0.0
  %v1909 = vsel %vm1067, %v1904, 0.0
  %v1910 = vsel %vm1068, %v1903, 0.0
  %v1911 = vadd.f32 %v1907, 0.0
  %v1912 = vadd.f32 %v1908, 0.0
  %v1913 = vadd.f32 %v1909, 0.0
  %v1914 = vadd.f32 %v1910, 0.0
  %s1915 = scalar_lea.vmem %s4, 64
  %v1916 = vld [vmem:[%s1915] sm:$0xf]
  %v1917 = vld [vmem:[%s1915 + $0x4] sm:$0xf]
  %v1918 = vld [vmem:[%s1915 + $0x8] sm:$0xf]
  %v1919 = vld [vmem:[%s1915 + $0xc] sm:$0xf]
  %v1920 = vld [vmem:[%s1915 + $0x10] sm:$0xf]
  %v1921 = vld [vmem:[%s1915 + $0x14] sm:$0xf]
  %v1922 = vld [vmem:[%s1915 + $0x18] sm:$0xf]
  %v1923 = vld [vmem:[%s1915 + $0x1c] sm:$0xf]
  %v1924 = vld [vmem:[%s1915 + $0x20] sm:$0xf]
  %v1925 = vld [vmem:[%s1915 + $0x24] sm:$0xf]
  %v1926 = vld [vmem:[%s1915 + $0x28] sm:$0xf]
  %v1927 = vld [vmem:[%s1915 + $0x2c] sm:$0xf]
  %v1928 = vld [vmem:[%s1915 + $0x30] sm:$0xf]
  %v1929 = vld [vmem:[%s1915 + $0x34] sm:$0xf]
  %v1930 = vld [vmem:[%s1915 + $0x38] sm:$0xf]
  %v1931 = vld [vmem:[%s1915 + $0x3c] sm:$0xf]
  %v1948 = vunpack.c.l.b16 %v1916
  %v1949 = vunpack.c.l.b16 %v1917
  %v1950 = vunpack.c.l.b16 %v1918
  %v1951 = vunpack.c.l.b16 %v1919
  %v1952 = vunpack.c.l.b16 %v1920
  %v1953 = vunpack.c.l.b16 %v1921
  %v1954 = vunpack.c.l.b16 %v1922
  %v1955 = vunpack.c.l.b16 %v1923
  %v1956 = vunpack.c.l.b16 %v1924
  %v1957 = vunpack.c.l.b16 %v1925
  %v1958 = vunpack.c.l.b16 %v1926
  %v1959 = vunpack.c.l.b16 %v1927
  %v1960 = vunpack.c.l.b16 %v1928
  %v1961 = vunpack.c.l.b16 %v1929
  %v1962 = vunpack.c.l.b16 %v1930
  %v1963 = vunpack.c.l.b16 %v1931
  %v1964 = vpack.c.b16 %v1949, %v1948
  %v1965 = vpack.c.b16 %v1951, %v1950
  %v1966 = vpack.c.b16 %v1953, %v1952
  %v1967 = vpack.c.b16 %v1955, %v1954
  %v1968 = vpack.c.b16 %v1957, %v1956
  %v1969 = vpack.c.b16 %v1959, %v1958
  %v1970 = vpack.c.b16 %v1961, %v1960
  %v1971 = vpack.c.b16 %v1963, %v1962
  %1980 = vmatprep.subr.bf16.mxu0 0
  %1981 = vmatpush1.bf16.msra.mxu0 %v1964
  %1982 = vmatprep.subr.bf16.mxu0 0
  %1983 = vmatpush1.bf16.msra.mxu0 %v1965
  %1984 = vmatprep.subr.bf16.mxu0 0
  %1985 = vmatpush1.bf16.msra.mxu0 %v1966
  %1986 = vmatprep.subr.bf16.mxu0 0
  %1987 = vmatpush1.bf16.msra.mxu0 %v1967
  %1988 = vmatprep.subr.bf16.mxu0 0
  %1989 = vmatpush1.bf16.msra.mxu0 %v1968
  %1990 = vmatprep.subr.bf16.mxu0 0
  %1991 = vmatpush1.bf16.msra.mxu0 %v1969
  %1992 = vmatprep.subr.bf16.mxu0 0
  %1993 = vmatpush1.bf16.msra.mxu0 %v1970
  %1994 = vmatprep.subr.bf16.mxu0 0
  %1995 = vmatpush1.bf16.msra.mxu0 %v1971
  %1996 = vmatprep.subr.bf16.mxu0 0
  %1997 = vmatpush1.bf16.msra.mxu0 0
  %1998 = vmatprep.subr.bf16.mxu0 0
  %1999 = vmatpush1.bf16.msra.mxu0 0
  %2000 = vmatprep.subr.bf16.mxu0 0
  %2001 = vmatpush1.bf16.msra.mxu0 0
  %2002 = vmatprep.subr.bf16.mxu0 0
  %2003 = vmatpush1.bf16.msra.mxu0 0
  %2004 = vmatprep.subr.bf16.mxu0 0
  %2005 = vmatpush1.bf16.msra.mxu0 0
  %2006 = vmatprep.subr.bf16.mxu0 0
  %2007 = vmatpush1.bf16.msra.mxu0 0
  %2008 = vmatprep.subr.bf16.mxu0 0
  %2009 = vmatpush1.bf16.msra.mxu0 0
  %2010 = vmatprep.subr.bf16.mxu0 0
  %2011 = vmatpush1.bf16.msra.mxu0 0
  %2012 = vmatprep.mubr.bf16.mxu0 0
  %2013 = vmatmul.mubr.bf16.gmra.mrb[0].mxu0 %v1782
  %v2014 = vpop.f32.mrb[0].mxu0
  %v2015 = vadd.f32 0.0, %v2014
  %v2016 = vpop.f32.mrb[0].mxu0
  %v2017 = vpop.f32.mrb[0].mxu0
  %v2018 = vadd.f32 0.0, %v2017
  %v2019 = vpop.f32.mrb[0].mxu0
  %2020 = vmatprep.mubr.bf16.mxu0 0
  %2021 = vmatmul.mubr.bf16.gmra.mrb[0].mxu0 %v1783
  %v2022 = vpop.f32.mrb[0].mxu0
  %v2023 = vadd.f32 0.0, %v2022
  %v2024 = vpop.f32.mrb[0].mxu0
  %v2025 = vpop.f32.mrb[0].mxu0
  %v2026 = vadd.f32 0.0, %v2025
  %v2027 = vpop.f32.mrb[0].mxu0
  %2028 = vdwg.mxu0
  %v2029 = vrot.slane %v2015, 6
  %v2030 = vrot.slane %v2018, 6
  %v2031 = vrot.slane %v2023, 6
  %v2032 = vrot.slane %v2026, 6
  %v2033 = vsel %vm1163, %v2031, %v2032
  %v2034 = vsel %vm1163, %v2030, %v2031
  %v2035 = vsel %vm1163, %v2029, %v2030
  %v2036 = vsel %vm1163, %v2032, %v2029
  %v2037 = vsel %vm1176, %v2036, 0.0
  %v2038 = vsel %vm1177, %v2035, 0.0
  %v2039 = vsel %vm1178, %v2034, 0.0
  %v2040 = vsel %vm1179, %v2033, 0.0
  %v2041 = vadd.f32 %v1911, %v2037
  %v2042 = vadd.f32 %v1912, %v2038
  %v2043 = vadd.f32 %v1913, %v2039
  %v2044 = vadd.f32 %v1914, %v2040
  %s2045 = scalar_lea.vmem %s4, 128
  %v2046 = vld [vmem:[%s2045] sm:$0xf]
  %v2047 = vld [vmem:[%s2045 + $0x4] sm:$0xf]
  %v2048 = vld [vmem:[%s2045 + $0x8] sm:$0xf]
  %v2049 = vld [vmem:[%s2045 + $0xc] sm:$0xf]
  %v2050 = vld [vmem:[%s2045 + $0x10] sm:$0xf]
  %v2051 = vld [vmem:[%s2045 + $0x14] sm:$0xf]
  %v2052 = vld [vmem:[%s2045 + $0x18] sm:$0xf]
  %v2053 = vld [vmem:[%s2045 + $0x1c] sm:$0xf]
  %v2054 = vld [vmem:[%s2045 + $0x20] sm:$0xf]
  %v2055 = vld [vmem:[%s2045 + $0x24] sm:$0xf]
  %v2056 = vld [vmem:[%s2045 + $0x28] sm:$0xf]
  %v2057 = vld [vmem:[%s2045 + $0x2c] sm:$0xf]
  %v2058 = vld [vmem:[%s2045 + $0x30] sm:$0xf]
  %v2059 = vld [vmem:[%s2045 + $0x34] sm:$0xf]
  %v2060 = vld [vmem:[%s2045 + $0x38] sm:$0xf]
  %v2061 = vld [vmem:[%s2045 + $0x3c] sm:$0xf]
  %v2078 = vunpack.c.l.b16 %v2046
  %v2079 = vunpack.c.l.b16 %v2047
  %v2080 = vunpack.c.l.b16 %v2048
  %v2081 = vunpack.c.l.b16 %v2049
  %v2082 = vunpack.c.l.b16 %v2050
  %v2083 = vunpack.c.l.b16 %v2051
  %v2084 = vunpack.c.l.b16 %v2052
  %v2085 = vunpack.c.l.b16 %v2053
  %v2086 = vunpack.c.l.b16 %v2054
  %v2087 = vunpack.c.l.b16 %v2055
  %v2088 = vunpack.c.l.b16 %v2056
  %v2089 = vunpack.c.l.b16 %v2057
  %v2090 = vunpack.c.l.b16 %v2058
  %v2091 = vunpack.c.l.b16 %v2059
  %v2092 = vunpack.c.l.b16 %v2060
  %v2093 = vunpack.c.l.b16 %v2061
  %v2094 = vpack.c.b16 %v2079, %v2078
  %v2095 = vpack.c.b16 %v2081, %v2080
  %v2096 = vpack.c.b16 %v2083, %v2082
  %v2097 = vpack.c.b16 %v2085, %v2084
  %v2098 = vpack.c.b16 %v2087, %v2086
  %v2099 = vpack.c.b16 %v2089, %v2088
  %v2100 = vpack.c.b16 %v2091, %v2090
  %v2101 = vpack.c.b16 %v2093, %v2092
  %2110 = vmatprep.subr.bf16.mxu0 0
  %2111 = vmatpush1.bf16.msra.mxu0 %v2094
  %2112 = vmatprep.subr.bf16.mxu0 0
  %2113 = vmatpush1.bf16.msra.mxu0 %v2095
  %2114 = vmatprep.subr.bf16.mxu0 0
  %2115 = vmatpush1.bf16.msra.mxu0 %v2096
  %2116 = vmatprep.subr.bf16.mxu0 0
  %2117 = vmatpush1.bf16.msra.mxu0 %v2097
  %2118 = vmatprep.subr.bf16.mxu0 0
  %2119 = vmatpush1.bf16.msra.mxu0 %v2098
  %2120 = vmatprep.subr.bf16.mxu0 0
  %2121 = vmatpush1.bf16.msra.mxu0 %v2099
  %2122 = vmatprep.subr.bf16.mxu0 0
  %2123 = vmatpush1.bf16.msra.mxu0 %v2100
  %2124 = vmatprep.subr.bf16.mxu0 0
  %2125 = vmatpush1.bf16.msra.mxu0 %v2101
  %2126 = vmatprep.subr.bf16.mxu0 0
  %2127 = vmatpush1.bf16.msra.mxu0 0
  %2128 = vmatprep.subr.bf16.mxu0 0
  %2129 = vmatpush1.bf16.msra.mxu0 0
  %2130 = vmatprep.subr.bf16.mxu0 0
  %2131 = vmatpush1.bf16.msra.mxu0 0
  %2132 = vmatprep.subr.bf16.mxu0 0
  %2133 = vmatpush1.bf16.msra.mxu0 0
  %2134 = vmatprep.subr.bf16.mxu0 0
  %2135 = vmatpush1.bf16.msra.mxu0 0
  %2136 = vmatprep.subr.bf16.mxu0 0
  %2137 = vmatpush1.bf16.msra.mxu0 0
  %2138 = vmatprep.subr.bf16.mxu0 0
  %2139 = vmatpush1.bf16.msra.mxu0 0
  %2140 = vmatprep.subr.bf16.mxu0 0
  %2141 = vmatpush1.bf16.msra.mxu0 0
  %2142 = vmatprep.mubr.bf16.mxu0 0
  %2143 = vmatmul.mubr.bf16.gmra.mrb[0].mxu0 %v1782
  %v2144 = vpop.f32.mrb[0].mxu0
  %v2145 = vadd.f32 0.0, %v2144
  %v2146 = vpop.f32.mrb[0].mxu0
  %v2147 = vpop.f32.mrb[0].mxu0
  %v2148 = vadd.f32 0.0, %v2147
  %v2149 = vpop.f32.mrb[0].mxu0
  %2150 = vmatprep.mubr.bf16.mxu0 0
  %2151 = vmatmul.mubr.bf16.gmra.mrb[0].mxu0 %v1783
  %v2152 = vpop.f32.mrb[0].mxu0
  %v2153 = vadd.f32 0.0, %v2152
  %v2154 = vpop.f32.mrb[0].mxu0
  %v2155 = vpop.f32.mrb[0].mxu0
  %v2156 = vadd.f32 0.0, %v2155
  %v2157 = vpop.f32.mrb[0].mxu0
  %2158 = vdwg.mxu0
  %v2159 = vrot.slane %v2145, 7
  %v2160 = vrot.slane %v2148, 7
  %v2161 = vrot.slane %v2153, 7
  %v2162 = vrot.slane %v2156, 7
  %v2163 = vsel %vm182, %v2161, %v2162
  %v2164 = vsel %vm182, %v2160, %v2161
  %v2165 = vsel %vm182, %v2159, %v2160
  %v2166 = vsel %vm182, %v2162, %v2159
  %v2167 = vsel %vm195, %v2166, 0.0
  %v2168 = vsel %vm196, %v2165, 0.0
  %v2169 = vsel %vm197, %v2164, 0.0
  %v2170 = vsel %vm198, %v2163, 0.0
  %v2171 = vadd.f32 %v2041, %v2167
  %v2172 = vadd.f32 %v2042, %v2168
  %v2173 = vadd.f32 %v2043, %v2169
  %v2174 = vadd.f32 %v2044, %v2170
  %s2175 = scalar_lea.vmem %s4, 192
  %v2176 = vld [vmem:[%s2175] sm:$0xf]
  %v2177 = vld [vmem:[%s2175 + $0x4] sm:$0xf]
  %v2178 = vld [vmem:[%s2175 + $0x8] sm:$0xf]
  %v2179 = vld [vmem:[%s2175 + $0xc] sm:$0xf]
  %v2180 = vld [vmem:[%s2175 + $0x10] sm:$0xf]
  %v2181 = vld [vmem:[%s2175 + $0x14] sm:$0xf]
  %v2182 = vld [vmem:[%s2175 + $0x18] sm:$0xf]
  %v2183 = vld [vmem:[%s2175 + $0x1c] sm:$0xf]
  %v2184 = vld [vmem:[%s2175 + $0x20] sm:$0xf]
  %v2185 = vld [vmem:[%s2175 + $0x24] sm:$0xf]
  %v2186 = vld [vmem:[%s2175 + $0x28] sm:$0xf]
  %v2187 = vld [vmem:[%s2175 + $0x2c] sm:$0xf]
  %v2188 = vld [vmem:[%s2175 + $0x30] sm:$0xf]
  %v2189 = vld [vmem:[%s2175 + $0x34] sm:$0xf]
  %v2190 = vld [vmem:[%s2175 + $0x38] sm:$0xf]
  %v2191 = vld [vmem:[%s2175 + $0x3c] sm:$0xf]
  %v2208 = vunpack.c.l.b16 %v2176
  %v2209 = vunpack.c.l.b16 %v2177
  %v2210 = vunpack.c.l.b16 %v2178
  %v2211 = vunpack.c.l.b16 %v2179
  %v2212 = vunpack.c.l.b16 %v2180
  %v2213 = vunpack.c.l.b16 %v2181
  %v2214 = vunpack.c.l.b16 %v2182
  %v2215 = vunpack.c.l.b16 %v2183
  %v2216 = vunpack.c.l.b16 %v2184
  %v2217 = vunpack.c.l.b16 %v2185
  %v2218 = vunpack.c.l.b16 %v2186
  %v2219 = vunpack.c.l.b16 %v2187
  %v2220 = vunpack.c.l.b16 %v2188
  %v2221 = vunpack.c.l.b16 %v2189
  %v2222 = vunpack.c.l.b16 %v2190
  %v2223 = vunpack.c.l.b16 %v2191
  %v2224 = vpack.c.b16 %v2209, %v2208
  %v2225 = vpack.c.b16 %v2211, %v2210
  %v2226 = vpack.c.b16 %v2213, %v2212
  %v2227 = vpack.c.b16 %v2215, %v2214
  %v2228 = vpack.c.b16 %v2217, %v2216
  %v2229 = vpack.c.b16 %v2219, %v2218
  %v2230 = vpack.c.b16 %v2221, %v2220
  %v2231 = vpack.c.b16 %v2223, %v2222
  %2240 = vmatprep.subr.bf16.mxu0 0
  %2241 = vmatpush1.bf16.msra.mxu0 %v2224
  %2242 = vmatprep.subr.bf16.mxu0 0
  %2243 = vmatpush1.bf16.msra.mxu0 %v2225
  %2244 = vmatprep.subr.bf16.mxu0 0
  %2245 = vmatpush1.bf16.msra.mxu0 %v2226
  %2246 = vmatprep.subr.bf16.mxu0 0
  %2247 = vmatpush1.bf16.msra.mxu0 %v2227
  %2248 = vmatprep.subr.bf16.mxu0 0
  %2249 = vmatpush1.bf16.msra.mxu0 %v2228
  %2250 = vmatprep.subr.bf16.mxu0 0
  %2251 = vmatpush1.bf16.msra.mxu0 %v2229
  %2252 = vmatprep.subr.bf16.mxu0 0
  %2253 = vmatpush1.bf16.msra.mxu0 %v2230
  %2254 = vmatprep.subr.bf16.mxu0 0
  %2255 = vmatpush1.bf16.msra.mxu0 %v2231
  %2256 = vmatprep.subr.bf16.mxu0 0
  %2257 = vmatpush1.bf16.msra.mxu0 0
  %2258 = vmatprep.subr.bf16.mxu0 0
  %2259 = vmatpush1.bf16.msra.mxu0 0
  %2260 = vmatprep.subr.bf16.mxu0 0
  %2261 = vmatpush1.bf16.msra.mxu0 0
  %2262 = vmatprep.subr.bf16.mxu0 0
  %2263 = vmatpush1.bf16.msra.mxu0 0
  %2264 = vmatprep.subr.bf16.mxu0 0
  %2265 = vmatpush1.bf16.msra.mxu0 0
  %2266 = vmatprep.subr.bf16.mxu0 0
  %2267 = vmatpush1.bf16.msra.mxu0 0
  %2268 = vmatprep.subr.bf16.mxu0 0
  %2269 = vmatpush1.bf16.msra.mxu0 0
  %2270 = vmatprep.subr.bf16.mxu0 0
  %2271 = vmatpush1.bf16.msra.mxu0 0
  %2272 = vmatprep.mubr.bf16.mxu0 0
  %2273 = vmatmul.mubr.bf16.gmra.mrb[0].mxu0 %v1782
  %v2274 = vpop.f32.mrb[0].mxu0
  %v2275 = vadd.f32 0.0, %v2274
  %v2276 = vpop.f32.mrb[0].mxu0
  %v2277 = vpop.f32.mrb[0].mxu0
  %v2278 = vadd.f32 0.0, %v2277
  %v2279 = vpop.f32.mrb[0].mxu0
  %2280 = vmatprep.mubr.bf16.mxu0 0
  %2281 = vmatmul.mubr.bf16.gmra.mrb[0].mxu0 %v1783
  %v2282 = vpop.f32.mrb[0].mxu0
  %v2283 = vadd.f32 0.0, %v2282
  %v2284 = vpop.f32.mrb[0].mxu0
  %v2285 = vpop.f32.mrb[0].mxu0
  %v2286 = vadd.f32 0.0, %v2285
  %v2287 = vpop.f32.mrb[0].mxu0
  %2288 = vdwg.mxu0
  %v2289 = vadd.f32 %v2171, %v2275
  %v2290 = vadd.f32 %v2172, %v2278
  %v2291 = vadd.f32 %v2173, %v2283
  %v2292 = vadd.f32 %v2174, %v2286
  %s2293 = scalar_lea.vmem %s4, 256
  %v2294 = vld [vmem:[%s2293] sm:$0xf]
  %v2295 = vld [vmem:[%s2293 + $0x4] sm:$0xf]
  %v2296 = vld [vmem:[%s2293 + $0x8] sm:$0xf]
  %v2297 = vld [vmem:[%s2293 + $0xc] sm:$0xf]
  %v2298 = vld [vmem:[%s2293 + $0x10] sm:$0xf]
  %v2299 = vld [vmem:[%s2293 + $0x14] sm:$0xf]
  %v2300 = vld [vmem:[%s2293 + $0x18] sm:$0xf]
  %v2301 = vld [vmem:[%s2293 + $0x1c] sm:$0xf]
  %v2302 = vld [vmem:[%s2293 + $0x20] sm:$0xf]
  %v2303 = vld [vmem:[%s2293 + $0x24] sm:$0xf]
  %v2304 = vld [vmem:[%s2293 + $0x28] sm:$0xf]
  %v2305 = vld [vmem:[%s2293 + $0x2c] sm:$0xf]
  %v2306 = vld [vmem:[%s2293 + $0x30] sm:$0xf]
  %v2307 = vld [vmem:[%s2293 + $0x34] sm:$0xf]
  %v2308 = vld [vmem:[%s2293 + $0x38] sm:$0xf]
  %v2309 = vld [vmem:[%s2293 + $0x3c] sm:$0xf]
  %v2326 = vunpack.c.l.b16 %v2294
  %v2327 = vunpack.c.l.b16 %v2295
  %v2328 = vunpack.c.l.b16 %v2296
  %v2329 = vunpack.c.l.b16 %v2297
  %v2330 = vunpack.c.l.b16 %v2298
  %v2331 = vunpack.c.l.b16 %v2299
  %v2332 = vunpack.c.l.b16 %v2300
  %v2333 = vunpack.c.l.b16 %v2301
  %v2334 = vunpack.c.l.b16 %v2302
  %v2335 = vunpack.c.l.b16 %v2303
  %v2336 = vunpack.c.l.b16 %v2304
  %v2337 = vunpack.c.l.b16 %v2305
  %v2338 = vunpack.c.l.b16 %v2306
  %v2339 = vunpack.c.l.b16 %v2307
  %v2340 = vunpack.c.l.b16 %v2308
  %v2341 = vunpack.c.l.b16 %v2309
  %v2342 = vpack.c.b16 %v2327, %v2326
  %v2343 = vpack.c.b16 %v2329, %v2328
  %v2344 = vpack.c.b16 %v2331, %v2330
  %v2345 = vpack.c.b16 %v2333, %v2332
  %v2346 = vpack.c.b16 %v2335, %v2334
  %v2347 = vpack.c.b16 %v2337, %v2336
  %v2348 = vpack.c.b16 %v2339, %v2338
  %v2349 = vpack.c.b16 %v2341, %v2340
  %2358 = vmatprep.subr.bf16.mxu0 0
  %2359 = vmatpush1.bf16.msra.mxu0 %v2342
  %2360 = vmatprep.subr.bf16.mxu0 0
  %2361 = vmatpush1.bf16.msra.mxu0 %v2343
  %2362 = vmatprep.subr.bf16.mxu0 0
  %2363 = vmatpush1.bf16.msra.mxu0 %v2344
  %2364 = vmatprep.subr.bf16.mxu0 0
  %2365 = vmatpush1.bf16.msra.mxu0 %v2345
  %2366 = vmatprep.subr.bf16.mxu0 0
  %2367 = vmatpush1.bf16.msra.mxu0 %v2346
  %2368 = vmatprep.subr.bf16.mxu0 0
  %2369 = vmatpush1.bf16.msra.mxu0 %v2347
  %2370 = vmatprep.subr.bf16.mxu0 0
  %2371 = vmatpush1.bf16.msra.mxu0 %v2348
  %2372 = vmatprep.subr.bf16.mxu0 0
  %2373 = vmatpush1.bf16.msra.mxu0 %v2349
  %2374 = vmatprep.subr.bf16.mxu0 0
  %2375 = vmatpush1.bf16.msra.mxu0 0
  %2376 = vmatprep.subr.bf16.mxu0 0
  %2377 = vmatpush1.bf16.msra.mxu0 0
  %2378 = vmatprep.subr.bf16.mxu0 0
  %2379 = vmatpush1.bf16.msra.mxu0 0
  %2380 = vmatprep.subr.bf16.mxu0 0
  %2381 = vmatpush1.bf16.msra.mxu0 0
  %2382 = vmatprep.subr.bf16.mxu0 0
  %2383 = vmatpush1.bf16.msra.mxu0 0
  %2384 = vmatprep.subr.bf16.mxu0 0
  %2385 = vmatpush1.bf16.msra.mxu0 0
  %2386 = vmatprep.subr.bf16.mxu0 0
  %2387 = vmatpush1.bf16.msra.mxu0 0
  %2388 = vmatprep.subr.bf16.mxu0 0
  %2389 = vmatpush1.bf16.msra.mxu0 0
  %2390 = vmatprep.mubr.bf16.mxu0 0
  %2391 = vmatmul.mubr.bf16.gmra.mrb[0].mxu0 %v1782
  %v2392 = vpop.f32.mrb[0].mxu0
  %v2393 = vadd.f32 0.0, %v2392
  %v2394 = vpop.f32.mrb[0].mxu0
  %v2395 = vpop.f32.mrb[0].mxu0
  %v2396 = vadd.f32 0.0, %v2395
  %v2397 = vpop.f32.mrb[0].mxu0
  %2398 = vmatprep.mubr.bf16.mxu0 0
  %2399 = vmatmul.mubr.bf16.gmra.mrb[0].mxu0 %v1783
  %v2400 = vpop.f32.mrb[0].mxu0
  %v2401 = vadd.f32 0.0, %v2400
  %v2402 = vpop.f32.mrb[0].mxu0
  %v2403 = vpop.f32.mrb[0].mxu0
  %v2404 = vadd.f32 0.0, %v2403
  %v2405 = vpop.f32.mrb[0].mxu0
  %2406 = vdwg.mxu0
  %v2407 = vrot.slane %v2393, 1
  %v2408 = vrot.slane %v2396, 1
  %v2409 = vrot.slane %v2401, 1
  %v2410 = vrot.slane %v2404, 1
  %v2411 = vsel %vm379, %v2409, %v2410
  %v2412 = vsel %vm379, %v2408, %v2409
  %v2413 = vsel %vm379, %v2407, %v2408
  %v2414 = vsel %vm379, %v2410, %v2407
  %v2415 = vsel %vm392, %v2413, 0.0
  %v2416 = vsel %vm393, %v2412, 0.0
  %v2417 = vsel %vm394, %v2411, 0.0
  %v2418 = vsel %vm395, %v2414, 0.0
  %v2419 = vadd.f32 %v2289, %v2415
  %v2420 = vadd.f32 %v2290, %v2416
  %v2421 = vadd.f32 %v2291, %v2417
  %v2422 = vadd.f32 %v2292, %v2418
  %s2423 = scalar_lea.vmem %s4, 320
  %v2424 = vld [vmem:[%s2423] sm:$0xf]
  %v2425 = vld [vmem:[%s2423 + $0x4] sm:$0xf]
  %v2426 = vld [vmem:[%s2423 + $0x8] sm:$0xf]
  %v2427 = vld [vmem:[%s2423 + $0xc] sm:$0xf]
  %v2428 = vld [vmem:[%s2423 + $0x10] sm:$0xf]
  %v2429 = vld [vmem:[%s2423 + $0x14] sm:$0xf]
  %v2430 = vld [vmem:[%s2423 + $0x18] sm:$0xf]
  %v2431 = vld [vmem:[%s2423 + $0x1c] sm:$0xf]
  %v2432 = vld [vmem:[%s2423 + $0x20] sm:$0xf]
  %v2433 = vld [vmem:[%s2423 + $0x24] sm:$0xf]
  %v2434 = vld [vmem:[%s2423 + $0x28] sm:$0xf]
  %v2435 = vld [vmem:[%s2423 + $0x2c] sm:$0xf]
  %v2436 = vld [vmem:[%s2423 + $0x30] sm:$0xf]
  %v2437 = vld [vmem:[%s2423 + $0x34] sm:$0xf]
  %v2438 = vld [vmem:[%s2423 + $0x38] sm:$0xf]
  %v2439 = vld [vmem:[%s2423 + $0x3c] sm:$0xf]
  %v2456 = vunpack.c.l.b16 %v2424
  %v2457 = vunpack.c.l.b16 %v2425
  %v2458 = vunpack.c.l.b16 %v2426
  %v2459 = vunpack.c.l.b16 %v2427
  %v2460 = vunpack.c.l.b16 %v2428
  %v2461 = vunpack.c.l.b16 %v2429
  %v2462 = vunpack.c.l.b16 %v2430
  %v2463 = vunpack.c.l.b16 %v2431
  %v2464 = vunpack.c.l.b16 %v2432
  %v2465 = vunpack.c.l.b16 %v2433
  %v2466 = vunpack.c.l.b16 %v2434
  %v2467 = vunpack.c.l.b16 %v2435
  %v2468 = vunpack.c.l.b16 %v2436
  %v2469 = vunpack.c.l.b16 %v2437
  %v2470 = vunpack.c.l.b16 %v2438
  %v2471 = vunpack.c.l.b16 %v2439
  %v2472 = vpack.c.b16 %v2457, %v2456
  %v2473 = vpack.c.b16 %v2459, %v2458
  %v2474 = vpack.c.b16 %v2461, %v2460
  %v2475 = vpack.c.b16 %v2463, %v2462
  %v2476 = vpack.c.b16 %v2465, %v2464
  %v2477 = vpack.c.b16 %v2467, %v2466
  %v2478 = vpack.c.b16 %v2469, %v2468
  %v2479 = vpack.c.b16 %v2471, %v2470
  %2488 = vmatprep.subr.bf16.mxu0 0
  %2489 = vmatpush1.bf16.msra.mxu0 %v2472
  %2490 = vmatprep.subr.bf16.mxu0 0
  %2491 = vmatpush1.bf16.msra.mxu0 %v2473
  %2492 = vmatprep.subr.bf16.mxu0 0
  %2493 = vmatpush1.bf16.msra.mxu0 %v2474
  %2494 = vmatprep.subr.bf16.mxu0 0
  %2495 = vmatpush1.bf16.msra.mxu0 %v2475
  %2496 = vmatprep.subr.bf16.mxu0 0
  %2497 = vmatpush1.bf16.msra.mxu0 %v2476
  %2498 = vmatprep.subr.bf16.mxu0 0
  %2499 = vmatpush1.bf16.msra.mxu0 %v2477
  %2500 = vmatprep.subr.bf16.mxu0 0
  %2501 = vmatpush1.bf16.msra.mxu0 %v2478
  %2502 = vmatprep.subr.bf16.mxu0 0
  %2503 = vmatpush1.bf16.msra.mxu0 %v2479
  %2504 = vmatprep.subr.bf16.mxu0 0
  %2505 = vmatpush1.bf16.msra.mxu0 0
  %2506 = vmatprep.subr.bf16.mxu0 0
  %2507 = vmatpush1.bf16.msra.mxu0 0
  %2508 = vmatprep.subr.bf16.mxu0 0
  %2509 = vmatpush1.bf16.msra.mxu0 0
  %2510 = vmatprep.subr.bf16.mxu0 0
  %2511 = vmatpush1.bf16.msra.mxu0 0
  %2512 = vmatprep.subr.bf16.mxu0 0
  %2513 = vmatpush1.bf16.msra.mxu0 0
  %2514 = vmatprep.subr.bf16.mxu0 0
  %2515 = vmatpush1.bf16.msra.mxu0 0
  %2516 = vmatprep.subr.bf16.mxu0 0
  %2517 = vmatpush1.bf16.msra.mxu0 0
  %2518 = vmatprep.subr.bf16.mxu0 0
  %2519 = vmatpush1.bf16.msra.mxu0 0
  %2520 = vmatprep.mubr.bf16.mxu0 0
  %2521 = vmatmul.mubr.bf16.gmra.mrb[0].mxu0 %v1782
  %v2522 = vpop.f32.mrb[0].mxu0
  %v2523 = vadd.f32 0.0, %v2522
  %v2524 = vpop.f32.mrb[0].mxu0
  %v2525 = vpop.f32.mrb[0].mxu0
  %v2526 = vadd.f32 0.0, %v2525
  %v2527 = vpop.f32.mrb[0].mxu0
  %2528 = vmatprep.mubr.bf16.mxu0 0
  %2529 = vmatmul.mubr.bf16.gmra.mrb[0].mxu0 %v1783
  %v2530 = vpop.f32.mrb[0].mxu0
  %v2531 = vadd.f32 0.0, %v2530
  %v2532 = vpop.f32.mrb[0].mxu0
  %v2533 = vpop.f32.mrb[0].mxu0
  %v2534 = vadd.f32 0.0, %v2533
  %v2535 = vpop.f32.mrb[0].mxu0
  %2536 = vdwg.mxu0
  %v2537 = vrot.slane %v2523, 2
  %v2538 = vrot.slane %v2526, 2
  %v2539 = vrot.slane %v2531, 2
  %v2540 = vrot.slane %v2534, 2
  %v2541 = vsel %vm1556, %v2539, %v2540
  %v2542 = vsel %vm1556, %v2538, %v2539
  %v2543 = vsel %vm1556, %v2537, %v2538
  %v2544 = vsel %vm1556, %v2540, %v2537
  %v2545 = vsel %vm1569, %v2543, 0.0
  %v2546 = vsel %vm1570, %v2542, 0.0
  %v2547 = vsel %vm1571, %v2541, 0.0
  %v2548 = vsel %vm1572, %v2544, 0.0
  %v2549 = vadd.f32 %v2419, %v2545
  %v2550 = vadd.f32 %v2420, %v2546
  %v2551 = vadd.f32 %v2421, %v2547
  %v2552 = vadd.f32 %v2422, %v2548
  %s2553 = scalar_lea.vmem %s4, 384
  %v2554 = vld [vmem:[%s2553] sm:$0xf]
  %v2555 = vld [vmem:[%s2553 + $0x4] sm:$0xf]
  %v2556 = vld [vmem:[%s2553 + $0x8] sm:$0xf]
  %v2557 = vld [vmem:[%s2553 + $0xc] sm:$0xf]
  %v2558 = vld [vmem:[%s2553 + $0x10] sm:$0xf]
  %v2559 = vld [vmem:[%s2553 + $0x14] sm:$0xf]
  %v2560 = vld [vmem:[%s2553 + $0x18] sm:$0xf]
  %v2561 = vld [vmem:[%s2553 + $0x1c] sm:$0xf]
  %v2562 = vld [vmem:[%s2553 + $0x20] sm:$0xf]
  %v2563 = vld [vmem:[%s2553 + $0x24] sm:$0xf]
  %v2564 = vld [vmem:[%s2553 + $0x28] sm:$0xf]
  %v2565 = vld [vmem:[%s2553 + $0x2c] sm:$0xf]
  %v2566 = vld [vmem:[%s2553 + $0x30] sm:$0xf]
  %v2567 = vld [vmem:[%s2553 + $0x34] sm:$0xf]
  %v2568 = vld [vmem:[%s2553 + $0x38] sm:$0xf]
  %v2569 = vld [vmem:[%s2553 + $0x3c] sm:$0xf]
  %v2586 = vunpack.c.l.b16 %v2554
  %v2587 = vunpack.c.l.b16 %v2555
  %v2588 = vunpack.c.l.b16 %v2556
  %v2589 = vunpack.c.l.b16 %v2557
  %v2590 = vunpack.c.l.b16 %v2558
  %v2591 = vunpack.c.l.b16 %v2559
  %v2592 = vunpack.c.l.b16 %v2560
  %v2593 = vunpack.c.l.b16 %v2561
  %v2594 = vunpack.c.l.b16 %v2562
  %v2595 = vunpack.c.l.b16 %v2563
  %v2596 = vunpack.c.l.b16 %v2564
  %v2597 = vunpack.c.l.b16 %v2565
  %v2598 = vunpack.c.l.b16 %v2566
  %v2599 = vunpack.c.l.b16 %v2567
  %v2600 = vunpack.c.l.b16 %v2568
  %v2601 = vunpack.c.l.b16 %v2569
  %v2602 = vpack.c.b16 %v2587, %v2586
  %v2603 = vpack.c.b16 %v2589, %v2588
  %v2604 = vpack.c.b16 %v2591, %v2590
  %v2605 = vpack.c.b16 %v2593, %v2592
  %v2606 = vpack.c.b16 %v2595, %v2594
  %v2607 = vpack.c.b16 %v2597, %v2596
  %v2608 = vpack.c.b16 %v2599, %v2598
  %v2609 = vpack.c.b16 %v2601, %v2600
  %2618 = vmatprep.subr.bf16.mxu0 0
  %2619 = vmatpush1.bf16.msra.mxu0 %v2602
  %2620 = vmatprep.subr.bf16.mxu0 0
  %2621 = vmatpush1.bf16.msra.mxu0 %v2603
  %2622 = vmatprep.subr.bf16.mxu0 0
  %2623 = vmatpush1.bf16.msra.mxu0 %v2604
  %2624 = vmatprep.subr.bf16.mxu0 0
  %2625 = vmatpush1.bf16.msra.mxu0 %v2605
  %2626 = vmatprep.subr.bf16.mxu0 0
  %2627 = vmatpush1.bf16.msra.mxu0 %v2606
  %2628 = vmatprep.subr.bf16.mxu0 0
  %2629 = vmatpush1.bf16.msra.mxu0 %v2607
  %2630 = vmatprep.subr.bf16.mxu0 0
  %2631 = vmatpush1.bf16.msra.mxu0 %v2608
  %2632 = vmatprep.subr.bf16.mxu0 0
  %2633 = vmatpush1.bf16.msra.mxu0 %v2609
  %2634 = vmatprep.subr.bf16.mxu0 0
  %2635 = vmatpush1.bf16.msra.mxu0 0
  %2636 = vmatprep.subr.bf16.mxu0 0
  %2637 = vmatpush1.bf16.msra.mxu0 0
  %2638 = vmatprep.subr.bf16.mxu0 0
  %2639 = vmatpush1.bf16.msra.mxu0 0
  %2640 = vmatprep.subr.bf16.mxu0 0
  %2641 = vmatpush1.bf16.msra.mxu0 0
  %2642 = vmatprep.subr.bf16.mxu0 0
  %2643 = vmatpush1.bf16.msra.mxu0 0
  %2644 = vmatprep.subr.bf16.mxu0 0
  %2645 = vmatpush1.bf16.msra.mxu0 0
  %2646 = vmatprep.subr.bf16.mxu0 0
  %2647 = vmatpush1.bf16.msra.mxu0 0
  %2648 = vmatprep.subr.bf16.mxu0 0
  %2649 = vmatpush1.bf16.msra.mxu0 0
  %2650 = vmatprep.mubr.bf16.mxu0 0
  %2651 = vmatmul.mubr.bf16.gmra.mrb[0].mxu0 %v1782
  %v2652 = vpop.f32.mrb[0].mxu0
  %v2653 = vadd.f32 0.0, %v2652
  %v2654 = vpop.f32.mrb[0].mxu0
  %v2655 = vpop.f32.mrb[0].mxu0
  %v2656 = vadd.f32 0.0, %v2655
  %v2657 = vpop.f32.mrb[0].mxu0
  %2658 = vmatprep.mubr.bf16.mxu0 0
  %2659 = vmatmul.mubr.bf16.gmra.mrb[0].mxu0 %v1783
  %v2660 = vpop.f32.mrb[0].mxu0
  %v2661 = vadd.f32 0.0, %v2660
  %v2662 = vpop.f32.mrb[0].mxu0
  %v2663 = vpop.f32.mrb[0].mxu0
  %v2664 = vadd.f32 0.0, %v2663
  %v2665 = vpop.f32.mrb[0].mxu0
  %2666 = vdwg.mxu0
  %v2667 = vrot.slane %v2653, 3
  %v2668 = vrot.slane %v2656, 3
  %v2669 = vrot.slane %v2661, 3
  %v2670 = vrot.slane %v2664, 3
  %v2671 = vsel %vm1667, %v2669, %v2670
  %v2672 = vsel %vm1667, %v2668, %v2669
  %v2673 = vsel %vm1667, %v2667, %v2668
  %v2674 = vsel %vm1667, %v2670, %v2667
  %v2675 = vsel %vm1680, %v2673, 0.0
  %v2676 = vsel %vm1681, %v2672, 0.0
  %v2677 = vsel %vm1682, %v2671, 0.0
  %v2678 = vsel %vm1683, %v2674, 0.0
  %v2679 = vadd.f32 %v2549, %v2675
  %v2680 = vadd.f32 %v2550, %v2676
  %v2681 = vadd.f32 %v2551, %v2677
  %v2682 = vadd.f32 %v2552, %v2678
  %v2683 = vlaneseq
  %v2684 = vshrl.u32 %v2683, 7
  %v2685 = vsub.s32 0, %v2684
  %v2686 = vrot.slane %v1785, %v2685
  %v2687 = vadd.f32 %v2679, %v2686
  %v2688 = vadd.f32 %v2680, %v2686
  %v2689 = vadd.f32 %v2681, %v2686
  %v2690 = vadd.f32 %v2682, %v2686
  %v2691 = vadd.f32 %v2687, %v2688
  %v2692 = vadd.f32 %v2691, %v2689
  %v2693 = vadd.f32 %v2692, %v2690
  %v2694 = vrot.slane %v2693, 4
  %v2695 = vadd.f32 %v2693, %v2694
  %v2696 = vrot.slane %v2695, 2
  %v2697 = vadd.f32 %v2695, %v2696
  %v2698 = vrot.slane %v2697, 1
  %v2699 = vadd.f32 %v2697, %v2698
  %2700 = vrot.lane.b32.xlu0 %v2699, 64
  %v2701 = vpop.permute.xlu0 %2700
  %v2702 = vadd.f32 %v2699, %v2701
  %2703 = vrot.lane.b32.xlu0 %v2702, 32
  %v2704 = vpop.permute.xlu0 %2703
  %v2705 = vadd.f32 %v2702, %v2704
  %2706 = vrot.lane.b32.xlu0 %v2705, 16
  %v2707 = vpop.permute.xlu0 %2706
  %v2708 = vadd.f32 %v2705, %v2707
  %2709 = vrot.lane.b32.xlu0 %v2708, 8
  %v2710 = vpop.permute.xlu0 %2709
  %v2711 = vadd.f32 %v2708, %v2710
  %v2712 = vmul.f32 %v2711, 0.001953125
  %v2713 = vlaneseq
  %v2714 = vshrl.u32 %v2713, 7
  %v2715 = vsub.s32 0, %v2714
  %v2716 = vrot.slane %v2712, %v2715
  %v2717 = vsub.f32 %v2687, %v2716
  %v2718 = vsub.f32 %v2688, %v2716
  %v2719 = vsub.f32 %v2689, %v2716
  %v2720 = vsub.f32 %v2690, %v2716
  %v2721 = vmul.f32 %v2717, %v2717
  %v2722 = vmul.f32 %v2718, %v2718
  %v2723 = vmul.f32 %v2719, %v2719
  %v2724 = vmul.f32 %v2720, %v2720
  %v2725 = vadd.f32 %v2721, %v2722
  %v2726 = vadd.f32 %v2725, %v2723
  %v2727 = vadd.f32 %v2726, %v2724
  %v2728 = vrot.slane %v2727, 4
  %v2729 = vadd.f32 %v2727, %v2728
  %v2730 = vrot.slane %v2729, 2
  %v2731 = vadd.f32 %v2729, %v2730
  %v2732 = vrot.slane %v2731, 1
  %v2733 = vadd.f32 %v2731, %v2732
  %2734 = vrot.lane.b32.xlu0 %v2733, 64
  %v2735 = vpop.permute.xlu0 %2734
  %v2736 = vadd.f32 %v2733, %v2735
  %2737 = vrot.lane.b32.xlu0 %v2736, 32
  %v2738 = vpop.permute.xlu0 %2737
  %v2739 = vadd.f32 %v2736, %v2738
  %2740 = vrot.lane.b32.xlu0 %v2739, 16
  %v2741 = vpop.permute.xlu0 %2740
  %v2742 = vadd.f32 %v2739, %v2741
  %2743 = vrot.lane.b32.xlu0 %v2742, 8
  %v2744 = vpop.permute.xlu0 %2743
  %v2745 = vadd.f32 %v2742, %v2744
  %v2746 = vmul.f32 %v2745, 0.001953125
  %v2747 = vadd.f32 %v2746, 1e-05
  %v2748 = vrsqrt.pop %v2747
  %v2750 = vrot.slane %v1785, 1
  %v2752 = vmul.f32 %v2748, %v2750
  %v2753 = vlaneseq
  %v2754 = vshrl.u32 %v2753, 7
  %v2755 = vsub.s32 0, %v2754
  %v2756 = vrot.slane %v2752, %v2755
  %v2757 = vmul.f32 %v2717, %v2756
  %v2758 = vmul.f32 %v2718, %v2756
  %v2759 = vmul.f32 %v2719, %v2756
  %v2760 = vmul.f32 %v2720, %v2756
  %v2761 = vlaneseq
  %v2762 = vshrl.u32 %v2761, 7
  %v2763 = vsub.s32 2, %v2762
  %v2764 = vrot.slane %v1785, %v2763
  %v2765 = vadd.f32 %v2757, %v2764
  %v2766 = vadd.f32 %v2758, %v2764
  %v2767 = vadd.f32 %v2759, %v2764
  %v2768 = vadd.f32 %v2760, %v2764
  %v2769 = vmax.f32 %v2765, 0.0
  %v2770 = vmax.f32 %v2766, 0.0
  %v2771 = vmax.f32 %v2767, 0.0
  %v2772 = vmax.f32 %v2768, 0.0
  %v2773 = vpack.c.bf16 %v962, %v961
  %v2774 = vpack.c.bf16 %v2770, %v2769
  %v2775 = vpack.c.bf16 %v964, %v963
  %v2776 = vpack.c.bf16 %v2772, %v2771
  %v2777 = vld [vmem:[%s5] sm:$0xf]
  %v2778 = vld [vmem:[%s5 + $0x4] sm:$0xf]
  %v2779 = vld [vmem:[%s5 + $0x8] sm:$0xf]
  %v2780 = vld [vmem:[%s5 + $0xc] sm:$0xf]
  %v2781 = vld [vmem:[%s5 + $0x10] sm:$0xf]
  %v2782 = vld [vmem:[%s5 + $0x14] sm:$0xf]
  %v2783 = vld [vmem:[%s5 + $0x18] sm:$0xf]
  %v2784 = vld [vmem:[%s5 + $0x1c] sm:$0xf]
  %v2785 = vld [vmem:[%s5 + $0x20] sm:$0xf]
  %v2786 = vld [vmem:[%s5 + $0x24] sm:$0xf]
  %v2787 = vld [vmem:[%s5 + $0x28] sm:$0xf]
  %v2788 = vld [vmem:[%s5 + $0x2c] sm:$0xf]
  %v2789 = vld [vmem:[%s5 + $0x30] sm:$0xf]
  %v2790 = vld [vmem:[%s5 + $0x34] sm:$0xf]
  %v2791 = vld [vmem:[%s5 + $0x38] sm:$0xf]
  %v2792 = vld [vmem:[%s5 + $0x3c] sm:$0xf]
  %v2793 = vld [vmem:[%s5 + $0x40] sm:$0xf]
  %v2794 = vld [vmem:[%s5 + $0x44] sm:$0xf]
  %v2795 = vld [vmem:[%s5 + $0x48] sm:$0xf]
  %v2796 = vld [vmem:[%s5 + $0x4c] sm:$0xf]
  %v2797 = vld [vmem:[%s5 + $0x50] sm:$0xf]
  %v2798 = vld [vmem:[%s5 + $0x54] sm:$0xf]
  %v2799 = vld [vmem:[%s5 + $0x58] sm:$0xf]
  %v2800 = vld [vmem:[%s5 + $0x5c] sm:$0xf]
  %v2801 = vld [vmem:[%s5 + $0x60] sm:$0xf]
  %v2802 = vld [vmem:[%s5 + $0x64] sm:$0xf]
  %v2803 = vld [vmem:[%s5 + $0x68] sm:$0xf]
  %v2804 = vld [vmem:[%s5 + $0x6c] sm:$0xf]
  %v2805 = vld [vmem:[%s5 + $0x70] sm:$0xf]
  %v2806 = vld [vmem:[%s5 + $0x74] sm:$0xf]
  %v2807 = vld [vmem:[%s5 + $0x78] sm:$0xf]
  %v2808 = vld [vmem:[%s5 + $0x7c] sm:$0xf]
  %v2809 = vld [vmem:[%s7] sm:$0x1]
  %v2811 = vlaneseq
  %v2812 = vshrl.u32 %v2811, 7
  %v2813 = vsub.s32 0, %v2812
  %v2814 = vrot.slane %v2809, %v2813
  %v2848 = vunpack.c.l.b16 %v2777
  %v2849 = vunpack.c.l.b16 %v2778
  %v2850 = vunpack.c.l.b16 %v2779
  %v2851 = vunpack.c.l.b16 %v2780
  %v2852 = vunpack.c.l.b16 %v2781
  %v2853 = vunpack.c.l.b16 %v2782
  %v2854 = vunpack.c.l.b16 %v2783
  %v2855 = vunpack.c.l.b16 %v2784
  %v2856 = vunpack.c.l.b16 %v2785
  %v2857 = vunpack.c.l.b16 %v2786
  %v2858 = vunpack.c.l.b16 %v2787
  %v2859 = vunpack.c.l.b16 %v2788
  %v2860 = vunpack.c.l.b16 %v2789
  %v2861 = vunpack.c.l.b16 %v2790
  %v2862 = vunpack.c.l.b16 %v2791
  %v2863 = vunpack.c.l.b16 %v2792
  %v2864 = vunpack.c.l.b16 %v2793
  %v2865 = vunpack.c.l.b16 %v2794
  %v2866 = vunpack.c.l.b16 %v2795
  %v2867 = vunpack.c.l.b16 %v2796
  %v2868 = vunpack.c.l.b16 %v2797
  %v2869 = vunpack.c.l.b16 %v2798
  %v2870 = vunpack.c.l.b16 %v2799
  %v2871 = vunpack.c.l.b16 %v2800
  %v2872 = vunpack.c.l.b16 %v2801
  %v2873 = vunpack.c.l.b16 %v2802
  %v2874 = vunpack.c.l.b16 %v2803
  %v2875 = vunpack.c.l.b16 %v2804
  %v2876 = vunpack.c.l.b16 %v2805
  %v2877 = vunpack.c.l.b16 %v2806
  %v2878 = vunpack.c.l.b16 %v2807
  %v2879 = vunpack.c.l.b16 %v2808
  %v2880 = vpack.c.b16 %v2849, %v2848
  %v2881 = vpack.c.b16 %v2851, %v2850
  %v2882 = vpack.c.b16 %v2853, %v2852
  %v2883 = vpack.c.b16 %v2855, %v2854
  %v2884 = vpack.c.b16 %v2857, %v2856
  %v2885 = vpack.c.b16 %v2859, %v2858
  %v2886 = vpack.c.b16 %v2861, %v2860
  %v2887 = vpack.c.b16 %v2863, %v2862
  %v2888 = vpack.c.b16 %v2865, %v2864
  %v2889 = vpack.c.b16 %v2867, %v2866
  %v2890 = vpack.c.b16 %v2869, %v2868
  %v2891 = vpack.c.b16 %v2871, %v2870
  %v2892 = vpack.c.b16 %v2873, %v2872
  %v2893 = vpack.c.b16 %v2875, %v2874
  %v2894 = vpack.c.b16 %v2877, %v2876
  %v2895 = vpack.c.b16 %v2879, %v2878
  %2912 = vmatprep.subr.bf16.mxu0 0
  %2913 = vmatpush1.bf16.msra.mxu0 %v2880
  %2914 = vmatprep.subr.bf16.mxu0 0
  %2915 = vmatpush1.bf16.msra.mxu0 %v2881
  %2916 = vmatprep.subr.bf16.mxu0 0
  %2917 = vmatpush1.bf16.msra.mxu0 %v2882
  %2918 = vmatprep.subr.bf16.mxu0 0
  %2919 = vmatpush1.bf16.msra.mxu0 %v2883
  %2920 = vmatprep.subr.bf16.mxu0 0
  %2921 = vmatpush1.bf16.msra.mxu0 %v2884
  %2922 = vmatprep.subr.bf16.mxu0 0
  %2923 = vmatpush1.bf16.msra.mxu0 %v2885
  %2924 = vmatprep.subr.bf16.mxu0 0
  %2925 = vmatpush1.bf16.msra.mxu0 %v2886
  %2926 = vmatprep.subr.bf16.mxu0 0
  %2927 = vmatpush1.bf16.msra.mxu0 %v2887
  %2928 = vmatprep.subr.bf16.mxu0 0
  %2929 = vmatpush1.bf16.msra.mxu0 %v2888
  %2930 = vmatprep.subr.bf16.mxu0 0
  %2931 = vmatpush1.bf16.msra.mxu0 %v2889
  %2932 = vmatprep.subr.bf16.mxu0 0
  %2933 = vmatpush1.bf16.msra.mxu0 %v2890
  %2934 = vmatprep.subr.bf16.mxu0 0
  %2935 = vmatpush1.bf16.msra.mxu0 %v2891
  %2936 = vmatprep.subr.bf16.mxu0 0
  %2937 = vmatpush1.bf16.msra.mxu0 %v2892
  %2938 = vmatprep.subr.bf16.mxu0 0
  %2939 = vmatpush1.bf16.msra.mxu0 %v2893
  %2940 = vmatprep.subr.bf16.mxu0 0
  %2941 = vmatpush1.bf16.msra.mxu0 %v2894
  %2942 = vmatprep.subr.bf16.mxu0 0
  %2943 = vmatpush1.bf16.msra.mxu0 %v2895
  %2944 = vmatprep.mubr.bf16.mxu0 %v2774
  %2945 = vmatmul.mubr.bf16.gmra.mrb[0].mxu0 %v2773
  %v2946 = vpop.f32.mrb[0].mxu0
  %v2947 = vadd.f32 %v2814, %v2946
  %v2948 = vpop.f32.mrb[0].mxu0
  %v2949 = vpop.f32.mrb[0].mxu0
  %v2950 = vadd.f32 %v2814, %v2949
  %v2951 = vpop.f32.mrb[0].mxu0
  %2952 = vmatprep.mubr.bf16.mxu0 %v2776
  %2953 = vmatmul.mubr.bf16.gmra.mrb[0].mxu0 %v2775
  %v2954 = vpop.f32.mrb[0].mxu0
  %v2955 = vadd.f32 %v2814, %v2954
  %v2956 = vpop.f32.mrb[0].mxu0
  %v2957 = vpop.f32.mrb[0].mxu0
  %v2958 = vadd.f32 %v2814, %v2957
  %v2959 = vpop.f32.mrb[0].mxu0
  %2960 = vdwg.mxu0
  %2961 = vst [vmem:[%s8] sm:$0xff] %v2947
  %2962 = vst [vmem:[%s8 + $0x8] sm:$0xff] %v2950
  %2963 = vst [vmem:[%s8 + $0x10] sm:$0xff] %v2955
  %2964 = vst [vmem:[%s8 + $0x18] sm:$0xff] %v2958
  // Predicated region
  $region34: #{conv_3_1_forward.1} parent=0 // pred_check
    _
  $region35: #{conv_3_1_forward.1} parent=0 // pred_check_branch
    %2966 = sbr.rel (0) target = $region37
  $region36: #{conv_3_1_forward.1} parent=0 // pred_region
    _
  $region37: #{conv_3_1_forward.1} parent=0 // pred_fallthru
    _
  // Predicated region
  $region38: #{conv_3_1_forward.1} parent=0 // pred_check
    _
  $region39: #{conv_3_1_forward.1} parent=0 // pred_check_branch
    %2968 = sbr.rel (0) target = $region41
  $region40: #{conv_3_1_forward.1} parent=0 // pred_region
    _
  $region41: #{conv_3_1_forward.1} parent=0 // pred_fallthru
    _

</llo_original>
